<compile_context>
chip_gen: v7x
topology: tpu7x:2x2x1
jax: 0.10.0
libtpu: 0.0.40
codegen_flags: <defaults>
</compile_context>

<pallas_src>
import functools

import jax
import jax.numpy as jnp
from jax.experimental import pallas as pl
from jax.experimental.pallas import tpu as pltpu


def bn_stats_kernel(x_ref, gamma_ref, beta_ref, scale_ref, shift_ref,
                    sum_scr, sumsq_scr, *, hw, count, eps):
    # x_ref:     (1, Cin, TM)  native dtype
    # gamma_ref: (Cin, 1) f32, beta_ref: (Cin, 1) f32
    # scale_ref / shift_ref: (Cin, 1) f32 resident outputs (written at final step)
    # sum_scr / sumsq_scr:   (Cin, 1) f32 VMEM accumulators
    b = pl.program_id(0)
    mi = pl.program_id(1)

    @pl.when(jnp.logical_and(b == 0, mi == 0))
    def _init():
        sum_scr[...] = jnp.zeros_like(sum_scr)
        sumsq_scr[...] = jnp.zeros_like(sumsq_scr)

    x = x_ref[0].astype(jnp.float32)                       # (Cin, TM)
    tm = x.shape[-1]
    if hw % tm != 0:
        # Masked tail tile: padded lanes of the partial block are undefined, so select
        # them to 0.0 (select, not multiply, so NaN/Inf garbage cannot poison the sums).
        col = mi * tm + jax.lax.broadcasted_iota(jnp.int32, x.shape, 1)
        x = jnp.where(col < hw, x, 0.0)

    sum_scr[...] += jnp.sum(x, axis=1, keepdims=True)
    sumsq_scr[...] += jnp.sum(x * x, axis=1, keepdims=True)

    @pl.when(jnp.logical_and(b == pl.num_programs(0) - 1,
                             mi == pl.num_programs(1) - 1))
    def _finalize():
        inv_count = 1.0 / count                            # true element count, not padded
        mean = sum_scr[...] * inv_count
        # Single-pass variance can cancel slightly negative in f32; clamp before rsqrt.
        var = jnp.maximum(sumsq_scr[...] * inv_count - mean * mean, 0.0)
        inv_std = jax.lax.rsqrt(var + eps)
        scale = gamma_ref[...] * inv_std
        scale_ref[...] = scale
        shift_ref[...] = beta_ref[...] - mean * scale


def bn_relu_conv_kernel(x_ref, scale_ref, shift_ref, w_ref, o_ref):
    # x_ref: (1, Cin, TM) native dtype; scale/shift: (Cin, 1) f32; w_ref: (Cout, Cin) bf16
    # o_ref: (1, Cout, TM)
    x = x_ref[0].astype(jnp.float32)                       # (Cin, TM)
    y = jnp.maximum(x * scale_ref[...] + shift_ref[...], 0.0)
    # 1x1 conv == (Cout, Cin) @ (Cin, TM) on the MXU; bf16 operands, f32 accumulation.
    o_ref[0] = jnp.dot(w_ref[...], y.astype(jnp.bfloat16),
                       preferred_element_type=jnp.float32).astype(o_ref.dtype)


def bn_relu_conv1x1(x_nchw, gamma, beta, w_oihw, *, eps=1e-5, tm_max=512, out_dtype=None):
    """x_nchw: (N, Cin, H, W); gamma/beta: (Cin,); w_oihw: (Cout, Cin, 1, 1)."""
    n, cin, h, wd = x_nchw.shape
    cout = w_oihw.shape[0]
    hw = h * wd
    count = n * hw
    out_dtype = x_nchw.dtype if out_dtype is None else out_dtype

    # Zero-copy NCHW-native 3-D view; no transpose, no dtype cast at the HBM boundary.
    x3d = x_nchw.reshape(n, cin, hw)

    # Lane-tile: multiple of 128 (>=512 by default) or the full HW extent if it is smaller.
    tm_cap = max(128, (int(tm_max) // 128) * 128)
    tm = hw if hw <= tm_cap else tm_cap
    mt = pl.cdiv(hw, tm)

    gamma2d = gamma.reshape(cin, 1).astype(jnp.float32)
    beta2d = beta.reshape(cin, 1).astype(jnp.float32)
    w2d = w_oihw.reshape(cout, cin).astype(jnp.bfloat16)   # (Cout, Cin), ~45 KB

    # ---- Pass 1: batch stats -> folded (scale, shift) affine ----
    scale, shift = pl.pallas_call(
        functools.partial(bn_stats_kernel, hw=hw, count=float(count), eps=float(eps)),
        grid=(n, mt),
        in_specs=[
            pl.BlockSpec((1, cin, tm), lambda b, m: (b, 0, m)),
            pl.BlockSpec((cin, 1), lambda b, m: (0, 0)),
            pl.BlockSpec((cin, 1), lambda b, m: (0, 0)),
        ],
        out_specs=(
            pl.BlockSpec((cin, 1), lambda b, m: (0, 0)),
            pl.BlockSpec((cin, 1), lambda b, m: (0, 0)),
        ),
        out_shape=(
            jax.ShapeDtypeStruct((cin, 1), jnp.float32),
            jax.ShapeDtypeStruct((cin, 1), jnp.float32),
        ),
        scratch_shapes=[
            pltpu.VMEM((cin, 1), jnp.float32),
            pltpu.VMEM((cin, 1), jnp.float32),
        ],
        compiler_params=pltpu.CompilerParams(
            dimension_semantics=("arbitrary", "arbitrary")),
    )(x3d, gamma2d, beta2d)

    # ---- Pass 2: normalize + ReLU + 1x1 conv, pipelined over (N, M) tiles ----
    out3d = pl.pallas_call(
        bn_relu_conv_kernel,
        grid=(n, mt),
        in_specs=[
            pl.BlockSpec((1, cin, tm), lambda b, m: (b, 0, m)),
            pl.BlockSpec((cin, 1), lambda b, m: (0, 0)),
            pl.BlockSpec((cin, 1), lambda b, m: (0, 0)),
            pl.BlockSpec((cout, cin), lambda b, m: (0, 0)),
        ],
        out_specs=pl.BlockSpec((1, cout, tm), lambda b, m: (b, 0, m)),
        out_shape=jax.ShapeDtypeStruct((n, cout, hw), out_dtype),
        compiler_params=pltpu.CompilerParams(
            dimension_semantics=("parallel", "parallel")),
    )(x3d, scale, shift, w2d)

    return out3d.reshape(n, cout, h, wd)


def reference_f32(x_nchw, gamma, beta, w_oihw, eps=1e-5):
    """Exact f32 semantics of the PyTorch module (training-mode BN, biased variance)."""
    x = x_nchw.astype(jnp.float32)
    mean = jnp.mean(x, axis=(0, 2, 3), keepdims=True)
    var = jnp.mean((x - mean) ** 2, axis=(0, 2, 3), keepdims=True)
    y = (x - mean) * jax.lax.rsqrt(var + eps)
    y = y * gamma.reshape(1, -1, 1, 1) + beta.reshape(1, -1, 1, 1)
    y = jnp.maximum(y, 0.0)
    w2d = w_oihw.reshape(w_oihw.shape[0], w_oihw.shape[1])
    return jnp.einsum("nchw,oc->nohw", y, w2d)


def reference_bf16_matmul(x_nchw, gamma, beta, w_oihw, eps=1e-5):
    """Same as reference_f32 but with the matmul in bf16 (f32 acc), matching the kernel."""
    x = x_nchw.astype(jnp.float32)
    mean = jnp.mean(x, axis=(0, 2, 3), keepdims=True)
    var = jnp.mean((x - mean) ** 2, axis=(0, 2, 3), keepdims=True)
    y = (x - mean) * jax.lax.rsqrt(var + eps)
    y = y * gamma.reshape(1, -1, 1, 1) + beta.reshape(1, -1, 1, 1)
    y = jnp.maximum(y, 0.0).astype(jnp.bfloat16)
    w2d = w_oihw.reshape(w_oihw.shape[0], w_oihw.shape[1]).astype(jnp.bfloat16)
    return jnp.einsum("nchw,oc->nohw", y, w2d, preferred_element_type=jnp.float32)


if __name__ == "__main__":
    N, CIN, H, W = 1, 352, 28, 28        # exact module shape
    COUT = 128

    key = jax.random.PRNGKey(0)
    kx, kg, kb, kw, kx2 = jax.random.split(key, 5)

    x = jax.random.normal(kx, (N, CIN, H, W), dtype=jnp.float32)
    gamma = 1.0 + 0.1 * jax.random.normal(kg, (CIN,), dtype=jnp.float32)
    beta = 0.1 * jax.random.normal(kb, (CIN,), dtype=jnp.float32)
    bound = 1.0 / (CIN ** 0.5)
    w = jax.random.uniform(kw, (COUT, CIN, 1, 1), dtype=jnp.float32,
                           minval=-bound, maxval=bound)

    out = jax.block_until_ready(bn_relu_conv1x1(x, gamma, beta, w))
    assert out.shape == (N, COUT, H, W), out.shape

    # Tight check vs. a reference with matching MXU precision (bf16 operands, f32 acc).
    ref_b = jax.block_until_ready(reference_bf16_matmul(x, gamma, beta, w))
    assert jnp.allclose(out, ref_b, atol=2e-3, rtol=2e-3), (
        float(jnp.max(jnp.abs(out - ref_b))))

    # Looser check vs. the exact f32 reference (documents the bf16-MXU trade-off).
    ref_f = jax.block_until_ready(reference_f32(x, gamma, beta, w))
    assert jnp.allclose(out, ref_f, atol=3e-2, rtol=3e-2), (
        float(jnp.max(jnp.abs(out - ref_f))))

    # Secondary check: N>1 (gridded over batch, no moveaxis) and a masked lane tail
    # (HW=400 with 128-lane tiles -> 3 full tiles + one 16-valid tail).
    x2 = jax.random.normal(kx2, (2, CIN, 20, 20), dtype=jnp.float32)
    out2 = jax.block_until_ready(bn_relu_conv1x1(x2, gamma, beta, w, tm_max=128))
    ref2 = jax.block_until_ready(reference_bf16_matmul(x2, gamma, beta, w))
    assert out2.shape == (2, COUT, 20, 20), out2.shape
    assert jnp.allclose(out2, ref2, atol=2e-3, rtol=2e-3), (
        float(jnp.max(jnp.abs(out2 - ref2))))

    print("KERNEL_OK")
</pallas_src>

<mosaic_0001>
module attributes {stable_mosaic.version = 11 : i64} {
  func.func @bn_stats_kernel(%arg0: i32, %arg1: i32, %arg2: memref<1x352x512xf32, #tpu.memory_space<vmem>>, %arg3: memref<352x1xf32, #tpu.memory_space<vmem>>, %arg4: memref<352x1xf32, #tpu.memory_space<vmem>>, %arg5: memref<352x1xf32, #tpu.memory_space<vmem>>, %arg6: memref<352x1xf32, #tpu.memory_space<vmem>>, %arg7: memref<352x1xf32, #tpu.memory_space<vmem>>, %arg8: memref<352x1xf32, #tpu.memory_space<vmem>>) attributes {dimension_semantics = [#tpu.dimension_semantics<arbitrary>, #tpu.dimension_semantics<arbitrary>], iteration_bounds = array<i64: 1, 2>, scalar_prefetch = 0 : i64, scratch_operands = 2 : i64, tpu.core_type = #tpu.core_type<tc>, window_params = [{transform_indices = @transform_0, window_bounds = array<i64: 1, 352, 512>}, {pipeline_mode = #tpu.pipeline_mode<synchronous>, transform_indices = @transform_1, window_bounds = array<i64: 352, 1>}, {pipeline_mode = #tpu.pipeline_mode<synchronous>, transform_indices = @transform_2, window_bounds = array<i64: 352, 1>}, {pipeline_mode = #tpu.pipeline_mode<synchronous>, transform_indices = @transform_3, window_bounds = array<i64: 352, 1>}, {pipeline_mode = #tpu.pipeline_mode<synchronous>, transform_indices = @transform_4, window_bounds = array<i64: 352, 1>}]} {
    %c0_i32 = arith.constant 0 : i32
    %0 = arith.cmpi eq, %arg0, %c0_i32 : i32
    %c0_i32_0 = arith.constant 0 : i32
    %1 = arith.cmpi eq, %arg1, %c0_i32_0 : i32
    %2 = arith.andi %0, %1 : i1
    %3 = arith.extui %2 : i1 to i32
    %c0_i32_1 = arith.constant 0 : i32
    %4 = arith.cmpi ne, %3, %c0_i32_1 : i32
    scf.if %4 {
      %cst_16 = arith.constant 0.000000e+00 : f32
      %31 = vector.broadcast %cst_16 : f32 to vector<352x1xf32>
      %c0_17 = arith.constant 0 : index
      %c0_18 = arith.constant 0 : index
      %32 = vector.load %arg7[%c0_17, %c0_18] : memref<352x1xf32, #tpu.memory_space<vmem>>, vector<352x1xf32>
      tpu.vector_store %arg7[%c0_17, %c0_18], %31 {strides = array<i32>} : memref<352x1xf32, #tpu.memory_space<vmem>>, vector<352x1xf32>,
      %cst_19 = arith.constant 0.000000e+00 : f32
      %33 = vector.broadcast %cst_19 : f32 to vector<352x1xf32>
      %c0_20 = arith.constant 0 : index
      %c0_21 = arith.constant 0 : index
      %34 = vector.load %arg8[%c0_20, %c0_21] : memref<352x1xf32, #tpu.memory_space<vmem>>, vector<352x1xf32>
      tpu.vector_store %arg8[%c0_20, %c0_21], %33 {strides = array<i32>} : memref<352x1xf32, #tpu.memory_space<vmem>>, vector<352x1xf32>,
    } else {
    }
    %c0 = arith.constant 0 : index
    %c0_2 = arith.constant 0 : index
    %c0_3 = arith.constant 0 : index
    %5 = vector.load %arg2[%c0, %c0_2, %c0_3] : memref<1x352x512xf32, #tpu.memory_space<vmem>>, vector<1x352x512xf32>
    %6 = vector.shape_cast %5 : vector<1x352x512xf32> to vector<352x512xf32>
    %c512_i32 = arith.constant 512 : i32
    %7 = arith.muli %arg1, %c512_i32 : i32
    %8 = tpu.iota {dimensions = array<i32: 1>} : vector<352x512xi32>
    %9 = vector.broadcast %7 : i32 to vector<352x512xi32>
    %10 = arith.addi %9, %8 : vector<352x512xi32>
    %c784_i32 = arith.constant 784 : i32
    %11 = vector.broadcast %c784_i32 : i32 to vector<352x512xi32>
    %12 = arith.cmpi slt, %10, %11 : vector<352x512xi32>
    %cst = arith.constant 0.000000e+00 : f32
    %13 = vector.broadcast %cst : f32 to vector<352x512xf32>
    %14 = arith.select %12, %6, %13 : vector<352x512xi1>, vector<352x512xf32>
    %c0_4 = arith.constant 0 : index
    %c0_5 = arith.constant 0 : index
    %15 = vector.load %arg7[%c0_4, %c0_5] : memref<352x1xf32, #tpu.memory_space<vmem>>, vector<352x1xf32>
    %cst_6 = arith.constant dense<0.000000e+00> : vector<352xf32>
    %16 = vector.multi_reduction <add>, %14, %cst_6 [1] : vector<352x512xf32> to vector<352xf32>
    %17 = vector.shape_cast %16 : vector<352xf32> to vector<352x1xf32>
    %18 = arith.addf %15, %17 : vector<352x1xf32>
    %c0_7 = arith.constant 0 : index
    %c0_8 = arith.constant 0 : index
    %19 = vector.load %arg7[%c0_7, %c0_8] : memref<352x1xf32, #tpu.memory_space<vmem>>, vector<352x1xf32>
    tpu.vector_store %arg7[%c0_7, %c0_8], %18 {strides = array<i32>} : memref<352x1xf32, #tpu.memory_space<vmem>>, vector<352x1xf32>,
    %c0_9 = arith.constant 0 : index
    %c0_10 = arith.constant 0 : index
    %20 = vector.load %arg8[%c0_9, %c0_10] : memref<352x1xf32, #tpu.memory_space<vmem>>, vector<352x1xf32>
    %21 = arith.mulf %14, %14 : vector<352x512xf32>
    %cst_11 = arith.constant dense<0.000000e+00> : vector<352xf32>
    %22 = vector.multi_reduction <add>, %21, %cst_11 [1] : vector<352x512xf32> to vector<352xf32>
    %23 = vector.shape_cast %22 : vector<352xf32> to vector<352x1xf32>
    %24 = arith.addf %20, %23 : vector<352x1xf32>
    %c0_12 = arith.constant 0 : index
    %c0_13 = arith.constant 0 : index
    %25 = vector.load %arg8[%c0_12, %c0_13] : memref<352x1xf32, #tpu.memory_space<vmem>>, vector<352x1xf32>
    tpu.vector_store %arg8[%c0_12, %c0_13], %24 {strides = array<i32>} : memref<352x1xf32, #tpu.memory_space<vmem>>, vector<352x1xf32>,
    %c0_i32_14 = arith.constant 0 : i32
    %26 = arith.cmpi eq, %arg0, %c0_i32_14 : i32
    %c1_i32 = arith.constant 1 : i32
    %27 = arith.cmpi eq, %arg1, %c1_i32 : i32
    %28 = arith.andi %26, %27 : i1
    %29 = arith.extui %28 : i1 to i32
    %c0_i32_15 = arith.constant 0 : i32
    %30 = arith.cmpi ne, %29, %c0_i32_15 : i32
    scf.if %30 {
      %c0_16 = arith.constant 0 : index
      %c0_17 = arith.constant 0 : index
      %31 = vector.load %arg7[%c0_16, %c0_17] : memref<352x1xf32, #tpu.memory_space<vmem>>, vector<352x1xf32>
      %cst_18 = arith.constant 0.00127551018 : f32
      %32 = vector.broadcast %cst_18 : f32 to vector<352x1xf32>
      %33 = arith.mulf %31, %32 : vector<352x1xf32>
      %c0_19 = arith.constant 0 : index
      %c0_20 = arith.constant 0 : index
      %34 = vector.load %arg8[%c0_19, %c0_20] : memref<352x1xf32, #tpu.memory_space<vmem>>, vector<352x1xf32>
      %cst_21 = arith.constant 0.00127551018 : f32
      %35 = vector.broadcast %cst_21 : f32 to vector<352x1xf32>
      %36 = arith.mulf %34, %35 : vector<352x1xf32>
      %37 = arith.mulf %33, %33 : vector<352x1xf32>
      %38 = arith.subf %36, %37 : vector<352x1xf32>
      %cst_22 = arith.constant 0.000000e+00 : f32
      %39 = vector.broadcast %cst_22 : f32 to vector<352x1xf32>
      %40 = arith.maximumf %38, %39 : vector<352x1xf32>
      %cst_23 = arith.constant 9.99999974E-6 : f32
      %41 = vector.broadcast %cst_23 : f32 to vector<352x1xf32>
      %42 = arith.addf %40, %41 : vector<352x1xf32>
      %43 = math.rsqrt %42 : vector<352x1xf32>
      %c0_24 = arith.constant 0 : index
      %c0_25 = arith.constant 0 : index
      %44 = vector.load %arg3[%c0_24, %c0_25] : memref<352x1xf32, #tpu.memory_space<vmem>>, vector<352x1xf32>
      %45 = arith.mulf %44, %43 : vector<352x1xf32>
      %c0_26 = arith.constant 0 : index
      %c0_27 = arith.constant 0 : index
      %46 = vector.load %arg5[%c0_26, %c0_27] : memref<352x1xf32, #tpu.memory_space<vmem>>, vector<352x1xf32>
      tpu.vector_store %arg5[%c0_26, %c0_27], %45 {strides = array<i32>} : memref<352x1xf32, #tpu.memory_space<vmem>>, vector<352x1xf32>,
      %c0_28 = arith.constant 0 : index
      %c0_29 = arith.constant 0 : index
      %47 = vector.load %arg4[%c0_28, %c0_29] : memref<352x1xf32, #tpu.memory_space<vmem>>, vector<352x1xf32>
      %48 = arith.mulf %33, %45 : vector<352x1xf32>
      %49 = arith.subf %47, %48 : vector<352x1xf32>
      %c0_30 = arith.constant 0 : index
      %c0_31 = arith.constant 0 : index
      %50 = vector.load %arg6[%c0_30, %c0_31] : memref<352x1xf32, #tpu.memory_space<vmem>>, vector<352x1xf32>
      tpu.vector_store %arg6[%c0_30, %c0_31], %49 {strides = array<i32>} : memref<352x1xf32, #tpu.memory_space<vmem>>, vector<352x1xf32>,
    } else {
    }
    return
  }
  func.func @transform_0(%arg0: i32, %arg1: i32) -> (i32, i32, i32) {
    %c0_i32 = arith.constant 0 : i32
    %c0_i32_0 = arith.constant 0 : i32
    return %arg0, %c0_i32, %arg1 : i32, i32, i32
  }
  func.func @transform_1(%arg0: i32, %arg1: i32) -> (i32, i32) {
    %c0_i32 = arith.constant 0 : i32
    %c0_i32_0 = arith.constant 0 : i32
    %c0_i32_1 = arith.constant 0 : i32
    return %c0_i32, %c0_i32_0 : i32, i32
  }
  func.func @transform_2(%arg0: i32, %arg1: i32) -> (i32, i32) {
    %c0_i32 = arith.constant 0 : i32
    %c0_i32_0 = arith.constant 0 : i32
    %c0_i32_1 = arith.constant 0 : i32
    return %c0_i32, %c0_i32_0 : i32, i32
  }
  func.func @transform_3(%arg0: i32, %arg1: i32) -> (i32, i32) {
    %c0_i32 = arith.constant 0 : i32
    %c0_i32_0 = arith.constant 0 : i32
    %c0_i32_1 = arith.constant 0 : i32
    return %c0_i32, %c0_i32_0 : i32, i32
  }
  func.func @transform_4(%arg0: i32, %arg1: i32) -> (i32, i32) {
    %c0_i32 = arith.constant 0 : i32
    %c0_i32_0 = arith.constant 0 : i32
    %c0_i32_1 = arith.constant 0 : i32
    return %c0_i32, %c0_i32_0 : i32, i32
  }
}

</mosaic_0001>

<llo_original>
// kernel: tpu_custom_call.1
$region0: #{tpu_custom_call.1}
  #allocation0 [shape = 'u32[]', space=smem, size = 0x4, offset = 0x4, fixed_abs, tag = 'smem constant byte address 0x4 - core index']
  #allocation1 [shape = 'u32[144,128]{1,0:T(1,128)}', space=vmem, size = 0x12000, scoped, tag = 'internal scratch']
  #allocation2 [shape = 'f32[352,1]{1,0:T(8,128)}', space=vmem, size = 0x2c000, scoped, tag = 'scratch operand']
  #allocation3 [shape = 'f32[352,1]{1,0:T(8,128)}', space=vmem, size = 0x2c000, scoped, tag = 'scratch operand']
  %s0 = inlined_call_operand.vmem [shape: f32[1,352,784], index: 0, kind: input, shape index: {}]
  %s1 = inlined_call_operand.vmem [shape: f32[352,1], index: 1, kind: input, shape index: {}]
  %s2 = inlined_call_operand.vmem [shape: f32[352,1], index: 2, kind: input, shape index: {}]
  %s3 = inlined_call_operand.vmem [shape: f32[352,1], index: 3, kind: output, shape index: {0}]
  %s4 = inlined_call_operand.vmem [shape: f32[352,1], index: 4, kind: output, shape index: {1}]
  %5 = xla_tuple %s3, %s4
  %s6 = sld [smem:[#allocation0]]
  $region127: #{tpu_custom_call.1} parent=0
    _
  %s8 = ssub.s32 1, %s6
  %s9 = scalar_select 0, %s8, %s6
  $region1: #{tpu_custom_call.1} parent=0
    #allocation4 [shape = 'u8[1441792]{0}', space=vmem, size = 0x160000, scoped, tag = 'input window, operand 0']
    loop: start=0, step=1, limit=4
    $region2: #{tpu_custom_call.1} parent=1 // loop_pre_header
      _
    $region3: #{tpu_custom_call.1} parent=1 // loop_header
      %s11 = sphi 0, %s15
      %p12 = scmp.ge.s32.totalorder %s11, 4
      %s18 = sphi 0, %s30
      %s19 = sphi 0, %s26
      %s20 = sphi 0, %s18
      %s21 = sphi 0, %s19
      %s22 = sphi 0, %s20
      %s23 = sphi 0, %s21
      %s35 = sphi 0, %s37
      %s38 = sphi 0, %s35
      %s39 = sphi 0, %s38
      %s55 = sphi 0, %s39
      %s59 = sphi 0, %s59
      %s61 = sphi 0, %s59
      %s62 = sphi 0, %s61
      %s76 = sphi 0, %s62
      %s80 = sphi 0, %s80
      %s82 = sphi 0, %s80
      %s83 = sphi 0, %s82
      %s97 = sphi 0, %s83
      %s101 = sphi 0, %s101
      %s103 = sphi 0, %s101
      %s104 = sphi 0, %s103
      %s118 = sphi 0, %s104
      %s122 = sphi 0, %s122
      %s124 = sphi 0, %s122
      %s125 = sphi 0, %s124
      %s139 = sphi 0, %s125
    $region4: #{tpu_custom_call.1} parent=1 // loop_header_branch
      %14 = sbr.rel (%p12) target = $region8
    $region5: #{tpu_custom_call.1} parent=1 // loop_body
      %s16 = ssub.s32 %s11, 1
      %s17 = ssub.s32 %s11, 2
      %s24 = sadd.s32 1, %s19
      %p25 = scmp.ge.s32.totalorder %s24, 2
      %s26 = scalar_select %p25, 0, %s24
      %s27 = sadd.s32 1, %s18
      %s28 = scalar_select %p25, %s27, %s18
      %p29 = scmp.ge.s32.totalorder %s28, 1
      %s30 = scalar_select %p29, 0, %s28
      %s31 = ssub.s32 %s18, %s30
      %s32 = ssub.s32 %s19, %s26
      %s33 = sor.u32 %s31, %s32
      %p34 = scmp.eq.s32.totalorder %s33, 0
      %s36 = sadd.s32 %s35, 1
      %s37 = scalar_select %p34, %s35, %s36
      %p40 = pneg %p34
      %p41 = scmp.eq.s32.totalorder %s11, 1
      %p42 = por %p40, %p41
      %p43 = scmp.ne.s32.totalorder %s35, %s38
      %p44 = scmp.eq.s32.totalorder %s11, 0
      %p45 = por %p43, %p44
      %p46 = scmp.ne.s32.totalorder %s35, %s38
      %p47 = scmp.eq.s32.totalorder %s16, 1
      %p48 = por %p46, %p47
      %p49 = scmp.ne.s32.totalorder %s38, %s39
      %p50 = scmp.eq.s32.totalorder %s16, 0
      %p51 = por %p49, %p50
      %p52 = scmp.ne.s32.totalorder %s38, %s39
      %p53 = scmp.eq.s32.totalorder %s17, 1
      %p54 = por %p52, %p53
      %p56 = scmp.ne.s32.totalorder %s39, %s55
      %p57 = scmp.eq.s32.totalorder %s17, 0
      %p58 = por %p56, %p57
      %s60 = sadd.s32 %s59, 1
      %p63 = scmp.eq.s32.totalorder %s11, 1
      %p64 = scmp.ne.s32.totalorder %s59, %s61
      %p65 = scmp.eq.s32.totalorder %s11, 0
      %p66 = por %p64, %p65
      %p67 = scmp.ne.s32.totalorder %s59, %s61
      %p68 = scmp.eq.s32.totalorder %s16, 1
      %p69 = por %p67, %p68
      %p70 = scmp.ne.s32.totalorder %s61, %s62
      %p71 = scmp.eq.s32.totalorder %s16, 0
      %p72 = por %p70, %p71
      %p73 = scmp.ne.s32.totalorder %s61, %s62
      %p74 = scmp.eq.s32.totalorder %s17, 1
      %p75 = por %p73, %p74
      %p77 = scmp.ne.s32.totalorder %s62, %s76
      %p78 = scmp.eq.s32.totalorder %s17, 0
      %p79 = por %p77, %p78
      %s81 = sadd.s32 %s80, 1
      %p84 = scmp.eq.s32.totalorder %s11, 1
      %p85 = scmp.ne.s32.totalorder %s80, %s82
      %p86 = scmp.eq.s32.totalorder %s11, 0
      %p87 = por %p85, %p86
      %p88 = scmp.ne.s32.totalorder %s80, %s82
      %p89 = scmp.eq.s32.totalorder %s16, 1
      %p90 = por %p88, %p89
      %p91 = scmp.ne.s32.totalorder %s82, %s83
      %p92 = scmp.eq.s32.totalorder %s16, 0
      %p93 = por %p91, %p92
      %p94 = scmp.ne.s32.totalorder %s82, %s83
      %p95 = scmp.eq.s32.totalorder %s17, 1
      %p96 = por %p94, %p95
      %p98 = scmp.ne.s32.totalorder %s83, %s97
      %p99 = scmp.eq.s32.totalorder %s17, 0
      %p100 = por %p98, %p99
      %s102 = sadd.s32 %s101, 1
      %p105 = scmp.eq.s32.totalorder %s11, 1
      %p106 = scmp.ne.s32.totalorder %s101, %s103
      %p107 = scmp.eq.s32.totalorder %s11, 0
      %p108 = por %p106, %p107
      %p109 = scmp.ne.s32.totalorder %s101, %s103
      %p110 = scmp.eq.s32.totalorder %s16, 1
      %p111 = por %p109, %p110
      %p112 = scmp.ne.s32.totalorder %s103, %s104
      %p113 = scmp.eq.s32.totalorder %s16, 0
      %p114 = por %p112, %p113
      %p115 = scmp.ne.s32.totalorder %s103, %s104
      %p116 = scmp.eq.s32.totalorder %s17, 1
      %p117 = por %p115, %p116
      %p119 = scmp.ne.s32.totalorder %s104, %s118
      %p120 = scmp.eq.s32.totalorder %s17, 0
      %p121 = por %p119, %p120
      %s123 = sadd.s32 %s122, 1
      %p126 = scmp.eq.s32.totalorder %s11, 1
      %p127 = scmp.ne.s32.totalorder %s122, %s124
      %p128 = scmp.eq.s32.totalorder %s11, 0
      %p129 = por %p127, %p128
      %p130 = scmp.ne.s32.totalorder %s122, %s124
      %p131 = scmp.eq.s32.totalorder %s16, 1
      %p132 = por %p130, %p131
      %p133 = scmp.ne.s32.totalorder %s124, %s125
      %p134 = scmp.eq.s32.totalorder %s16, 0
      %p135 = por %p133, %p134
      %p136 = scmp.ne.s32.totalorder %s124, %s125
      %p137 = scmp.eq.s32.totalorder %s17, 1
      %p138 = por %p136, %p137
      %p140 = scmp.ne.s32.totalorder %s125, %s139
      %p141 = scmp.eq.s32.totalorder %s17, 0
      %p142 = por %p140, %p141
      %p143 = scmp.le.s32.totalorder 1, %s11
      %p144 = scmp.lt.s32.totalorder %s11, 3
      %p145 = pnand %p143, %p144
      %p146 = pneg %p145
      // Predicated region
      $region9: #{tpu_custom_call.1} parent=5 // pred_check
        _
      $region10: #{tpu_custom_call.1} parent=5 // pred_check_branch
        %148 = sbr.rel (%p145) target = $region12
      $region11: #{tpu_custom_call.1} parent=5 // pred_region
        %s149 = ssub.s32 %s11, 1
        // Predicated region
        $region13: #{tpu_custom_call.1} parent=11 // pred_check
          %p150 = pneg %p72
        $region14: #{tpu_custom_call.1} parent=11 // pred_check_branch
          %152 = sbr.rel (%p150) target = $region16
        $region15: #{tpu_custom_call.1} parent=11 // pred_region
          _
        $region16: #{tpu_custom_call.1} parent=11 // pred_fallthru
          _
        // Predicated region
        $region17: #{tpu_custom_call.1} parent=11 // pred_check
          %p153 = pneg %p93
        $region18: #{tpu_custom_call.1} parent=11 // pred_check_branch
          %155 = sbr.rel (%p153) target = $region20
        $region19: #{tpu_custom_call.1} parent=11 // pred_region
          _
        $region20: #{tpu_custom_call.1} parent=11 // pred_fallthru
          _
      $region12: #{tpu_custom_call.1} parent=5 // pred_fallthru
        _
      %p156 = scmp.lt.s32.totalorder %s11, 2
      // Predicated region
      $region21: #{tpu_custom_call.1} parent=5 // pred_check
        %p157 = pneg %p156
      $region22: #{tpu_custom_call.1} parent=5 // pred_check_branch
        %159 = sbr.rel (%p157) target = $region24
      $region23: #{tpu_custom_call.1} parent=5 // pred_region
        // Predicated region
        $region25: #{tpu_custom_call.1} parent=23 // pred_check
          %p160 = pneg %p45
        $region26: #{tpu_custom_call.1} parent=23 // pred_check_branch
          %162 = sbr.rel (%p160) target = $region28
        $region27: #{tpu_custom_call.1} parent=23 // pred_region
          %s163 = sand.u32 %s35, 1
          %s164 = sand.u32 %s35, 1
          %s165 = smul.addr %s164, 1408
          %s166 = scalar_lea.vmem [#allocation4], %s165
          %s167 = smul.u32 4, %s19
          %s168 = ssub.s32 7, %s167
          %p169 = scmp.lt.s32.totalorder %s168, 4
          %s170 = scalar_select %p169, %s168, 4
          %s171 = smul.u32 5632, %s170
          %p172 = scmp.ne.s32.totalorder 0, %s171
          %s173 = smul.addr %s18, 308
          %s174 = sadd.s32 %s167, %s173
          %s175 = smul.addr %s174, 8
          %s176 = scalar_lea.vmem %s0, %s175
          %s177 = smul.u32 %s170, 8
          // Predicated region
          $region29: #{tpu_custom_call.1} parent=27 // pred_check
            %p178 = pneg %p172
          $region30: #{tpu_custom_call.1} parent=27 // pred_check_branch
            %180 = sbr.rel (%p178) target = $region32
          $region31: #{tpu_custom_call.1} parent=27 // pred_region
            %p181 = scmp.lt.u32.totalorder %s177, 8
            %p182 = pneg %p181
            // Predicated region
            $region33: #{tpu_custom_call.1} parent=31 // pred_check
              _
            $region34: #{tpu_custom_call.1} parent=31 // pred_check_branch
              %184 = sbr.rel (%p181) target = $region36
            $region35: #{tpu_custom_call.1} parent=31 // pred_region
              %s285 = sand.u32 %s177, 7
              %p286 = scmp.eq.s32.totalorder %s285, 0
              // Predicated region
              $region48: #{tpu_custom_call.1} parent=35 // pred_check
                %p287 = pneg %p286
              $region49: #{tpu_custom_call.1} parent=35 // pred_check_branch
                %289 = sbr.rel (%p287) target = $region51
              $region50: #{tpu_custom_call.1} parent=35 // pred_region
                %s290 = sshrl.u32 %s177, 3
                %s291 = sshrl.u32 %s290, 1
                // While loop
                $region52: #{tpu_custom_call.1} parent=50 // loop_pre_header
                  _
                $region53: #{tpu_custom_call.1} parent=50 // loop_header
                  %s295 = sphi 0, %s297
                  %p296 = scmp.ge.s32.totalorder %s295, %s291
                  %s300 = sphi 0, %s481
                  %s301 = sphi %s176, %s484
                  %s302 = sphi %s166, %s485
                $region54: #{tpu_custom_call.1} parent=50 // loop_header_branch
                  %299 = sbr.rel (%p296) target = $region58
                $region55: #{tpu_custom_call.1} parent=50 // loop_body
                  %v303 = vld [vmem:[%s301] sm:$0xff]
                  %304 = vst [vmem:[%s302] sm:$0xff] %v303
                  %v305 = vld [vmem:[%s301 + $0x8] sm:$0xff]
                  %306 = vst [vmem:[%s302 + $0x8] sm:$0xff] %v305
                  %v307 = vld [vmem:[%s301 + $0x38] sm:$0xff]
                  %308 = vst [vmem:[%s302 + $0x20] sm:$0xff] %v307
                  %v309 = vld [vmem:[%s301 + $0x40] sm:$0xff]
                  %310 = vst [vmem:[%s302 + $0x28] sm:$0xff] %v309
                  %v311 = vld [vmem:[%s301 + $0x70] sm:$0xff]
                  %312 = vst [vmem:[%s302 + $0x40] sm:$0xff] %v311
                  %v313 = vld [vmem:[%s301 + $0x78] sm:$0xff]
                  %314 = vst [vmem:[%s302 + $0x48] sm:$0xff] %v313
                  %v315 = vld [vmem:[%s301 + $0xa8] sm:$0xff]
                  %316 = vst [vmem:[%s302 + $0x60] sm:$0xff] %v315
                  %v317 = vld [vmem:[%s301 + $0xb0] sm:$0xff]
                  %318 = vst [vmem:[%s302 + $0x68] sm:$0xff] %v317
                  %v319 = vld [vmem:[%s301 + $0xe0] sm:$0xff]
                  %320 = vst [vmem:[%s302 + $0x80] sm:$0xff] %v319
                  %v321 = vld [vmem:[%s301 + $0xe8] sm:$0xff]
                  %322 = vst [vmem:[%s302 + $0x88] sm:$0xff] %v321
                  %v323 = vld [vmem:[%s301 + $0x118] sm:$0xff]
                  %324 = vst [vmem:[%s302 + $0xa0] sm:$0xff] %v323
                  %v325 = vld [vmem:[%s301 + $0x120] sm:$0xff]
                  %326 = vst [vmem:[%s302 + $0xa8] sm:$0xff] %v325
                  %v327 = vld [vmem:[%s301 + $0x150] sm:$0xff]
                  %328 = vst [vmem:[%s302 + $0xc0] sm:$0xff] %v327
                  %v329 = vld [vmem:[%s301 + $0x158] sm:$0xff]
                  %330 = vst [vmem:[%s302 + $0xc8] sm:$0xff] %v329
                  %v331 = vld [vmem:[%s301 + $0x188] sm:$0xff]
                  %332 = vst [vmem:[%s302 + $0xe0] sm:$0xff] %v331
                  %v333 = vld [vmem:[%s301 + $0x190] sm:$0xff]
                  %334 = vst [vmem:[%s302 + $0xe8] sm:$0xff] %v333
                  %v335 = vld [vmem:[%s301 + $0x1c0] sm:$0xff]
                  %336 = vst [vmem:[%s302 + $0x100] sm:$0xff] %v335
                  %v337 = vld [vmem:[%s301 + $0x1c8] sm:$0xff]
                  %338 = vst [vmem:[%s302 + $0x108] sm:$0xff] %v337
                  %v339 = vld [vmem:[%s301 + $0x1f8] sm:$0xff]
                  %340 = vst [vmem:[%s302 + $0x120] sm:$0xff] %v339
                  %v341 = vld [vmem:[%s301 + $0x200] sm:$0xff]
                  %342 = vst [vmem:[%s302 + $0x128] sm:$0xff] %v341
                  %v343 = vld [vmem:[%s301 + $0x230] sm:$0xff]
                  %344 = vst [vmem:[%s302 + $0x140] sm:$0xff] %v343
                  %v345 = vld [vmem:[%s301 + $0x238] sm:$0xff]
                  %346 = vst [vmem:[%s302 + $0x148] sm:$0xff] %v345
                  %v347 = vld [vmem:[%s301 + $0x268] sm:$0xff]
                  %348 = vst [vmem:[%s302 + $0x160] sm:$0xff] %v347
                  %v349 = vld [vmem:[%s301 + $0x270] sm:$0xff]
                  %350 = vst [vmem:[%s302 + $0x168] sm:$0xff] %v349
                  %v351 = vld [vmem:[%s301 + $0x2a0] sm:$0xff]
                  %352 = vst [vmem:[%s302 + $0x180] sm:$0xff] %v351
                  %v353 = vld [vmem:[%s301 + $0x2a8] sm:$0xff]
                  %354 = vst [vmem:[%s302 + $0x188] sm:$0xff] %v353
                  %v355 = vld [vmem:[%s301 + $0x2d8] sm:$0xff]
                  %356 = vst [vmem:[%s302 + $0x1a0] sm:$0xff] %v355
                  %v357 = vld [vmem:[%s301 + $0x2e0] sm:$0xff]
                  %358 = vst [vmem:[%s302 + $0x1a8] sm:$0xff] %v357
                  %v359 = vld [vmem:[%s301 + $0x310] sm:$0xff]
                  %360 = vst [vmem:[%s302 + $0x1c0] sm:$0xff] %v359
                  %v361 = vld [vmem:[%s301 + $0x318] sm:$0xff]
                  %362 = vst [vmem:[%s302 + $0x1c8] sm:$0xff] %v361
                  %v363 = vld [vmem:[%s301 + $0x348] sm:$0xff]
                  %364 = vst [vmem:[%s302 + $0x1e0] sm:$0xff] %v363
                  %v365 = vld [vmem:[%s301 + $0x350] sm:$0xff]
                  %366 = vst [vmem:[%s302 + $0x1e8] sm:$0xff] %v365
                  %v367 = vld [vmem:[%s301 + $0x380] sm:$0xff]
                  %368 = vst [vmem:[%s302 + $0x200] sm:$0xff] %v367
                  %v369 = vld [vmem:[%s301 + $0x388] sm:$0xff]
                  %370 = vst [vmem:[%s302 + $0x208] sm:$0xff] %v369
                  %v371 = vld [vmem:[%s301 + $0x3b8] sm:$0xff]
                  %372 = vst [vmem:[%s302 + $0x220] sm:$0xff] %v371
                  %v373 = vld [vmem:[%s301 + $0x3c0] sm:$0xff]
                  %374 = vst [vmem:[%s302 + $0x228] sm:$0xff] %v373
                  %v375 = vld [vmem:[%s301 + $0x3f0] sm:$0xff]
                  %376 = vst [vmem:[%s302 + $0x240] sm:$0xff] %v375
                  %v377 = vld [vmem:[%s301 + $0x3f8] sm:$0xff]
                  %378 = vst [vmem:[%s302 + $0x248] sm:$0xff] %v377
                  %v379 = vld [vmem:[%s301 + $0x428] sm:$0xff]
                  %380 = vst [vmem:[%s302 + $0x260] sm:$0xff] %v379
                  %v381 = vld [vmem:[%s301 + $0x430] sm:$0xff]
                  %382 = vst [vmem:[%s302 + $0x268] sm:$0xff] %v381
                  %v383 = vld [vmem:[%s301 + $0x460] sm:$0xff]
                  %384 = vst [vmem:[%s302 + $0x280] sm:$0xff] %v383
                  %v385 = vld [vmem:[%s301 + $0x468] sm:$0xff]
                  %386 = vst [vmem:[%s302 + $0x288] sm:$0xff] %v385
                  %v387 = vld [vmem:[%s301 + $0x498] sm:$0xff]
                  %388 = vst [vmem:[%s302 + $0x2a0] sm:$0xff] %v387
                  %v389 = vld [vmem:[%s301 + $0x4a0] sm:$0xff]
                  %390 = vst [vmem:[%s302 + $0x2a8] sm:$0xff] %v389
                  %v391 = vld [vmem:[%s301 + $0x4d0] sm:$0xff]
                  %392 = vst [vmem:[%s302 + $0x2c0] sm:$0xff] %v391
                  %v393 = vld [vmem:[%s301 + $0x4d8] sm:$0xff]
                  %394 = vst [vmem:[%s302 + $0x2c8] sm:$0xff] %v393
                  %v395 = vld [vmem:[%s301 + $0x508] sm:$0xff]
                  %396 = vst [vmem:[%s302 + $0x2e0] sm:$0xff] %v395
                  %v397 = vld [vmem:[%s301 + $0x510] sm:$0xff]
                  %398 = vst [vmem:[%s302 + $0x2e8] sm:$0xff] %v397
                  %v399 = vld [vmem:[%s301 + $0x540] sm:$0xff]
                  %400 = vst [vmem:[%s302 + $0x300] sm:$0xff] %v399
                  %v401 = vld [vmem:[%s301 + $0x548] sm:$0xff]
                  %402 = vst [vmem:[%s302 + $0x308] sm:$0xff] %v401
                  %v403 = vld [vmem:[%s301 + $0x578] sm:$0xff]
                  %404 = vst [vmem:[%s302 + $0x320] sm:$0xff] %v403
                  %v405 = vld [vmem:[%s301 + $0x580] sm:$0xff]
                  %406 = vst [vmem:[%s302 + $0x328] sm:$0xff] %v405
                  %v407 = vld [vmem:[%s301 + $0x5b0] sm:$0xff]
                  %408 = vst [vmem:[%s302 + $0x340] sm:$0xff] %v407
                  %v409 = vld [vmem:[%s301 + $0x5b8] sm:$0xff]
                  %410 = vst [vmem:[%s302 + $0x348] sm:$0xff] %v409
                  %v411 = vld [vmem:[%s301 + $0x5e8] sm:$0xff]
                  %412 = vst [vmem:[%s302 + $0x360] sm:$0xff] %v411
                  %v413 = vld [vmem:[%s301 + $0x5f0] sm:$0xff]
                  %414 = vst [vmem:[%s302 + $0x368] sm:$0xff] %v413
                  %v415 = vld [vmem:[%s301 + $0x620] sm:$0xff]
                  %416 = vst [vmem:[%s302 + $0x380] sm:$0xff] %v415
                  %v417 = vld [vmem:[%s301 + $0x628] sm:$0xff]
                  %418 = vst [vmem:[%s302 + $0x388] sm:$0xff] %v417
                  %v419 = vld [vmem:[%s301 + $0x658] sm:$0xff]
                  %420 = vst [vmem:[%s302 + $0x3a0] sm:$0xff] %v419
                  %v421 = vld [vmem:[%s301 + $0x660] sm:$0xff]
                  %422 = vst [vmem:[%s302 + $0x3a8] sm:$0xff] %v421
                  %v423 = vld [vmem:[%s301 + $0x690] sm:$0xff]
                  %424 = vst [vmem:[%s302 + $0x3c0] sm:$0xff] %v423
                  %v425 = vld [vmem:[%s301 + $0x698] sm:$0xff]
                  %426 = vst [vmem:[%s302 + $0x3c8] sm:$0xff] %v425
                  %v427 = vld [vmem:[%s301 + $0x6c8] sm:$0xff]
                  %428 = vst [vmem:[%s302 + $0x3e0] sm:$0xff] %v427
                  %v429 = vld [vmem:[%s301 + $0x6d0] sm:$0xff]
                  %430 = vst [vmem:[%s302 + $0x3e8] sm:$0xff] %v429
                  %v431 = vld [vmem:[%s301 + $0x700] sm:$0xff]
                  %432 = vst [vmem:[%s302 + $0x400] sm:$0xff] %v431
                  %v433 = vld [vmem:[%s301 + $0x708] sm:$0xff]
                  %434 = vst [vmem:[%s302 + $0x408] sm:$0xff] %v433
                  %v435 = vld [vmem:[%s301 + $0x738] sm:$0xff]
                  %436 = vst [vmem:[%s302 + $0x420] sm:$0xff] %v435
                  %v437 = vld [vmem:[%s301 + $0x740] sm:$0xff]
                  %438 = vst [vmem:[%s302 + $0x428] sm:$0xff] %v437
                  %v439 = vld [vmem:[%s301 + $0x770] sm:$0xff]
                  %440 = vst [vmem:[%s302 + $0x440] sm:$0xff] %v439
                  %v441 = vld [vmem:[%s301 + $0x778] sm:$0xff]
                  %442 = vst [vmem:[%s302 + $0x448] sm:$0xff] %v441
                  %v443 = vld [vmem:[%s301 + $0x7a8] sm:$0xff]
                  %444 = vst [vmem:[%s302 + $0x460] sm:$0xff] %v443
                  %v445 = vld [vmem:[%s301 + $0x7b0] sm:$0xff]
                  %446 = vst [vmem:[%s302 + $0x468] sm:$0xff] %v445
                  %v447 = vld [vmem:[%s301 + $0x7e0] sm:$0xff]
                  %448 = vst [vmem:[%s302 + $0x480] sm:$0xff] %v447
                  %v449 = vld [vmem:[%s301 + $0x7e8] sm:$0xff]
                  %450 = vst [vmem:[%s302 + $0x488] sm:$0xff] %v449
                  %v451 = vld [vmem:[%s301 + $0x818] sm:$0xff]
                  %452 = vst [vmem:[%s302 + $0x4a0] sm:$0xff] %v451
                  %v453 = vld [vmem:[%s301 + $0x820] sm:$0xff]
                  %454 = vst [vmem:[%s302 + $0x4a8] sm:$0xff] %v453
                  %v455 = vld [vmem:[%s301 + $0x850] sm:$0xff]
                  %456 = vst [vmem:[%s302 + $0x4c0] sm:$0xff] %v455
                  %v457 = vld [vmem:[%s301 + $0x858] sm:$0xff]
                  %458 = vst [vmem:[%s302 + $0x4c8] sm:$0xff] %v457
                  %v459 = vld [vmem:[%s301 + $0x888] sm:$0xff]
                  %460 = vst [vmem:[%s302 + $0x4e0] sm:$0xff] %v459
                  %v461 = vld [vmem:[%s301 + $0x890] sm:$0xff]
                  %462 = vst [vmem:[%s302 + $0x4e8] sm:$0xff] %v461
                  %v463 = vld [vmem:[%s301 + $0x8c0] sm:$0xff]
                  %464 = vst [vmem:[%s302 + $0x500] sm:$0xff] %v463
                  %v465 = vld [vmem:[%s301 + $0x8c8] sm:$0xff]
                  %466 = vst [vmem:[%s302 + $0x508] sm:$0xff] %v465
                  %v467 = vld [vmem:[%s301 + $0x8f8] sm:$0xff]
                  %468 = vst [vmem:[%s302 + $0x520] sm:$0xff] %v467
                  %v469 = vld [vmem:[%s301 + $0x900] sm:$0xff]
                  %470 = vst [vmem:[%s302 + $0x528] sm:$0xff] %v469
                  %v471 = vld [vmem:[%s301 + $0x930] sm:$0xff]
                  %472 = vst [vmem:[%s302 + $0x540] sm:$0xff] %v471
                  %v473 = vld [vmem:[%s301 + $0x938] sm:$0xff]
                  %474 = vst [vmem:[%s302 + $0x548] sm:$0xff] %v473
                  %v475 = vld [vmem:[%s301 + $0x968] sm:$0xff]
                  %476 = vst [vmem:[%s302 + $0x560] sm:$0xff] %v475
                  %v477 = vld [vmem:[%s301 + $0x970] sm:$0xff]
                  %478 = vst [vmem:[%s302 + $0x568] sm:$0xff] %v477
                  %s479 = sadd.s32 1, %s300
                  %p480 = scmp.ge.s32.totalorder %s479, %s291
                  %s481 = scalar_select %p480, 0, %s479
                  %s482 = smul.u32 %s481, 16
                  %s483 = smul.u32 %s481, 16
                  %s484 = scalar_lea.vmem %s176, %s482
                  %s485 = scalar_lea.vmem %s166, %s483 [#allocation4]
                $region56: #{tpu_custom_call.1} parent=50 // loop_footer
                  %s297 = sadd.s32 %s295, 1
                $region57: #{tpu_custom_call.1} parent=50 // loop_footer_branch
                  %294 = sbr.rel target = $region53
                $region58: #{tpu_custom_call.1} parent=50 // loop_exit
                  _
                %s486 = sshrl.u32 %s290, 1
                %s487 = sand.u32 %s290, 1
                %s488 = smul.u32 %s486, 2
                %s489 = smul.u32 128, %s488
                %s490 = sshra.s32 %s489, 4
                %s491 = scalar_lea.vmem %s176, %s490
                %s492 = smul.u32 128, %s488
                %s493 = sshra.s32 %s492, 4
                %s494 = scalar_lea.vmem %s166, %s493 [#allocation4]
                // While loop
                $region59: #{tpu_custom_call.1} parent=50 // loop_pre_header
                  _
                $region60: #{tpu_custom_call.1} parent=50 // loop_header
                  %s498 = sphi 0, %s500
                  %p499 = scmp.ge.s32.totalorder %s498, %s487
                  %s503 = sphi 0, %s596
                  %s504 = sphi %s491, %s599
                  %s505 = sphi %s494, %s600
                $region61: #{tpu_custom_call.1} parent=50 // loop_header_branch
                  %502 = sbr.rel (%p499) target = $region65
                $region62: #{tpu_custom_call.1} parent=50 // loop_body
                  %v506 = vld [vmem:[%s504] sm:$0xff]
                  %507 = vst [vmem:[%s505] sm:$0xff] %v506
                  %v508 = vld [vmem:[%s504 + $0x38] sm:$0xff]
                  %509 = vst [vmem:[%s505 + $0x20] sm:$0xff] %v508
                  %v510 = vld [vmem:[%s504 + $0x70] sm:$0xff]
                  %511 = vst [vmem:[%s505 + $0x40] sm:$0xff] %v510
                  %v512 = vld [vmem:[%s504 + $0xa8] sm:$0xff]
                  %513 = vst [vmem:[%s505 + $0x60] sm:$0xff] %v512
                  %v514 = vld [vmem:[%s504 + $0xe0] sm:$0xff]
                  %515 = vst [vmem:[%s505 + $0x80] sm:$0xff] %v514
                  %v516 = vld [vmem:[%s504 + $0x118] sm:$0xff]
                  %517 = vst [vmem:[%s505 + $0xa0] sm:$0xff] %v516
                  %v518 = vld [vmem:[%s504 + $0x150] sm:$0xff]
                  %519 = vst [vmem:[%s505 + $0xc0] sm:$0xff] %v518
                  %v520 = vld [vmem:[%s504 + $0x188] sm:$0xff]
                  %521 = vst [vmem:[%s505 + $0xe0] sm:$0xff] %v520
                  %v522 = vld [vmem:[%s504 + $0x1c0] sm:$0xff]
                  %523 = vst [vmem:[%s505 + $0x100] sm:$0xff] %v522
                  %v524 = vld [vmem:[%s504 + $0x1f8] sm:$0xff]
                  %525 = vst [vmem:[%s505 + $0x120] sm:$0xff] %v524
                  %v526 = vld [vmem:[%s504 + $0x230] sm:$0xff]
                  %527 = vst [vmem:[%s505 + $0x140] sm:$0xff] %v526
                  %v528 = vld [vmem:[%s504 + $0x268] sm:$0xff]
                  %529 = vst [vmem:[%s505 + $0x160] sm:$0xff] %v528
                  %v530 = vld [vmem:[%s504 + $0x2a0] sm:$0xff]
                  %531 = vst [vmem:[%s505 + $0x180] sm:$0xff] %v530
                  %v532 = vld [vmem:[%s504 + $0x2d8] sm:$0xff]
                  %533 = vst [vmem:[%s505 + $0x1a0] sm:$0xff] %v532
                  %v534 = vld [vmem:[%s504 + $0x310] sm:$0xff]
                  %535 = vst [vmem:[%s505 + $0x1c0] sm:$0xff] %v534
                  %v536 = vld [vmem:[%s504 + $0x348] sm:$0xff]
                  %537 = vst [vmem:[%s505 + $0x1e0] sm:$0xff] %v536
                  %v538 = vld [vmem:[%s504 + $0x380] sm:$0xff]
                  %539 = vst [vmem:[%s505 + $0x200] sm:$0xff] %v538
                  %v540 = vld [vmem:[%s504 + $0x3b8] sm:$0xff]
                  %541 = vst [vmem:[%s505 + $0x220] sm:$0xff] %v540
                  %v542 = vld [vmem:[%s504 + $0x3f0] sm:$0xff]
                  %543 = vst [vmem:[%s505 + $0x240] sm:$0xff] %v542
                  %v544 = vld [vmem:[%s504 + $0x428] sm:$0xff]
                  %545 = vst [vmem:[%s505 + $0x260] sm:$0xff] %v544
                  %v546 = vld [vmem:[%s504 + $0x460] sm:$0xff]
                  %547 = vst [vmem:[%s505 + $0x280] sm:$0xff] %v546
                  %v548 = vld [vmem:[%s504 + $0x498] sm:$0xff]
                  %549 = vst [vmem:[%s505 + $0x2a0] sm:$0xff] %v548
                  %v550 = vld [vmem:[%s504 + $0x4d0] sm:$0xff]
                  %551 = vst [vmem:[%s505 + $0x2c0] sm:$0xff] %v550
                  %v552 = vld [vmem:[%s504 + $0x508] sm:$0xff]
                  %553 = vst [vmem:[%s505 + $0x2e0] sm:$0xff] %v552
                  %v554 = vld [vmem:[%s504 + $0x540] sm:$0xff]
                  %555 = vst [vmem:[%s505 + $0x300] sm:$0xff] %v554
                  %v556 = vld [vmem:[%s504 + $0x578] sm:$0xff]
                  %557 = vst [vmem:[%s505 + $0x320] sm:$0xff] %v556
                  %v558 = vld [vmem:[%s504 + $0x5b0] sm:$0xff]
                  %559 = vst [vmem:[%s505 + $0x340] sm:$0xff] %v558
                  %v560 = vld [vmem:[%s504 + $0x5e8] sm:$0xff]
                  %561 = vst [vmem:[%s505 + $0x360] sm:$0xff] %v560
                  %v562 = vld [vmem:[%s504 + $0x620] sm:$0xff]
                  %563 = vst [vmem:[%s505 + $0x380] sm:$0xff] %v562
                  %v564 = vld [vmem:[%s504 + $0x658] sm:$0xff]
                  %565 = vst [vmem:[%s505 + $0x3a0] sm:$0xff] %v564
                  %v566 = vld [vmem:[%s504 + $0x690] sm:$0xff]
                  %567 = vst [vmem:[%s505 + $0x3c0] sm:$0xff] %v566
                  %v568 = vld [vmem:[%s504 + $0x6c8] sm:$0xff]
                  %569 = vst [vmem:[%s505 + $0x3e0] sm:$0xff] %v568
                  %v570 = vld [vmem:[%s504 + $0x700] sm:$0xff]
                  %571 = vst [vmem:[%s505 + $0x400] sm:$0xff] %v570
                  %v572 = vld [vmem:[%s504 + $0x738] sm:$0xff]
                  %573 = vst [vmem:[%s505 + $0x420] sm:$0xff] %v572
                  %v574 = vld [vmem:[%s504 + $0x770] sm:$0xff]
                  %575 = vst [vmem:[%s505 + $0x440] sm:$0xff] %v574
                  %v576 = vld [vmem:[%s504 + $0x7a8] sm:$0xff]
                  %577 = vst [vmem:[%s505 + $0x460] sm:$0xff] %v576
                  %v578 = vld [vmem:[%s504 + $0x7e0] sm:$0xff]
                  %579 = vst [vmem:[%s505 + $0x480] sm:$0xff] %v578
                  %v580 = vld [vmem:[%s504 + $0x818] sm:$0xff]
                  %581 = vst [vmem:[%s505 + $0x4a0] sm:$0xff] %v580
                  %v582 = vld [vmem:[%s504 + $0x850] sm:$0xff]
                  %583 = vst [vmem:[%s505 + $0x4c0] sm:$0xff] %v582
                  %v584 = vld [vmem:[%s504 + $0x888] sm:$0xff]
                  %585 = vst [vmem:[%s505 + $0x4e0] sm:$0xff] %v584
                  %v586 = vld [vmem:[%s504 + $0x8c0] sm:$0xff]
                  %587 = vst [vmem:[%s505 + $0x500] sm:$0xff] %v586
                  %v588 = vld [vmem:[%s504 + $0x8f8] sm:$0xff]
                  %589 = vst [vmem:[%s505 + $0x520] sm:$0xff] %v588
                  %v590 = vld [vmem:[%s504 + $0x930] sm:$0xff]
                  %591 = vst [vmem:[%s505 + $0x540] sm:$0xff] %v590
                  %v592 = vld [vmem:[%s504 + $0x968] sm:$0xff]
                  %593 = vst [vmem:[%s505 + $0x560] sm:$0xff] %v592
                  %s594 = sadd.s32 1, %s503
                  %p595 = scmp.ge.s32.totalorder %s594, %s487
                  %s596 = scalar_select %p595, 0, %s594
                  %s597 = smul.u32 %s596, 8
                  %s598 = smul.u32 %s596, 8
                  %s599 = scalar_lea.vmem %s491, %s597
                  %s600 = scalar_lea.vmem %s494, %s598 [#allocation4]
                $region63: #{tpu_custom_call.1} parent=50 // loop_footer
                  %s500 = sadd.s32 %s498, 1
                $region64: #{tpu_custom_call.1} parent=50 // loop_footer_branch
                  %497 = sbr.rel target = $region60
                $region65: #{tpu_custom_call.1} parent=50 // loop_exit
                  _
              $region51: #{tpu_custom_call.1} parent=35 // pred_fallthru
                _
              %p601 = pneg %p286
              // Predicated region
              $region66: #{tpu_custom_call.1} parent=35 // pred_check
                _
              $region67: #{tpu_custom_call.1} parent=35 // pred_check_branch
                %603 = sbr.rel (%p286) target = $region69
              $region68: #{tpu_custom_call.1} parent=35 // pred_region
                %s604 = sand.u32 %s177, 7
                %s605 = ssub.s32 %s177, %s604
                %s606 = scalar_lea.vmem %s176, %s605
                %s607 = ssub.s32 %s177, %s604
                %s608 = scalar_lea.vmem %s166, %s607 [#allocation4]
                %s609 = sshrl.u32 %s177, 3
                %s610 = sshrl.u32 %s609, 1
                // While loop
                $region70: #{tpu_custom_call.1} parent=68 // loop_pre_header
                  _
                $region71: #{tpu_custom_call.1} parent=68 // loop_header
                  %s614 = sphi 0, %s616
                  %p615 = scmp.ge.s32.totalorder %s614, %s610
                  %s619 = sphi 0, %s800
                  %s620 = sphi %s176, %s803
                  %s621 = sphi %s166, %s804
                $region72: #{tpu_custom_call.1} parent=68 // loop_header_branch
                  %618 = sbr.rel (%p615) target = $region76
                $region73: #{tpu_custom_call.1} parent=68 // loop_body
                  %v622 = vld [vmem:[%s620] sm:$0xff]
                  %623 = vst [vmem:[%s621] sm:$0xff] %v622
                  %v624 = vld [vmem:[%s620 + $0x8] sm:$0xff]
                  %625 = vst [vmem:[%s621 + $0x8] sm:$0xff] %v624
                  %v626 = vld [vmem:[%s620 + $0x38] sm:$0xff]
                  %627 = vst [vmem:[%s621 + $0x20] sm:$0xff] %v626
                  %v628 = vld [vmem:[%s620 + $0x40] sm:$0xff]
                  %629 = vst [vmem:[%s621 + $0x28] sm:$0xff] %v628
                  %v630 = vld [vmem:[%s620 + $0x70] sm:$0xff]
                  %631 = vst [vmem:[%s621 + $0x40] sm:$0xff] %v630
                  %v632 = vld [vmem:[%s620 + $0x78] sm:$0xff]
                  %633 = vst [vmem:[%s621 + $0x48] sm:$0xff] %v632
                  %v634 = vld [vmem:[%s620 + $0xa8] sm:$0xff]
                  %635 = vst [vmem:[%s621 + $0x60] sm:$0xff] %v634
                  %v636 = vld [vmem:[%s620 + $0xb0] sm:$0xff]
                  %637 = vst [vmem:[%s621 + $0x68] sm:$0xff] %v636
                  %v638 = vld [vmem:[%s620 + $0xe0] sm:$0xff]
                  %639 = vst [vmem:[%s621 + $0x80] sm:$0xff] %v638
                  %v640 = vld [vmem:[%s620 + $0xe8] sm:$0xff]
                  %641 = vst [vmem:[%s621 + $0x88] sm:$0xff] %v640
                  %v642 = vld [vmem:[%s620 + $0x118] sm:$0xff]
                  %643 = vst [vmem:[%s621 + $0xa0] sm:$0xff] %v642
                  %v644 = vld [vmem:[%s620 + $0x120] sm:$0xff]
                  %645 = vst [vmem:[%s621 + $0xa8] sm:$0xff] %v644
                  %v646 = vld [vmem:[%s620 + $0x150] sm:$0xff]
                  %647 = vst [vmem:[%s621 + $0xc0] sm:$0xff] %v646
                  %v648 = vld [vmem:[%s620 + $0x158] sm:$0xff]
                  %649 = vst [vmem:[%s621 + $0xc8] sm:$0xff] %v648
                  %v650 = vld [vmem:[%s620 + $0x188] sm:$0xff]
                  %651 = vst [vmem:[%s621 + $0xe0] sm:$0xff] %v650
                  %v652 = vld [vmem:[%s620 + $0x190] sm:$0xff]
                  %653 = vst [vmem:[%s621 + $0xe8] sm:$0xff] %v652
                  %v654 = vld [vmem:[%s620 + $0x1c0] sm:$0xff]
                  %655 = vst [vmem:[%s621 + $0x100] sm:$0xff] %v654
                  %v656 = vld [vmem:[%s620 + $0x1c8] sm:$0xff]
                  %657 = vst [vmem:[%s621 + $0x108] sm:$0xff] %v656
                  %v658 = vld [vmem:[%s620 + $0x1f8] sm:$0xff]
                  %659 = vst [vmem:[%s621 + $0x120] sm:$0xff] %v658
                  %v660 = vld [vmem:[%s620 + $0x200] sm:$0xff]
                  %661 = vst [vmem:[%s621 + $0x128] sm:$0xff] %v660
                  %v662 = vld [vmem:[%s620 + $0x230] sm:$0xff]
                  %663 = vst [vmem:[%s621 + $0x140] sm:$0xff] %v662
                  %v664 = vld [vmem:[%s620 + $0x238] sm:$0xff]
                  %665 = vst [vmem:[%s621 + $0x148] sm:$0xff] %v664
                  %v666 = vld [vmem:[%s620 + $0x268] sm:$0xff]
                  %667 = vst [vmem:[%s621 + $0x160] sm:$0xff] %v666
                  %v668 = vld [vmem:[%s620 + $0x270] sm:$0xff]
                  %669 = vst [vmem:[%s621 + $0x168] sm:$0xff] %v668
                  %v670 = vld [vmem:[%s620 + $0x2a0] sm:$0xff]
                  %671 = vst [vmem:[%s621 + $0x180] sm:$0xff] %v670
                  %v672 = vld [vmem:[%s620 + $0x2a8] sm:$0xff]
                  %673 = vst [vmem:[%s621 + $0x188] sm:$0xff] %v672
                  %v674 = vld [vmem:[%s620 + $0x2d8] sm:$0xff]
                  %675 = vst [vmem:[%s621 + $0x1a0] sm:$0xff] %v674
                  %v676 = vld [vmem:[%s620 + $0x2e0] sm:$0xff]
                  %677 = vst [vmem:[%s621 + $0x1a8] sm:$0xff] %v676
                  %v678 = vld [vmem:[%s620 + $0x310] sm:$0xff]
                  %679 = vst [vmem:[%s621 + $0x1c0] sm:$0xff] %v678
                  %v680 = vld [vmem:[%s620 + $0x318] sm:$0xff]
                  %681 = vst [vmem:[%s621 + $0x1c8] sm:$0xff] %v680
                  %v682 = vld [vmem:[%s620 + $0x348] sm:$0xff]
                  %683 = vst [vmem:[%s621 + $0x1e0] sm:$0xff] %v682
                  %v684 = vld [vmem:[%s620 + $0x350] sm:$0xff]
                  %685 = vst [vmem:[%s621 + $0x1e8] sm:$0xff] %v684
                  %v686 = vld [vmem:[%s620 + $0x380] sm:$0xff]
                  %687 = vst [vmem:[%s621 + $0x200] sm:$0xff] %v686
                  %v688 = vld [vmem:[%s620 + $0x388] sm:$0xff]
                  %689 = vst [vmem:[%s621 + $0x208] sm:$0xff] %v688
                  %v690 = vld [vmem:[%s620 + $0x3b8] sm:$0xff]
                  %691 = vst [vmem:[%s621 + $0x220] sm:$0xff] %v690
                  %v692 = vld [vmem:[%s620 + $0x3c0] sm:$0xff]
                  %693 = vst [vmem:[%s621 + $0x228] sm:$0xff] %v692
                  %v694 = vld [vmem:[%s620 + $0x3f0] sm:$0xff]
                  %695 = vst [vmem:[%s621 + $0x240] sm:$0xff] %v694
                  %v696 = vld [vmem:[%s620 + $0x3f8] sm:$0xff]
                  %697 = vst [vmem:[%s621 + $0x248] sm:$0xff] %v696
                  %v698 = vld [vmem:[%s620 + $0x428] sm:$0xff]
                  %699 = vst [vmem:[%s621 + $0x260] sm:$0xff] %v698
                  %v700 = vld [vmem:[%s620 + $0x430] sm:$0xff]
                  %701 = vst [vmem:[%s621 + $0x268] sm:$0xff] %v700
                  %v702 = vld [vmem:[%s620 + $0x460] sm:$0xff]
                  %703 = vst [vmem:[%s621 + $0x280] sm:$0xff] %v702
                  %v704 = vld [vmem:[%s620 + $0x468] sm:$0xff]
                  %705 = vst [vmem:[%s621 + $0x288] sm:$0xff] %v704
                  %v706 = vld [vmem:[%s620 + $0x498] sm:$0xff]
                  %707 = vst [vmem:[%s621 + $0x2a0] sm:$0xff] %v706
                  %v708 = vld [vmem:[%s620 + $0x4a0] sm:$0xff]
                  %709 = vst [vmem:[%s621 + $0x2a8] sm:$0xff] %v708
                  %v710 = vld [vmem:[%s620 + $0x4d0] sm:$0xff]
                  %711 = vst [vmem:[%s621 + $0x2c0] sm:$0xff] %v710
                  %v712 = vld [vmem:[%s620 + $0x4d8] sm:$0xff]
                  %713 = vst [vmem:[%s621 + $0x2c8] sm:$0xff] %v712
                  %v714 = vld [vmem:[%s620 + $0x508] sm:$0xff]
                  %715 = vst [vmem:[%s621 + $0x2e0] sm:$0xff] %v714
                  %v716 = vld [vmem:[%s620 + $0x510] sm:$0xff]
                  %717 = vst [vmem:[%s621 + $0x2e8] sm:$0xff] %v716
                  %v718 = vld [vmem:[%s620 + $0x540] sm:$0xff]
                  %719 = vst [vmem:[%s621 + $0x300] sm:$0xff] %v718
                  %v720 = vld [vmem:[%s620 + $0x548] sm:$0xff]
                  %721 = vst [vmem:[%s621 + $0x308] sm:$0xff] %v720
                  %v722 = vld [vmem:[%s620 + $0x578] sm:$0xff]
                  %723 = vst [vmem:[%s621 + $0x320] sm:$0xff] %v722
                  %v724 = vld [vmem:[%s620 + $0x580] sm:$0xff]
                  %725 = vst [vmem:[%s621 + $0x328] sm:$0xff] %v724
                  %v726 = vld [vmem:[%s620 + $0x5b0] sm:$0xff]
                  %727 = vst [vmem:[%s621 + $0x340] sm:$0xff] %v726
                  %v728 = vld [vmem:[%s620 + $0x5b8] sm:$0xff]
                  %729 = vst [vmem:[%s621 + $0x348] sm:$0xff] %v728
                  %v730 = vld [vmem:[%s620 + $0x5e8] sm:$0xff]
                  %731 = vst [vmem:[%s621 + $0x360] sm:$0xff] %v730
                  %v732 = vld [vmem:[%s620 + $0x5f0] sm:$0xff]
                  %733 = vst [vmem:[%s621 + $0x368] sm:$0xff] %v732
                  %v734 = vld [vmem:[%s620 + $0x620] sm:$0xff]
                  %735 = vst [vmem:[%s621 + $0x380] sm:$0xff] %v734
                  %v736 = vld [vmem:[%s620 + $0x628] sm:$0xff]
                  %737 = vst [vmem:[%s621 + $0x388] sm:$0xff] %v736
                  %v738 = vld [vmem:[%s620 + $0x658] sm:$0xff]
                  %739 = vst [vmem:[%s621 + $0x3a0] sm:$0xff] %v738
                  %v740 = vld [vmem:[%s620 + $0x660] sm:$0xff]
                  %741 = vst [vmem:[%s621 + $0x3a8] sm:$0xff] %v740
                  %v742 = vld [vmem:[%s620 + $0x690] sm:$0xff]
                  %743 = vst [vmem:[%s621 + $0x3c0] sm:$0xff] %v742
                  %v744 = vld [vmem:[%s620 + $0x698] sm:$0xff]
                  %745 = vst [vmem:[%s621 + $0x3c8] sm:$0xff] %v744
                  %v746 = vld [vmem:[%s620 + $0x6c8] sm:$0xff]
                  %747 = vst [vmem:[%s621 + $0x3e0] sm:$0xff] %v746
                  %v748 = vld [vmem:[%s620 + $0x6d0] sm:$0xff]
                  %749 = vst [vmem:[%s621 + $0x3e8] sm:$0xff] %v748
                  %v750 = vld [vmem:[%s620 + $0x700] sm:$0xff]
                  %751 = vst [vmem:[%s621 + $0x400] sm:$0xff] %v750
                  %v752 = vld [vmem:[%s620 + $0x708] sm:$0xff]
                  %753 = vst [vmem:[%s621 + $0x408] sm:$0xff] %v752
                  %v754 = vld [vmem:[%s620 + $0x738] sm:$0xff]
                  %755 = vst [vmem:[%s621 + $0x420] sm:$0xff] %v754
                  %v756 = vld [vmem:[%s620 + $0x740] sm:$0xff]
                  %757 = vst [vmem:[%s621 + $0x428] sm:$0xff] %v756
                  %v758 = vld [vmem:[%s620 + $0x770] sm:$0xff]
                  %759 = vst [vmem:[%s621 + $0x440] sm:$0xff] %v758
                  %v760 = vld [vmem:[%s620 + $0x778] sm:$0xff]
                  %761 = vst [vmem:[%s621 + $0x448] sm:$0xff] %v760
                  %v762 = vld [vmem:[%s620 + $0x7a8] sm:$0xff]
                  %763 = vst [vmem:[%s621 + $0x460] sm:$0xff] %v762
                  %v764 = vld [vmem:[%s620 + $0x7b0] sm:$0xff]
                  %765 = vst [vmem:[%s621 + $0x468] sm:$0xff] %v764
                  %v766 = vld [vmem:[%s620 + $0x7e0] sm:$0xff]
                  %767 = vst [vmem:[%s621 + $0x480] sm:$0xff] %v766
                  %v768 = vld [vmem:[%s620 + $0x7e8] sm:$0xff]
                  %769 = vst [vmem:[%s621 + $0x488] sm:$0xff] %v768
                  %v770 = vld [vmem:[%s620 + $0x818] sm:$0xff]
                  %771 = vst [vmem:[%s621 + $0x4a0] sm:$0xff] %v770
                  %v772 = vld [vmem:[%s620 + $0x820] sm:$0xff]
                  %773 = vst [vmem:[%s621 + $0x4a8] sm:$0xff] %v772
                  %v774 = vld [vmem:[%s620 + $0x850] sm:$0xff]
                  %775 = vst [vmem:[%s621 + $0x4c0] sm:$0xff] %v774
                  %v776 = vld [vmem:[%s620 + $0x858] sm:$0xff]
                  %777 = vst [vmem:[%s621 + $0x4c8] sm:$0xff] %v776
                  %v778 = vld [vmem:[%s620 + $0x888] sm:$0xff]
                  %779 = vst [vmem:[%s621 + $0x4e0] sm:$0xff] %v778
                  %v780 = vld [vmem:[%s620 + $0x890] sm:$0xff]
                  %781 = vst [vmem:[%s621 + $0x4e8] sm:$0xff] %v780
                  %v782 = vld [vmem:[%s620 + $0x8c0] sm:$0xff]
                  %783 = vst [vmem:[%s621 + $0x500] sm:$0xff] %v782
                  %v784 = vld [vmem:[%s620 + $0x8c8] sm:$0xff]
                  %785 = vst [vmem:[%s621 + $0x508] sm:$0xff] %v784
                  %v786 = vld [vmem:[%s620 + $0x8f8] sm:$0xff]
                  %787 = vst [vmem:[%s621 + $0x520] sm:$0xff] %v786
                  %v788 = vld [vmem:[%s620 + $0x900] sm:$0xff]
                  %789 = vst [vmem:[%s621 + $0x528] sm:$0xff] %v788
                  %v790 = vld [vmem:[%s620 + $0x930] sm:$0xff]
                  %791 = vst [vmem:[%s621 + $0x540] sm:$0xff] %v790
                  %v792 = vld [vmem:[%s620 + $0x938] sm:$0xff]
                  %793 = vst [vmem:[%s621 + $0x548] sm:$0xff] %v792
                  %v794 = vld [vmem:[%s620 + $0x968] sm:$0xff]
                  %795 = vst [vmem:[%s621 + $0x560] sm:$0xff] %v794
                  %v796 = vld [vmem:[%s620 + $0x970] sm:$0xff]
                  %797 = vst [vmem:[%s621 + $0x568] sm:$0xff] %v796
                  %s798 = sadd.s32 1, %s619
                  %p799 = scmp.ge.s32.totalorder %s798, %s610
                  %s800 = scalar_select %p799, 0, %s798
                  %s801 = smul.u32 %s800, 16
                  %s802 = smul.u32 %s800, 16
                  %s803 = scalar_lea.vmem %s176, %s801
                  %s804 = scalar_lea.vmem %s166, %s802 [#allocation4]
                $region74: #{tpu_custom_call.1} parent=68 // loop_footer
                  %s616 = sadd.s32 %s614, 1
                $region75: #{tpu_custom_call.1} parent=68 // loop_footer_branch
                  %613 = sbr.rel target = $region71
                $region76: #{tpu_custom_call.1} parent=68 // loop_exit
                  _
                %s805 = sshrl.u32 %s609, 1
                %s806 = sand.u32 %s609, 1
                %s807 = smul.u32 %s805, 2
                %s808 = smul.u32 128, %s807
                %s809 = sshra.s32 %s808, 4
                %s810 = scalar_lea.vmem %s176, %s809
                %s811 = smul.u32 128, %s807
                %s812 = sshra.s32 %s811, 4
                %s813 = scalar_lea.vmem %s166, %s812 [#allocation4]
                // While loop
                $region77: #{tpu_custom_call.1} parent=68 // loop_pre_header
                  _
                $region78: #{tpu_custom_call.1} parent=68 // loop_header
                  %s817 = sphi 0, %s819
                  %p818 = scmp.ge.s32.totalorder %s817, %s806
                  %s822 = sphi 0, %s915
                  %s823 = sphi %s810, %s918
                  %s824 = sphi %s813, %s919
                $region79: #{tpu_custom_call.1} parent=68 // loop_header_branch
                  %821 = sbr.rel (%p818) target = $region83
                $region80: #{tpu_custom_call.1} parent=68 // loop_body
                  %v825 = vld [vmem:[%s823] sm:$0xff]
                  %826 = vst [vmem:[%s824] sm:$0xff] %v825
                  %v827 = vld [vmem:[%s823 + $0x38] sm:$0xff]
                  %828 = vst [vmem:[%s824 + $0x20] sm:$0xff] %v827
                  %v829 = vld [vmem:[%s823 + $0x70] sm:$0xff]
                  %830 = vst [vmem:[%s824 + $0x40] sm:$0xff] %v829
                  %v831 = vld [vmem:[%s823 + $0xa8] sm:$0xff]
                  %832 = vst [vmem:[%s824 + $0x60] sm:$0xff] %v831
                  %v833 = vld [vmem:[%s823 + $0xe0] sm:$0xff]
                  %834 = vst [vmem:[%s824 + $0x80] sm:$0xff] %v833
                  %v835 = vld [vmem:[%s823 + $0x118] sm:$0xff]
                  %836 = vst [vmem:[%s824 + $0xa0] sm:$0xff] %v835
                  %v837 = vld [vmem:[%s823 + $0x150] sm:$0xff]
                  %838 = vst [vmem:[%s824 + $0xc0] sm:$0xff] %v837
                  %v839 = vld [vmem:[%s823 + $0x188] sm:$0xff]
                  %840 = vst [vmem:[%s824 + $0xe0] sm:$0xff] %v839
                  %v841 = vld [vmem:[%s823 + $0x1c0] sm:$0xff]
                  %842 = vst [vmem:[%s824 + $0x100] sm:$0xff] %v841
                  %v843 = vld [vmem:[%s823 + $0x1f8] sm:$0xff]
                  %844 = vst [vmem:[%s824 + $0x120] sm:$0xff] %v843
                  %v845 = vld [vmem:[%s823 + $0x230] sm:$0xff]
                  %846 = vst [vmem:[%s824 + $0x140] sm:$0xff] %v845
                  %v847 = vld [vmem:[%s823 + $0x268] sm:$0xff]
                  %848 = vst [vmem:[%s824 + $0x160] sm:$0xff] %v847
                  %v849 = vld [vmem:[%s823 + $0x2a0] sm:$0xff]
                  %850 = vst [vmem:[%s824 + $0x180] sm:$0xff] %v849
                  %v851 = vld [vmem:[%s823 + $0x2d8] sm:$0xff]
                  %852 = vst [vmem:[%s824 + $0x1a0] sm:$0xff] %v851
                  %v853 = vld [vmem:[%s823 + $0x310] sm:$0xff]
                  %854 = vst [vmem:[%s824 + $0x1c0] sm:$0xff] %v853
                  %v855 = vld [vmem:[%s823 + $0x348] sm:$0xff]
                  %856 = vst [vmem:[%s824 + $0x1e0] sm:$0xff] %v855
                  %v857 = vld [vmem:[%s823 + $0x380] sm:$0xff]
                  %858 = vst [vmem:[%s824 + $0x200] sm:$0xff] %v857
                  %v859 = vld [vmem:[%s823 + $0x3b8] sm:$0xff]
                  %860 = vst [vmem:[%s824 + $0x220] sm:$0xff] %v859
                  %v861 = vld [vmem:[%s823 + $0x3f0] sm:$0xff]
                  %862 = vst [vmem:[%s824 + $0x240] sm:$0xff] %v861
                  %v863 = vld [vmem:[%s823 + $0x428] sm:$0xff]
                  %864 = vst [vmem:[%s824 + $0x260] sm:$0xff] %v863
                  %v865 = vld [vmem:[%s823 + $0x460] sm:$0xff]
                  %866 = vst [vmem:[%s824 + $0x280] sm:$0xff] %v865
                  %v867 = vld [vmem:[%s823 + $0x498] sm:$0xff]
                  %868 = vst [vmem:[%s824 + $0x2a0] sm:$0xff] %v867
                  %v869 = vld [vmem:[%s823 + $0x4d0] sm:$0xff]
                  %870 = vst [vmem:[%s824 + $0x2c0] sm:$0xff] %v869
                  %v871 = vld [vmem:[%s823 + $0x508] sm:$0xff]
                  %872 = vst [vmem:[%s824 + $0x2e0] sm:$0xff] %v871
                  %v873 = vld [vmem:[%s823 + $0x540] sm:$0xff]
                  %874 = vst [vmem:[%s824 + $0x300] sm:$0xff] %v873
                  %v875 = vld [vmem:[%s823 + $0x578] sm:$0xff]
                  %876 = vst [vmem:[%s824 + $0x320] sm:$0xff] %v875
                  %v877 = vld [vmem:[%s823 + $0x5b0] sm:$0xff]
                  %878 = vst [vmem:[%s824 + $0x340] sm:$0xff] %v877
                  %v879 = vld [vmem:[%s823 + $0x5e8] sm:$0xff]
                  %880 = vst [vmem:[%s824 + $0x360] sm:$0xff] %v879
                  %v881 = vld [vmem:[%s823 + $0x620] sm:$0xff]
                  %882 = vst [vmem:[%s824 + $0x380] sm:$0xff] %v881
                  %v883 = vld [vmem:[%s823 + $0x658] sm:$0xff]
                  %884 = vst [vmem:[%s824 + $0x3a0] sm:$0xff] %v883
                  %v885 = vld [vmem:[%s823 + $0x690] sm:$0xff]
                  %886 = vst [vmem:[%s824 + $0x3c0] sm:$0xff] %v885
                  %v887 = vld [vmem:[%s823 + $0x6c8] sm:$0xff]
                  %888 = vst [vmem:[%s824 + $0x3e0] sm:$0xff] %v887
                  %v889 = vld [vmem:[%s823 + $0x700] sm:$0xff]
                  %890 = vst [vmem:[%s824 + $0x400] sm:$0xff] %v889
                  %v891 = vld [vmem:[%s823 + $0x738] sm:$0xff]
                  %892 = vst [vmem:[%s824 + $0x420] sm:$0xff] %v891
                  %v893 = vld [vmem:[%s823 + $0x770] sm:$0xff]
                  %894 = vst [vmem:[%s824 + $0x440] sm:$0xff] %v893
                  %v895 = vld [vmem:[%s823 + $0x7a8] sm:$0xff]
                  %896 = vst [vmem:[%s824 + $0x460] sm:$0xff] %v895
                  %v897 = vld [vmem:[%s823 + $0x7e0] sm:$0xff]
                  %898 = vst [vmem:[%s824 + $0x480] sm:$0xff] %v897
                  %v899 = vld [vmem:[%s823 + $0x818] sm:$0xff]
                  %900 = vst [vmem:[%s824 + $0x4a0] sm:$0xff] %v899
                  %v901 = vld [vmem:[%s823 + $0x850] sm:$0xff]
                  %902 = vst [vmem:[%s824 + $0x4c0] sm:$0xff] %v901
                  %v903 = vld [vmem:[%s823 + $0x888] sm:$0xff]
                  %904 = vst [vmem:[%s824 + $0x4e0] sm:$0xff] %v903
                  %v905 = vld [vmem:[%s823 + $0x8c0] sm:$0xff]
                  %906 = vst [vmem:[%s824 + $0x500] sm:$0xff] %v905
                  %v907 = vld [vmem:[%s823 + $0x8f8] sm:$0xff]
                  %908 = vst [vmem:[%s824 + $0x520] sm:$0xff] %v907
                  %v909 = vld [vmem:[%s823 + $0x930] sm:$0xff]
                  %910 = vst [vmem:[%s824 + $0x540] sm:$0xff] %v909
                  %v911 = vld [vmem:[%s823 + $0x968] sm:$0xff]
                  %912 = vst [vmem:[%s824 + $0x560] sm:$0xff] %v911
                  %s913 = sadd.s32 1, %s822
                  %p914 = scmp.ge.s32.totalorder %s913, %s806
                  %s915 = scalar_select %p914, 0, %s913
                  %s916 = smul.u32 %s915, 8
                  %s917 = smul.u32 %s915, 8
                  %s918 = scalar_lea.vmem %s810, %s916
                  %s919 = scalar_lea.vmem %s813, %s917 [#allocation4]
                $region81: #{tpu_custom_call.1} parent=68 // loop_footer
                  %s819 = sadd.s32 %s817, 1
                $region82: #{tpu_custom_call.1} parent=68 // loop_footer_branch
                  %816 = sbr.rel target = $region78
                $region83: #{tpu_custom_call.1} parent=68 // loop_exit
                  _
                %s920 = sshllo.u32 0, %s604
                loop: start=0, step=1, limit=1
                $region84: #{tpu_custom_call.1} parent=68 // loop_pre_header
                  _
                $region85: #{tpu_custom_call.1} parent=68 // loop_header
                  %s922 = sphi 0, %s926
                  %p923 = scmp.ge.s32.totalorder %s922, 1
                  %s927 = sphi %s606, %s606
                  %s928 = sphi %s608, %s608
                $region86: #{tpu_custom_call.1} parent=68 // loop_header_branch
                  %925 = sbr.rel (%p923) target = $region90
                $region87: #{tpu_custom_call.1} parent=68 // loop_body
                  %v929 = vld [vmem:[%s927] sm:%s920]
                  %930 = vst [vmem:[%s928] sm:%s920] %v929
                  %v931 = vld [vmem:[%s927 + $0x38] sm:%s920]
                  %932 = vst [vmem:[%s928 + $0x20] sm:%s920] %v931
                  %v933 = vld [vmem:[%s927 + $0x70] sm:%s920]
                  %934 = vst [vmem:[%s928 + $0x40] sm:%s920] %v933
                  %v935 = vld [vmem:[%s927 + $0xa8] sm:%s920]
                  %936 = vst [vmem:[%s928 + $0x60] sm:%s920] %v935
                  %v937 = vld [vmem:[%s927 + $0xe0] sm:%s920]
                  %938 = vst [vmem:[%s928 + $0x80] sm:%s920] %v937
                  %v939 = vld [vmem:[%s927 + $0x118] sm:%s920]
                  %940 = vst [vmem:[%s928 + $0xa0] sm:%s920] %v939
                  %v941 = vld [vmem:[%s927 + $0x150] sm:%s920]
                  %942 = vst [vmem:[%s928 + $0xc0] sm:%s920] %v941
                  %v943 = vld [vmem:[%s927 + $0x188] sm:%s920]
                  %944 = vst [vmem:[%s928 + $0xe0] sm:%s920] %v943
                  %v945 = vld [vmem:[%s927 + $0x1c0] sm:%s920]
                  %946 = vst [vmem:[%s928 + $0x100] sm:%s920] %v945
                  %v947 = vld [vmem:[%s927 + $0x1f8] sm:%s920]
                  %948 = vst [vmem:[%s928 + $0x120] sm:%s920] %v947
                  %v949 = vld [vmem:[%s927 + $0x230] sm:%s920]
                  %950 = vst [vmem:[%s928 + $0x140] sm:%s920] %v949
                  %v951 = vld [vmem:[%s927 + $0x268] sm:%s920]
                  %952 = vst [vmem:[%s928 + $0x160] sm:%s920] %v951
                  %v953 = vld [vmem:[%s927 + $0x2a0] sm:%s920]
                  %954 = vst [vmem:[%s928 + $0x180] sm:%s920] %v953
                  %v955 = vld [vmem:[%s927 + $0x2d8] sm:%s920]
                  %956 = vst [vmem:[%s928 + $0x1a0] sm:%s920] %v955
                  %v957 = vld [vmem:[%s927 + $0x310] sm:%s920]
                  %958 = vst [vmem:[%s928 + $0x1c0] sm:%s920] %v957
                  %v959 = vld [vmem:[%s927 + $0x348] sm:%s920]
                  %960 = vst [vmem:[%s928 + $0x1e0] sm:%s920] %v959
                  %v961 = vld [vmem:[%s927 + $0x380] sm:%s920]
                  %962 = vst [vmem:[%s928 + $0x200] sm:%s920] %v961
                  %v963 = vld [vmem:[%s927 + $0x3b8] sm:%s920]
                  %964 = vst [vmem:[%s928 + $0x220] sm:%s920] %v963
                  %v965 = vld [vmem:[%s927 + $0x3f0] sm:%s920]
                  %966 = vst [vmem:[%s928 + $0x240] sm:%s920] %v965
                  %v967 = vld [vmem:[%s927 + $0x428] sm:%s920]
                  %968 = vst [vmem:[%s928 + $0x260] sm:%s920] %v967
                  %v969 = vld [vmem:[%s927 + $0x460] sm:%s920]
                  %970 = vst [vmem:[%s928 + $0x280] sm:%s920] %v969
                  %v971 = vld [vmem:[%s927 + $0x498] sm:%s920]
                  %972 = vst [vmem:[%s928 + $0x2a0] sm:%s920] %v971
                  %v973 = vld [vmem:[%s927 + $0x4d0] sm:%s920]
                  %974 = vst [vmem:[%s928 + $0x2c0] sm:%s920] %v973
                  %v975 = vld [vmem:[%s927 + $0x508] sm:%s920]
                  %976 = vst [vmem:[%s928 + $0x2e0] sm:%s920] %v975
                  %v977 = vld [vmem:[%s927 + $0x540] sm:%s920]
                  %978 = vst [vmem:[%s928 + $0x300] sm:%s920] %v977
                  %v979 = vld [vmem:[%s927 + $0x578] sm:%s920]
                  %980 = vst [vmem:[%s928 + $0x320] sm:%s920] %v979
                  %v981 = vld [vmem:[%s927 + $0x5b0] sm:%s920]
                  %982 = vst [vmem:[%s928 + $0x340] sm:%s920] %v981
                  %v983 = vld [vmem:[%s927 + $0x5e8] sm:%s920]
                  %984 = vst [vmem:[%s928 + $0x360] sm:%s920] %v983
                  %v985 = vld [vmem:[%s927 + $0x620] sm:%s920]
                  %986 = vst [vmem:[%s928 + $0x380] sm:%s920] %v985
                  %v987 = vld [vmem:[%s927 + $0x658] sm:%s920]
                  %988 = vst [vmem:[%s928 + $0x3a0] sm:%s920] %v987
                  %v989 = vld [vmem:[%s927 + $0x690] sm:%s920]
                  %990 = vst [vmem:[%s928 + $0x3c0] sm:%s920] %v989
                  %v991 = vld [vmem:[%s927 + $0x6c8] sm:%s920]
                  %992 = vst [vmem:[%s928 + $0x3e0] sm:%s920] %v991
                  %v993 = vld [vmem:[%s927 + $0x700] sm:%s920]
                  %994 = vst [vmem:[%s928 + $0x400] sm:%s920] %v993
                  %v995 = vld [vmem:[%s927 + $0x738] sm:%s920]
                  %996 = vst [vmem:[%s928 + $0x420] sm:%s920] %v995
                  %v997 = vld [vmem:[%s927 + $0x770] sm:%s920]
                  %998 = vst [vmem:[%s928 + $0x440] sm:%s920] %v997
                  %v999 = vld [vmem:[%s927 + $0x7a8] sm:%s920]
                  %1000 = vst [vmem:[%s928 + $0x460] sm:%s920] %v999
                  %v1001 = vld [vmem:[%s927 + $0x7e0] sm:%s920]
                  %1002 = vst [vmem:[%s928 + $0x480] sm:%s920] %v1001
                  %v1003 = vld [vmem:[%s927 + $0x818] sm:%s920]
                  %1004 = vst [vmem:[%s928 + $0x4a0] sm:%s920] %v1003
                  %v1005 = vld [vmem:[%s927 + $0x850] sm:%s920]
                  %1006 = vst [vmem:[%s928 + $0x4c0] sm:%s920] %v1005
                  %v1007 = vld [vmem:[%s927 + $0x888] sm:%s920]
                  %1008 = vst [vmem:[%s928 + $0x4e0] sm:%s920] %v1007
                  %v1009 = vld [vmem:[%s927 + $0x8c0] sm:%s920]
                  %1010 = vst [vmem:[%s928 + $0x500] sm:%s920] %v1009
                  %v1011 = vld [vmem:[%s927 + $0x8f8] sm:%s920]
                  %1012 = vst [vmem:[%s928 + $0x520] sm:%s920] %v1011
                  %v1013 = vld [vmem:[%s927 + $0x930] sm:%s920]
                  %1014 = vst [vmem:[%s928 + $0x540] sm:%s920] %v1013
                  %v1015 = vld [vmem:[%s927 + $0x968] sm:%s920]
                  %1016 = vst [vmem:[%s928 + $0x560] sm:%s920] %v1015
                $region88: #{tpu_custom_call.1} parent=68 // loop_footer
                  %s926 = sadd.s32 1, %s922
                $region89: #{tpu_custom_call.1} parent=68 // loop_footer_branch
                  %921 = sbr.rel target = $region85
                $region90: #{tpu_custom_call.1} parent=68 // loop_exit
                  _
              $region69: #{tpu_custom_call.1} parent=35 // pred_fallthru
                _
            $region36: #{tpu_custom_call.1} parent=31 // pred_fallthru
              _
            // Predicated region
            $region37: #{tpu_custom_call.1} parent=31 // pred_check
              %p185 = pneg %p181
            $region38: #{tpu_custom_call.1} parent=31 // pred_check_branch
              %187 = sbr.rel (%p185) target = $region40
            $region39: #{tpu_custom_call.1} parent=31 // pred_region
              %s188 = sshllo.u32 0, %s177
              loop: start=0, step=1, limit=1
              $region41: #{tpu_custom_call.1} parent=39 // loop_pre_header
                _
              $region42: #{tpu_custom_call.1} parent=39 // loop_header
                %s190 = sphi 0, %s194
                %p191 = scmp.ge.s32.totalorder %s190, 1
                %s195 = sphi %s176, %s176
                %s196 = sphi %s166, %s166
              $region43: #{tpu_custom_call.1} parent=39 // loop_header_branch
                %193 = sbr.rel (%p191) target = $region47
              $region44: #{tpu_custom_call.1} parent=39 // loop_body
                %v197 = vld [vmem:[%s195] sm:%s188]
                %198 = vst [vmem:[%s196] sm:%s188] %v197
                %v199 = vld [vmem:[%s195 + $0x38] sm:%s188]
                %200 = vst [vmem:[%s196 + $0x20] sm:%s188] %v199
                %v201 = vld [vmem:[%s195 + $0x70] sm:%s188]
                %202 = vst [vmem:[%s196 + $0x40] sm:%s188] %v201
                %v203 = vld [vmem:[%s195 + $0xa8] sm:%s188]
                %204 = vst [vmem:[%s196 + $0x60] sm:%s188] %v203
                %v205 = vld [vmem:[%s195 + $0xe0] sm:%s188]
                %206 = vst [vmem:[%s196 + $0x80] sm:%s188] %v205
                %v207 = vld [vmem:[%s195 + $0x118] sm:%s188]
                %208 = vst [vmem:[%s196 + $0xa0] sm:%s188] %v207
                %v209 = vld [vmem:[%s195 + $0x150] sm:%s188]
                %210 = vst [vmem:[%s196 + $0xc0] sm:%s188] %v209
                %v211 = vld [vmem:[%s195 + $0x188] sm:%s188]
                %212 = vst [vmem:[%s196 + $0xe0] sm:%s188] %v211
                %v213 = vld [vmem:[%s195 + $0x1c0] sm:%s188]
                %214 = vst [vmem:[%s196 + $0x100] sm:%s188] %v213
                %v215 = vld [vmem:[%s195 + $0x1f8] sm:%s188]
                %216 = vst [vmem:[%s196 + $0x120] sm:%s188] %v215
                %v217 = vld [vmem:[%s195 + $0x230] sm:%s188]
                %218 = vst [vmem:[%s196 + $0x140] sm:%s188] %v217
                %v219 = vld [vmem:[%s195 + $0x268] sm:%s188]
                %220 = vst [vmem:[%s196 + $0x160] sm:%s188] %v219
                %v221 = vld [vmem:[%s195 + $0x2a0] sm:%s188]
                %222 = vst [vmem:[%s196 + $0x180] sm:%s188] %v221
                %v223 = vld [vmem:[%s195 + $0x2d8] sm:%s188]
                %224 = vst [vmem:[%s196 + $0x1a0] sm:%s188] %v223
                %v225 = vld [vmem:[%s195 + $0x310] sm:%s188]
                %226 = vst [vmem:[%s196 + $0x1c0] sm:%s188] %v225
                %v227 = vld [vmem:[%s195 + $0x348] sm:%s188]
                %228 = vst [vmem:[%s196 + $0x1e0] sm:%s188] %v227
                %v229 = vld [vmem:[%s195 + $0x380] sm:%s188]
                %230 = vst [vmem:[%s196 + $0x200] sm:%s188] %v229
                %v231 = vld [vmem:[%s195 + $0x3b8] sm:%s188]
                %232 = vst [vmem:[%s196 + $0x220] sm:%s188] %v231
                %v233 = vld [vmem:[%s195 + $0x3f0] sm:%s188]
                %234 = vst [vmem:[%s196 + $0x240] sm:%s188] %v233
                %v235 = vld [vmem:[%s195 + $0x428] sm:%s188]
                %236 = vst [vmem:[%s196 + $0x260] sm:%s188] %v235
                %v237 = vld [vmem:[%s195 + $0x460] sm:%s188]
                %238 = vst [vmem:[%s196 + $0x280] sm:%s188] %v237
                %v239 = vld [vmem:[%s195 + $0x498] sm:%s188]
                %240 = vst [vmem:[%s196 + $0x2a0] sm:%s188] %v239
                %v241 = vld [vmem:[%s195 + $0x4d0] sm:%s188]
                %242 = vst [vmem:[%s196 + $0x2c0] sm:%s188] %v241
                %v243 = vld [vmem:[%s195 + $0x508] sm:%s188]
                %244 = vst [vmem:[%s196 + $0x2e0] sm:%s188] %v243
                %v245 = vld [vmem:[%s195 + $0x540] sm:%s188]
                %246 = vst [vmem:[%s196 + $0x300] sm:%s188] %v245
                %v247 = vld [vmem:[%s195 + $0x578] sm:%s188]
                %248 = vst [vmem:[%s196 + $0x320] sm:%s188] %v247
                %v249 = vld [vmem:[%s195 + $0x5b0] sm:%s188]
                %250 = vst [vmem:[%s196 + $0x340] sm:%s188] %v249
                %v251 = vld [vmem:[%s195 + $0x5e8] sm:%s188]
                %252 = vst [vmem:[%s196 + $0x360] sm:%s188] %v251
                %v253 = vld [vmem:[%s195 + $0x620] sm:%s188]
                %254 = vst [vmem:[%s196 + $0x380] sm:%s188] %v253
                %v255 = vld [vmem:[%s195 + $0x658] sm:%s188]
                %256 = vst [vmem:[%s196 + $0x3a0] sm:%s188] %v255
                %v257 = vld [vmem:[%s195 + $0x690] sm:%s188]
                %258 = vst [vmem:[%s196 + $0x3c0] sm:%s188] %v257
                %v259 = vld [vmem:[%s195 + $0x6c8] sm:%s188]
                %260 = vst [vmem:[%s196 + $0x3e0] sm:%s188] %v259
                %v261 = vld [vmem:[%s195 + $0x700] sm:%s188]
                %262 = vst [vmem:[%s196 + $0x400] sm:%s188] %v261
                %v263 = vld [vmem:[%s195 + $0x738] sm:%s188]
                %264 = vst [vmem:[%s196 + $0x420] sm:%s188] %v263
                %v265 = vld [vmem:[%s195 + $0x770] sm:%s188]
                %266 = vst [vmem:[%s196 + $0x440] sm:%s188] %v265
                %v267 = vld [vmem:[%s195 + $0x7a8] sm:%s188]
                %268 = vst [vmem:[%s196 + $0x460] sm:%s188] %v267
                %v269 = vld [vmem:[%s195 + $0x7e0] sm:%s188]
                %270 = vst [vmem:[%s196 + $0x480] sm:%s188] %v269
                %v271 = vld [vmem:[%s195 + $0x818] sm:%s188]
                %272 = vst [vmem:[%s196 + $0x4a0] sm:%s188] %v271
                %v273 = vld [vmem:[%s195 + $0x850] sm:%s188]
                %274 = vst [vmem:[%s196 + $0x4c0] sm:%s188] %v273
                %v275 = vld [vmem:[%s195 + $0x888] sm:%s188]
                %276 = vst [vmem:[%s196 + $0x4e0] sm:%s188] %v275
                %v277 = vld [vmem:[%s195 + $0x8c0] sm:%s188]
                %278 = vst [vmem:[%s196 + $0x500] sm:%s188] %v277
                %v279 = vld [vmem:[%s195 + $0x8f8] sm:%s188]
                %280 = vst [vmem:[%s196 + $0x520] sm:%s188] %v279
                %v281 = vld [vmem:[%s195 + $0x930] sm:%s188]
                %282 = vst [vmem:[%s196 + $0x540] sm:%s188] %v281
                %v283 = vld [vmem:[%s195 + $0x968] sm:%s188]
                %284 = vst [vmem:[%s196 + $0x560] sm:%s188] %v283
              $region45: #{tpu_custom_call.1} parent=39 // loop_footer
                %s194 = sadd.s32 1, %s190
              $region46: #{tpu_custom_call.1} parent=39 // loop_footer_branch
                %189 = sbr.rel target = $region42
              $region47: #{tpu_custom_call.1} parent=39 // loop_exit
                _
            $region40: #{tpu_custom_call.1} parent=31 // pred_fallthru
              _
          $region32: #{tpu_custom_call.1} parent=27 // pred_fallthru
            _
          %1017 = vnop
        $region28: #{tpu_custom_call.1} parent=23 // pred_fallthru
          _
      $region24: #{tpu_custom_call.1} parent=5 // pred_fallthru
        _
      %p1018 = scmp.le.s32.totalorder 1, %s11
      %p1019 = scmp.lt.s32.totalorder %s11, 3
      %p1020 = pnand %p1018, %p1019
      %p1021 = pneg %p1020
      // Predicated region
      $region91: #{tpu_custom_call.1} parent=5 // pred_check
        _
      $region92: #{tpu_custom_call.1} parent=5 // pred_check_branch
        %1023 = sbr.rel (%p1020) target = $region94
      $region93: #{tpu_custom_call.1} parent=5 // pred_region
        %s1024 = ssub.s32 %s11, 1
        %s1025 = sand.u32 %s38, 1
        %s1026 = sand.u32 %s38, 1
        %s1027 = smul.addr %s1026, 1408
        %s1028 = scalar_lea.vmem [#allocation4], %s1027
        // Predicated region
        $region95: #{tpu_custom_call.1} parent=93 // pred_check
          %p1029 = pneg %p51
        $region96: #{tpu_custom_call.1} parent=93 // pred_check_branch
          %1031 = sbr.rel (%p1029) target = $region98
        $region97: #{tpu_custom_call.1} parent=93 // pred_region
          _
        $region98: #{tpu_custom_call.1} parent=93 // pred_fallthru
          _
        %s1032 = sand.u32 %s38, 1
        %s1033 = sand.u32 %s38, 1
        %s1034 = smul.addr %s1033, 1408
        %s1035 = scalar_lea.vmem [#allocation4], %s1034
        %p1036 = pneg %p51
        %p1037 = pneg %p48
        %p1038 = pneg %p72
        %p1039 = pneg %p69
        %p1040 = pneg %p93
        %p1041 = pneg %p90
        %p1042 = pneg %p114
        %p1043 = pneg %p111
        %p1044 = pneg %p135
        %p1045 = pneg %p132
        %s1046 = smul.u32 4, %s21
        %s1047 = ssub.s32 7, %s1046
        %p1048 = scmp.lt.s32.totalorder %s1047, 4
        %s1049 = scalar_select %p1048, %s1047, 4
        %s1050 = smul.u32 5632, %s1049
        %p1051 = scmp.eq.s32.totalorder %s20, 0
        %p1052 = scmp.eq.s32.totalorder %s21, 0
        %p1053 = pnand %p1051, %p1052
        %p1054 = pneg %p1053
        // Predicated region
        $region99: #{tpu_custom_call.1} parent=93 // pred_check
          _
        $region100: #{tpu_custom_call.1} parent=93 // pred_check_branch
          %1056 = sbr.rel (%p1053) target = $region102
        $region101: #{tpu_custom_call.1} parent=93 // pred_region
          %vm1057 = vcmask 7168
          %1058 = vst.msk [vmem:[#allocation2] sm:$0xff] %vm1057, 0.0
          %1059 = vst.msk [vmem:[#allocation2 + $0x8] sm:$0xff] %vm1057, 0.0
          %1060 = vst.msk [vmem:[#allocation2 + $0x10] sm:$0xff] %vm1057, 0.0
          %1061 = vst.msk [vmem:[#allocation2 + $0x18] sm:$0xff] %vm1057, 0.0
          %1062 = vst.msk [vmem:[#allocation2 + $0x20] sm:$0xff] %vm1057, 0.0
          %1063 = vst.msk [vmem:[#allocation2 + $0x28] sm:$0xff] %vm1057, 0.0
          %1064 = vst.msk [vmem:[#allocation2 + $0x30] sm:$0xff] %vm1057, 0.0
          %1065 = vst.msk [vmem:[#allocation2 + $0x38] sm:$0xff] %vm1057, 0.0
          %1066 = vst.msk [vmem:[#allocation2 + $0x40] sm:$0xff] %vm1057, 0.0
          %1067 = vst.msk [vmem:[#allocation2 + $0x48] sm:$0xff] %vm1057, 0.0
          %1068 = vst.msk [vmem:[#allocation2 + $0x50] sm:$0xff] %vm1057, 0.0
          %1069 = vst.msk [vmem:[#allocation2 + $0x58] sm:$0xff] %vm1057, 0.0
          %1070 = vst.msk [vmem:[#allocation2 + $0x60] sm:$0xff] %vm1057, 0.0
          %1071 = vst.msk [vmem:[#allocation2 + $0x68] sm:$0xff] %vm1057, 0.0
          %1072 = vst.msk [vmem:[#allocation2 + $0x70] sm:$0xff] %vm1057, 0.0
          %1073 = vst.msk [vmem:[#allocation2 + $0x78] sm:$0xff] %vm1057, 0.0
          %1074 = vst.msk [vmem:[#allocation2 + $0x80] sm:$0xff] %vm1057, 0.0
          %1075 = vst.msk [vmem:[#allocation2 + $0x88] sm:$0xff] %vm1057, 0.0
          %1076 = vst.msk [vmem:[#allocation2 + $0x90] sm:$0xff] %vm1057, 0.0
          %1077 = vst.msk [vmem:[#allocation2 + $0x98] sm:$0xff] %vm1057, 0.0
          %1078 = vst.msk [vmem:[#allocation2 + $0xa0] sm:$0xff] %vm1057, 0.0
          %1079 = vst.msk [vmem:[#allocation2 + $0xa8] sm:$0xff] %vm1057, 0.0
          %1080 = vst.msk [vmem:[#allocation2 + $0xb0] sm:$0xff] %vm1057, 0.0
          %1081 = vst.msk [vmem:[#allocation2 + $0xb8] sm:$0xff] %vm1057, 0.0
          %1082 = vst.msk [vmem:[#allocation2 + $0xc0] sm:$0xff] %vm1057, 0.0
          %1083 = vst.msk [vmem:[#allocation2 + $0xc8] sm:$0xff] %vm1057, 0.0
          %1084 = vst.msk [vmem:[#allocation2 + $0xd0] sm:$0xff] %vm1057, 0.0
          %1085 = vst.msk [vmem:[#allocation2 + $0xd8] sm:$0xff] %vm1057, 0.0
          %1086 = vst.msk [vmem:[#allocation2 + $0xe0] sm:$0xff] %vm1057, 0.0
          %1087 = vst.msk [vmem:[#allocation2 + $0xe8] sm:$0xff] %vm1057, 0.0
          %1088 = vst.msk [vmem:[#allocation2 + $0xf0] sm:$0xff] %vm1057, 0.0
          %1089 = vst.msk [vmem:[#allocation2 + $0xf8] sm:$0xff] %vm1057, 0.0
          %1090 = vst.msk [vmem:[#allocation2 + $0x100] sm:$0xff] %vm1057, 0.0
          %1091 = vst.msk [vmem:[#allocation2 + $0x108] sm:$0xff] %vm1057, 0.0
          %1092 = vst.msk [vmem:[#allocation2 + $0x110] sm:$0xff] %vm1057, 0.0
          %1093 = vst.msk [vmem:[#allocation2 + $0x118] sm:$0xff] %vm1057, 0.0
          %1094 = vst.msk [vmem:[#allocation2 + $0x120] sm:$0xff] %vm1057, 0.0
          %1095 = vst.msk [vmem:[#allocation2 + $0x128] sm:$0xff] %vm1057, 0.0
          %1096 = vst.msk [vmem:[#allocation2 + $0x130] sm:$0xff] %vm1057, 0.0
          %1097 = vst.msk [vmem:[#allocation2 + $0x138] sm:$0xff] %vm1057, 0.0
          %1098 = vst.msk [vmem:[#allocation2 + $0x140] sm:$0xff] %vm1057, 0.0
          %1099 = vst.msk [vmem:[#allocation2 + $0x148] sm:$0xff] %vm1057, 0.0
          %1100 = vst.msk [vmem:[#allocation2 + $0x150] sm:$0xff] %vm1057, 0.0
          %1101 = vst.msk [vmem:[#allocation2 + $0x158] sm:$0xff] %vm1057, 0.0
          %1102 = vst.msk [vmem:[#allocation3] sm:$0xff] %vm1057, 0.0
          %1103 = vst.msk [vmem:[#allocation3 + $0x8] sm:$0xff] %vm1057, 0.0
          %1104 = vst.msk [vmem:[#allocation3 + $0x10] sm:$0xff] %vm1057, 0.0
          %1105 = vst.msk [vmem:[#allocation3 + $0x18] sm:$0xff] %vm1057, 0.0
          %1106 = vst.msk [vmem:[#allocation3 + $0x20] sm:$0xff] %vm1057, 0.0
          %1107 = vst.msk [vmem:[#allocation3 + $0x28] sm:$0xff] %vm1057, 0.0
          %1108 = vst.msk [vmem:[#allocation3 + $0x30] sm:$0xff] %vm1057, 0.0
          %1109 = vst.msk [vmem:[#allocation3 + $0x38] sm:$0xff] %vm1057, 0.0
          %1110 = vst.msk [vmem:[#allocation3 + $0x40] sm:$0xff] %vm1057, 0.0
          %1111 = vst.msk [vmem:[#allocation3 + $0x48] sm:$0xff] %vm1057, 0.0
          %1112 = vst.msk [vmem:[#allocation3 + $0x50] sm:$0xff] %vm1057, 0.0
          %1113 = vst.msk [vmem:[#allocation3 + $0x58] sm:$0xff] %vm1057, 0.0
          %1114 = vst.msk [vmem:[#allocation3 + $0x60] sm:$0xff] %vm1057, 0.0
          %1115 = vst.msk [vmem:[#allocation3 + $0x68] sm:$0xff] %vm1057, 0.0
          %1116 = vst.msk [vmem:[#allocation3 + $0x70] sm:$0xff] %vm1057, 0.0
          %1117 = vst.msk [vmem:[#allocation3 + $0x78] sm:$0xff] %vm1057, 0.0
          %1118 = vst.msk [vmem:[#allocation3 + $0x80] sm:$0xff] %vm1057, 0.0
          %1119 = vst.msk [vmem:[#allocation3 + $0x88] sm:$0xff] %vm1057, 0.0
          %1120 = vst.msk [vmem:[#allocation3 + $0x90] sm:$0xff] %vm1057, 0.0
          %1121 = vst.msk [vmem:[#allocation3 + $0x98] sm:$0xff] %vm1057, 0.0
          %1122 = vst.msk [vmem:[#allocation3 + $0xa0] sm:$0xff] %vm1057, 0.0
          %1123 = vst.msk [vmem:[#allocation3 + $0xa8] sm:$0xff] %vm1057, 0.0
          %1124 = vst.msk [vmem:[#allocation3 + $0xb0] sm:$0xff] %vm1057, 0.0
          %1125 = vst.msk [vmem:[#allocation3 + $0xb8] sm:$0xff] %vm1057, 0.0
          %1126 = vst.msk [vmem:[#allocation3 + $0xc0] sm:$0xff] %vm1057, 0.0
          %1127 = vst.msk [vmem:[#allocation3 + $0xc8] sm:$0xff] %vm1057, 0.0
          %1128 = vst.msk [vmem:[#allocation3 + $0xd0] sm:$0xff] %vm1057, 0.0
          %1129 = vst.msk [vmem:[#allocation3 + $0xd8] sm:$0xff] %vm1057, 0.0
          %1130 = vst.msk [vmem:[#allocation3 + $0xe0] sm:$0xff] %vm1057, 0.0
          %1131 = vst.msk [vmem:[#allocation3 + $0xe8] sm:$0xff] %vm1057, 0.0
          %1132 = vst.msk [vmem:[#allocation3 + $0xf0] sm:$0xff] %vm1057, 0.0
          %1133 = vst.msk [vmem:[#allocation3 + $0xf8] sm:$0xff] %vm1057, 0.0
          %1134 = vst.msk [vmem:[#allocation3 + $0x100] sm:$0xff] %vm1057, 0.0
          %1135 = vst.msk [vmem:[#allocation3 + $0x108] sm:$0xff] %vm1057, 0.0
          %1136 = vst.msk [vmem:[#allocation3 + $0x110] sm:$0xff] %vm1057, 0.0
          %1137 = vst.msk [vmem:[#allocation3 + $0x118] sm:$0xff] %vm1057, 0.0
          %1138 = vst.msk [vmem:[#allocation3 + $0x120] sm:$0xff] %vm1057, 0.0
          %1139 = vst.msk [vmem:[#allocation3 + $0x128] sm:$0xff] %vm1057, 0.0
          %1140 = vst.msk [vmem:[#allocation3 + $0x130] sm:$0xff] %vm1057, 0.0
          %1141 = vst.msk [vmem:[#allocation3 + $0x138] sm:$0xff] %vm1057, 0.0
          %1142 = vst.msk [vmem:[#allocation3 + $0x140] sm:$0xff] %vm1057, 0.0
          %1143 = vst.msk [vmem:[#allocation3 + $0x148] sm:$0xff] %vm1057, 0.0
          %1144 = vst.msk [vmem:[#allocation3 + $0x150] sm:$0xff] %vm1057, 0.0
          %1145 = vst.msk [vmem:[#allocation3 + $0x158] sm:$0xff] %vm1057, 0.0
        $region102: #{tpu_custom_call.1} parent=93 // pred_fallthru
          _
        %v1146 = vld [vmem:[%s1028] sm:$0xff]
        %v1147 = vld [vmem:[%s1028 + $0x8] sm:$0xff]
        %v1148 = vld [vmem:[%s1028 + $0x10] sm:$0xff]
        %v1149 = vld [vmem:[%s1028 + $0x18] sm:$0xff]
        %v1150 = vld [vmem:[%s1028 + $0x20] sm:$0xff]
        %v1151 = vld [vmem:[%s1028 + $0x28] sm:$0xff]
        %v1152 = vld [vmem:[%s1028 + $0x30] sm:$0xff]
        %v1153 = vld [vmem:[%s1028 + $0x38] sm:$0xff]
        %v1154 = vld [vmem:[%s1028 + $0x40] sm:$0xff]
        %v1155 = vld [vmem:[%s1028 + $0x48] sm:$0xff]
        %v1156 = vld [vmem:[%s1028 + $0x50] sm:$0xff]
        %v1157 = vld [vmem:[%s1028 + $0x58] sm:$0xff]
        %v1158 = vld [vmem:[%s1028 + $0x60] sm:$0xff]
        %v1159 = vld [vmem:[%s1028 + $0x68] sm:$0xff]
        %v1160 = vld [vmem:[%s1028 + $0x70] sm:$0xff]
        %v1161 = vld [vmem:[%s1028 + $0x78] sm:$0xff]
        %v1162 = vld [vmem:[%s1028 + $0x80] sm:$0xff]
        %v1163 = vld [vmem:[%s1028 + $0x88] sm:$0xff]
        %v1164 = vld [vmem:[%s1028 + $0x90] sm:$0xff]
        %v1165 = vld [vmem:[%s1028 + $0x98] sm:$0xff]
        %v1166 = vld [vmem:[%s1028 + $0xa0] sm:$0xff]
        %v1167 = vld [vmem:[%s1028 + $0xa8] sm:$0xff]
        %v1168 = vld [vmem:[%s1028 + $0xb0] sm:$0xff]
        %v1169 = vld [vmem:[%s1028 + $0xb8] sm:$0xff]
        %v1170 = vld [vmem:[%s1028 + $0xc0] sm:$0xff]
        %v1171 = vld [vmem:[%s1028 + $0xc8] sm:$0xff]
        %v1172 = vld [vmem:[%s1028 + $0xd0] sm:$0xff]
        %v1173 = vld [vmem:[%s1028 + $0xd8] sm:$0xff]
        %v1174 = vld [vmem:[%s1028 + $0xe0] sm:$0xff]
        %v1175 = vld [vmem:[%s1028 + $0xe8] sm:$0xff]
        %v1176 = vld [vmem:[%s1028 + $0xf0] sm:$0xff]
        %v1177 = vld [vmem:[%s1028 + $0xf8] sm:$0xff]
        %v1178 = vld [vmem:[%s1028 + $0x100] sm:$0xff]
        %v1179 = vld [vmem:[%s1028 + $0x108] sm:$0xff]
        %v1180 = vld [vmem:[%s1028 + $0x110] sm:$0xff]
        %v1181 = vld [vmem:[%s1028 + $0x118] sm:$0xff]
        %v1182 = vld [vmem:[%s1028 + $0x120] sm:$0xff]
        %v1183 = vld [vmem:[%s1028 + $0x128] sm:$0xff]
        %v1184 = vld [vmem:[%s1028 + $0x130] sm:$0xff]
        %v1185 = vld [vmem:[%s1028 + $0x138] sm:$0xff]
        %v1186 = vld [vmem:[%s1028 + $0x140] sm:$0xff]
        %v1187 = vld [vmem:[%s1028 + $0x148] sm:$0xff]
        %v1188 = vld [vmem:[%s1028 + $0x150] sm:$0xff]
        %v1189 = vld [vmem:[%s1028 + $0x158] sm:$0xff]
        %v1190 = vld [vmem:[%s1028 + $0x160] sm:$0xff]
        %v1191 = vld [vmem:[%s1028 + $0x168] sm:$0xff]
        %v1192 = vld [vmem:[%s1028 + $0x170] sm:$0xff]
        %v1193 = vld [vmem:[%s1028 + $0x178] sm:$0xff]
        %v1194 = vld [vmem:[%s1028 + $0x180] sm:$0xff]
        %v1195 = vld [vmem:[%s1028 + $0x188] sm:$0xff]
        %v1196 = vld [vmem:[%s1028 + $0x190] sm:$0xff]
        %v1197 = vld [vmem:[%s1028 + $0x198] sm:$0xff]
        %v1198 = vld [vmem:[%s1028 + $0x1a0] sm:$0xff]
        %v1199 = vld [vmem:[%s1028 + $0x1a8] sm:$0xff]
        %v1200 = vld [vmem:[%s1028 + $0x1b0] sm:$0xff]
        %v1201 = vld [vmem:[%s1028 + $0x1b8] sm:$0xff]
        %v1202 = vld [vmem:[%s1028 + $0x1c0] sm:$0xff]
        %v1203 = vld [vmem:[%s1028 + $0x1c8] sm:$0xff]
        %v1204 = vld [vmem:[%s1028 + $0x1d0] sm:$0xff]
        %v1205 = vld [vmem:[%s1028 + $0x1d8] sm:$0xff]
        %v1206 = vld [vmem:[%s1028 + $0x1e0] sm:$0xff]
        %v1207 = vld [vmem:[%s1028 + $0x1e8] sm:$0xff]
        %v1208 = vld [vmem:[%s1028 + $0x1f0] sm:$0xff]
        %v1209 = vld [vmem:[%s1028 + $0x1f8] sm:$0xff]
        %v1210 = vld [vmem:[%s1028 + $0x200] sm:$0xff]
        %v1211 = vld [vmem:[%s1028 + $0x208] sm:$0xff]
        %v1212 = vld [vmem:[%s1028 + $0x210] sm:$0xff]
        %v1213 = vld [vmem:[%s1028 + $0x218] sm:$0xff]
        %v1214 = vld [vmem:[%s1028 + $0x220] sm:$0xff]
        %v1215 = vld [vmem:[%s1028 + $0x228] sm:$0xff]
        %v1216 = vld [vmem:[%s1028 + $0x230] sm:$0xff]
        %v1217 = vld [vmem:[%s1028 + $0x238] sm:$0xff]
        %v1218 = vld [vmem:[%s1028 + $0x240] sm:$0xff]
        %v1219 = vld [vmem:[%s1028 + $0x248] sm:$0xff]
        %v1220 = vld [vmem:[%s1028 + $0x250] sm:$0xff]
        %v1221 = vld [vmem:[%s1028 + $0x258] sm:$0xff]
        %v1222 = vld [vmem:[%s1028 + $0x260] sm:$0xff]
        %v1223 = vld [vmem:[%s1028 + $0x268] sm:$0xff]
        %v1224 = vld [vmem:[%s1028 + $0x270] sm:$0xff]
        %v1225 = vld [vmem:[%s1028 + $0x278] sm:$0xff]
        %v1226 = vld [vmem:[%s1028 + $0x280] sm:$0xff]
        %v1227 = vld [vmem:[%s1028 + $0x288] sm:$0xff]
        %v1228 = vld [vmem:[%s1028 + $0x290] sm:$0xff]
        %v1229 = vld [vmem:[%s1028 + $0x298] sm:$0xff]
        %v1230 = vld [vmem:[%s1028 + $0x2a0] sm:$0xff]
        %v1231 = vld [vmem:[%s1028 + $0x2a8] sm:$0xff]
        %v1232 = vld [vmem:[%s1028 + $0x2b0] sm:$0xff]
        %v1233 = vld [vmem:[%s1028 + $0x2b8] sm:$0xff]
        %v1234 = vld [vmem:[%s1028 + $0x2c0] sm:$0xff]
        %v1235 = vld [vmem:[%s1028 + $0x2c8] sm:$0xff]
        %v1236 = vld [vmem:[%s1028 + $0x2d0] sm:$0xff]
        %v1237 = vld [vmem:[%s1028 + $0x2d8] sm:$0xff]
        %v1238 = vld [vmem:[%s1028 + $0x2e0] sm:$0xff]
        %v1239 = vld [vmem:[%s1028 + $0x2e8] sm:$0xff]
        %v1240 = vld [vmem:[%s1028 + $0x2f0] sm:$0xff]
        %v1241 = vld [vmem:[%s1028 + $0x2f8] sm:$0xff]
        %v1242 = vld [vmem:[%s1028 + $0x300] sm:$0xff]
        %v1243 = vld [vmem:[%s1028 + $0x308] sm:$0xff]
        %v1244 = vld [vmem:[%s1028 + $0x310] sm:$0xff]
        %v1245 = vld [vmem:[%s1028 + $0x318] sm:$0xff]
        %v1246 = vld [vmem:[%s1028 + $0x320] sm:$0xff]
        %v1247 = vld [vmem:[%s1028 + $0x328] sm:$0xff]
        %v1248 = vld [vmem:[%s1028 + $0x330] sm:$0xff]
        %v1249 = vld [vmem:[%s1028 + $0x338] sm:$0xff]
        %v1250 = vld [vmem:[%s1028 + $0x340] sm:$0xff]
        %v1251 = vld [vmem:[%s1028 + $0x348] sm:$0xff]
        %v1252 = vld [vmem:[%s1028 + $0x350] sm:$0xff]
        %v1253 = vld [vmem:[%s1028 + $0x358] sm:$0xff]
        %v1254 = vld [vmem:[%s1028 + $0x360] sm:$0xff]
        %v1255 = vld [vmem:[%s1028 + $0x368] sm:$0xff]
        %v1256 = vld [vmem:[%s1028 + $0x370] sm:$0xff]
        %v1257 = vld [vmem:[%s1028 + $0x378] sm:$0xff]
        %v1258 = vld [vmem:[%s1028 + $0x380] sm:$0xff]
        %v1259 = vld [vmem:[%s1028 + $0x388] sm:$0xff]
        %v1260 = vld [vmem:[%s1028 + $0x390] sm:$0xff]
        %v1261 = vld [vmem:[%s1028 + $0x398] sm:$0xff]
        %v1262 = vld [vmem:[%s1028 + $0x3a0] sm:$0xff]
        %v1263 = vld [vmem:[%s1028 + $0x3a8] sm:$0xff]
        %v1264 = vld [vmem:[%s1028 + $0x3b0] sm:$0xff]
        %v1265 = vld [vmem:[%s1028 + $0x3b8] sm:$0xff]
        %v1266 = vld [vmem:[%s1028 + $0x3c0] sm:$0xff]
        %v1267 = vld [vmem:[%s1028 + $0x3c8] sm:$0xff]
        %v1268 = vld [vmem:[%s1028 + $0x3d0] sm:$0xff]
        %v1269 = vld [vmem:[%s1028 + $0x3d8] sm:$0xff]
        %v1270 = vld [vmem:[%s1028 + $0x3e0] sm:$0xff]
        %v1271 = vld [vmem:[%s1028 + $0x3e8] sm:$0xff]
        %v1272 = vld [vmem:[%s1028 + $0x3f0] sm:$0xff]
        %v1273 = vld [vmem:[%s1028 + $0x3f8] sm:$0xff]
        %v1274 = vld [vmem:[%s1028 + $0x400] sm:$0xff]
        %v1275 = vld [vmem:[%s1028 + $0x408] sm:$0xff]
        %v1276 = vld [vmem:[%s1028 + $0x410] sm:$0xff]
        %v1277 = vld [vmem:[%s1028 + $0x418] sm:$0xff]
        %v1278 = vld [vmem:[%s1028 + $0x420] sm:$0xff]
        %v1279 = vld [vmem:[%s1028 + $0x428] sm:$0xff]
        %v1280 = vld [vmem:[%s1028 + $0x430] sm:$0xff]
        %v1281 = vld [vmem:[%s1028 + $0x438] sm:$0xff]
        %v1282 = vld [vmem:[%s1028 + $0x440] sm:$0xff]
        %v1283 = vld [vmem:[%s1028 + $0x448] sm:$0xff]
        %v1284 = vld [vmem:[%s1028 + $0x450] sm:$0xff]
        %v1285 = vld [vmem:[%s1028 + $0x458] sm:$0xff]
        %v1286 = vld [vmem:[%s1028 + $0x460] sm:$0xff]
        %v1287 = vld [vmem:[%s1028 + $0x468] sm:$0xff]
        %v1288 = vld [vmem:[%s1028 + $0x470] sm:$0xff]
        %v1289 = vld [vmem:[%s1028 + $0x478] sm:$0xff]
        %v1290 = vld [vmem:[%s1028 + $0x480] sm:$0xff]
        %v1291 = vld [vmem:[%s1028 + $0x488] sm:$0xff]
        %v1292 = vld [vmem:[%s1028 + $0x490] sm:$0xff]
        %v1293 = vld [vmem:[%s1028 + $0x498] sm:$0xff]
        %v1294 = vld [vmem:[%s1028 + $0x4a0] sm:$0xff]
        %v1295 = vld [vmem:[%s1028 + $0x4a8] sm:$0xff]
        %v1296 = vld [vmem:[%s1028 + $0x4b0] sm:$0xff]
        %v1297 = vld [vmem:[%s1028 + $0x4b8] sm:$0xff]
        %v1298 = vld [vmem:[%s1028 + $0x4c0] sm:$0xff]
        %v1299 = vld [vmem:[%s1028 + $0x4c8] sm:$0xff]
        %v1300 = vld [vmem:[%s1028 + $0x4d0] sm:$0xff]
        %v1301 = vld [vmem:[%s1028 + $0x4d8] sm:$0xff]
        %v1302 = vld [vmem:[%s1028 + $0x4e0] sm:$0xff]
        %v1303 = vld [vmem:[%s1028 + $0x4e8] sm:$0xff]
        %v1304 = vld [vmem:[%s1028 + $0x4f0] sm:$0xff]
        %v1305 = vld [vmem:[%s1028 + $0x4f8] sm:$0xff]
        %v1306 = vld [vmem:[%s1028 + $0x500] sm:$0xff]
        %v1307 = vld [vmem:[%s1028 + $0x508] sm:$0xff]
        %v1308 = vld [vmem:[%s1028 + $0x510] sm:$0xff]
        %v1309 = vld [vmem:[%s1028 + $0x518] sm:$0xff]
        %v1310 = vld [vmem:[%s1028 + $0x520] sm:$0xff]
        %v1311 = vld [vmem:[%s1028 + $0x528] sm:$0xff]
        %v1312 = vld [vmem:[%s1028 + $0x530] sm:$0xff]
        %v1313 = vld [vmem:[%s1028 + $0x538] sm:$0xff]
        %v1314 = vld [vmem:[%s1028 + $0x540] sm:$0xff]
        %v1315 = vld [vmem:[%s1028 + $0x548] sm:$0xff]
        %v1316 = vld [vmem:[%s1028 + $0x550] sm:$0xff]
        %v1317 = vld [vmem:[%s1028 + $0x558] sm:$0xff]
        %v1318 = vld [vmem:[%s1028 + $0x560] sm:$0xff]
        %v1319 = vld [vmem:[%s1028 + $0x568] sm:$0xff]
        %v1320 = vld [vmem:[%s1028 + $0x570] sm:$0xff]
        %v1321 = vld [vmem:[%s1028 + $0x578] sm:$0xff]
        %s1322 = smul.u32 %s21, 512
        %v1323 = vlaneseq
        %v1324 = vand.u32 %v1323, 127
        %v1325 = vadd.s32 %v1324, 128
        %v1326 = vadd.s32 %v1324, 256
        %v1327 = vadd.s32 %v1324, 384
        %v1328 = vstv %s1322
        %v1329 = vadd.s32 %v1328, %v1324
        %v1330 = vadd.s32 %v1328, %v1325
        %v1331 = vadd.s32 %v1328, %v1326
        %v1332 = vadd.s32 %v1328, %v1327
        %vm1333 = vcmp.lt.s32.totalorder %v1329, 784
        %vm1334 = vcmp.lt.s32.totalorder %v1330, 784
        %vm1335 = vcmp.lt.s32.totalorder %v1331, 784
        %vm1336 = vcmp.lt.s32.totalorder %v1332, 784
        %v1337 = vsel %vm1333, %v1146, 0.0
        %v1338 = vsel %vm1334, %v1147, 0.0
        %v1339 = vsel %vm1335, %v1148, 0.0
        %v1340 = vsel %vm1336, %v1149, 0.0
        %v1341 = vsel %vm1333, %v1150, 0.0
        %v1342 = vsel %vm1334, %v1151, 0.0
        %v1343 = vsel %vm1335, %v1152, 0.0
        %v1344 = vsel %vm1336, %v1153, 0.0
        %v1345 = vsel %vm1333, %v1154, 0.0
        %v1346 = vsel %vm1334, %v1155, 0.0
        %v1347 = vsel %vm1335, %v1156, 0.0
        %v1348 = vsel %vm1336, %v1157, 0.0
        %v1349 = vsel %vm1333, %v1158, 0.0
        %v1350 = vsel %vm1334, %v1159, 0.0
        %v1351 = vsel %vm1335, %v1160, 0.0
        %v1352 = vsel %vm1336, %v1161, 0.0
        %v1353 = vsel %vm1333, %v1162, 0.0
        %v1354 = vsel %vm1334, %v1163, 0.0
        %v1355 = vsel %vm1335, %v1164, 0.0
        %v1356 = vsel %vm1336, %v1165, 0.0
        %v1357 = vsel %vm1333, %v1166, 0.0
        %v1358 = vsel %vm1334, %v1167, 0.0
        %v1359 = vsel %vm1335, %v1168, 0.0
        %v1360 = vsel %vm1336, %v1169, 0.0
        %v1361 = vsel %vm1333, %v1170, 0.0
        %v1362 = vsel %vm1334, %v1171, 0.0
        %v1363 = vsel %vm1335, %v1172, 0.0
        %v1364 = vsel %vm1336, %v1173, 0.0
        %v1365 = vsel %vm1333, %v1174, 0.0
        %v1366 = vsel %vm1334, %v1175, 0.0
        %v1367 = vsel %vm1335, %v1176, 0.0
        %v1368 = vsel %vm1336, %v1177, 0.0
        %v1369 = vsel %vm1333, %v1178, 0.0
        %v1370 = vsel %vm1334, %v1179, 0.0
        %v1371 = vsel %vm1335, %v1180, 0.0
        %v1372 = vsel %vm1336, %v1181, 0.0
        %v1373 = vsel %vm1333, %v1182, 0.0
        %v1374 = vsel %vm1334, %v1183, 0.0
        %v1375 = vsel %vm1335, %v1184, 0.0
        %v1376 = vsel %vm1336, %v1185, 0.0
        %v1377 = vsel %vm1333, %v1186, 0.0
        %v1378 = vsel %vm1334, %v1187, 0.0
        %v1379 = vsel %vm1335, %v1188, 0.0
        %v1380 = vsel %vm1336, %v1189, 0.0
        %v1381 = vsel %vm1333, %v1190, 0.0
        %v1382 = vsel %vm1334, %v1191, 0.0
        %v1383 = vsel %vm1335, %v1192, 0.0
        %v1384 = vsel %vm1336, %v1193, 0.0
        %v1385 = vsel %vm1333, %v1194, 0.0
        %v1386 = vsel %vm1334, %v1195, 0.0
        %v1387 = vsel %vm1335, %v1196, 0.0
        %v1388 = vsel %vm1336, %v1197, 0.0
        %v1389 = vsel %vm1333, %v1198, 0.0
        %v1390 = vsel %vm1334, %v1199, 0.0
        %v1391 = vsel %vm1335, %v1200, 0.0
        %v1392 = vsel %vm1336, %v1201, 0.0
        %v1393 = vsel %vm1333, %v1202, 0.0
        %v1394 = vsel %vm1334, %v1203, 0.0
        %v1395 = vsel %vm1335, %v1204, 0.0
        %v1396 = vsel %vm1336, %v1205, 0.0
        %v1397 = vsel %vm1333, %v1206, 0.0
        %v1398 = vsel %vm1334, %v1207, 0.0
        %v1399 = vsel %vm1335, %v1208, 0.0
        %v1400 = vsel %vm1336, %v1209, 0.0
        %v1401 = vsel %vm1333, %v1210, 0.0
        %v1402 = vsel %vm1334, %v1211, 0.0
        %v1403 = vsel %vm1335, %v1212, 0.0
        %v1404 = vsel %vm1336, %v1213, 0.0
        %v1405 = vsel %vm1333, %v1214, 0.0
        %v1406 = vsel %vm1334, %v1215, 0.0
        %v1407 = vsel %vm1335, %v1216, 0.0
        %v1408 = vsel %vm1336, %v1217, 0.0
        %v1409 = vsel %vm1333, %v1218, 0.0
        %v1410 = vsel %vm1334, %v1219, 0.0
        %v1411 = vsel %vm1335, %v1220, 0.0
        %v1412 = vsel %vm1336, %v1221, 0.0
        %v1413 = vsel %vm1333, %v1222, 0.0
        %v1414 = vsel %vm1334, %v1223, 0.0
        %v1415 = vsel %vm1335, %v1224, 0.0
        %v1416 = vsel %vm1336, %v1225, 0.0
        %v1417 = vsel %vm1333, %v1226, 0.0
        %v1418 = vsel %vm1334, %v1227, 0.0
        %v1419 = vsel %vm1335, %v1228, 0.0
        %v1420 = vsel %vm1336, %v1229, 0.0
        %v1421 = vsel %vm1333, %v1230, 0.0
        %v1422 = vsel %vm1334, %v1231, 0.0
        %v1423 = vsel %vm1335, %v1232, 0.0
        %v1424 = vsel %vm1336, %v1233, 0.0
        %v1425 = vsel %vm1333, %v1234, 0.0
        %v1426 = vsel %vm1334, %v1235, 0.0
        %v1427 = vsel %vm1335, %v1236, 0.0
        %v1428 = vsel %vm1336, %v1237, 0.0
        %v1429 = vsel %vm1333, %v1238, 0.0
        %v1430 = vsel %vm1334, %v1239, 0.0
        %v1431 = vsel %vm1335, %v1240, 0.0
        %v1432 = vsel %vm1336, %v1241, 0.0
        %v1433 = vsel %vm1333, %v1242, 0.0
        %v1434 = vsel %vm1334, %v1243, 0.0
        %v1435 = vsel %vm1335, %v1244, 0.0
        %v1436 = vsel %vm1336, %v1245, 0.0
        %v1437 = vsel %vm1333, %v1246, 0.0
        %v1438 = vsel %vm1334, %v1247, 0.0
        %v1439 = vsel %vm1335, %v1248, 0.0
        %v1440 = vsel %vm1336, %v1249, 0.0
        %v1441 = vsel %vm1333, %v1250, 0.0
        %v1442 = vsel %vm1334, %v1251, 0.0
        %v1443 = vsel %vm1335, %v1252, 0.0
        %v1444 = vsel %vm1336, %v1253, 0.0
        %v1445 = vsel %vm1333, %v1254, 0.0
        %v1446 = vsel %vm1334, %v1255, 0.0
        %v1447 = vsel %vm1335, %v1256, 0.0
        %v1448 = vsel %vm1336, %v1257, 0.0
        %v1449 = vsel %vm1333, %v1258, 0.0
        %v1450 = vsel %vm1334, %v1259, 0.0
        %v1451 = vsel %vm1335, %v1260, 0.0
        %v1452 = vsel %vm1336, %v1261, 0.0
        %v1453 = vsel %vm1333, %v1262, 0.0
        %v1454 = vsel %vm1334, %v1263, 0.0
        %v1455 = vsel %vm1335, %v1264, 0.0
        %v1456 = vsel %vm1336, %v1265, 0.0
        %v1457 = vsel %vm1333, %v1266, 0.0
        %v1458 = vsel %vm1334, %v1267, 0.0
        %v1459 = vsel %vm1335, %v1268, 0.0
        %v1460 = vsel %vm1336, %v1269, 0.0
        %v1461 = vsel %vm1333, %v1270, 0.0
        %v1462 = vsel %vm1334, %v1271, 0.0
        %v1463 = vsel %vm1335, %v1272, 0.0
        %v1464 = vsel %vm1336, %v1273, 0.0
        %v1465 = vsel %vm1333, %v1274, 0.0
        %v1466 = vsel %vm1334, %v1275, 0.0
        %v1467 = vsel %vm1335, %v1276, 0.0
        %v1468 = vsel %vm1336, %v1277, 0.0
        %v1469 = vsel %vm1333, %v1278, 0.0
        %v1470 = vsel %vm1334, %v1279, 0.0
        %v1471 = vsel %vm1335, %v1280, 0.0
        %v1472 = vsel %vm1336, %v1281, 0.0
        %v1473 = vsel %vm1333, %v1282, 0.0
        %v1474 = vsel %vm1334, %v1283, 0.0
        %v1475 = vsel %vm1335, %v1284, 0.0
        %v1476 = vsel %vm1336, %v1285, 0.0
        %v1477 = vsel %vm1333, %v1286, 0.0
        %v1478 = vsel %vm1334, %v1287, 0.0
        %v1479 = vsel %vm1335, %v1288, 0.0
        %v1480 = vsel %vm1336, %v1289, 0.0
        %v1481 = vsel %vm1333, %v1290, 0.0
        %v1482 = vsel %vm1334, %v1291, 0.0
        %v1483 = vsel %vm1335, %v1292, 0.0
        %v1484 = vsel %vm1336, %v1293, 0.0
        %v1485 = vsel %vm1333, %v1294, 0.0
        %v1486 = vsel %vm1334, %v1295, 0.0
        %v1487 = vsel %vm1335, %v1296, 0.0
        %v1488 = vsel %vm1336, %v1297, 0.0
        %v1489 = vsel %vm1333, %v1298, 0.0
        %v1490 = vsel %vm1334, %v1299, 0.0
        %v1491 = vsel %vm1335, %v1300, 0.0
        %v1492 = vsel %vm1336, %v1301, 0.0
        %v1493 = vsel %vm1333, %v1302, 0.0
        %v1494 = vsel %vm1334, %v1303, 0.0
        %v1495 = vsel %vm1335, %v1304, 0.0
        %v1496 = vsel %vm1336, %v1305, 0.0
        %v1497 = vsel %vm1333, %v1306, 0.0
        %v1498 = vsel %vm1334, %v1307, 0.0
        %v1499 = vsel %vm1335, %v1308, 0.0
        %v1500 = vsel %vm1336, %v1309, 0.0
        %v1501 = vsel %vm1333, %v1310, 0.0
        %v1502 = vsel %vm1334, %v1311, 0.0
        %v1503 = vsel %vm1335, %v1312, 0.0
        %v1504 = vsel %vm1336, %v1313, 0.0
        %v1505 = vsel %vm1333, %v1314, 0.0
        %v1506 = vsel %vm1334, %v1315, 0.0
        %v1507 = vsel %vm1335, %v1316, 0.0
        %v1508 = vsel %vm1336, %v1317, 0.0
        %v1509 = vsel %vm1333, %v1318, 0.0
        %v1510 = vsel %vm1334, %v1319, 0.0
        %v1511 = vsel %vm1335, %v1320, 0.0
        %v1512 = vsel %vm1336, %v1321, 0.0
        %v1513 = vld [vmem:[#allocation2] sm:$0xff]
        %v1514 = vld [vmem:[#allocation2 + $0x8] sm:$0xff]
        %v1515 = vld [vmem:[#allocation2 + $0x10] sm:$0xff]
        %v1516 = vld [vmem:[#allocation2 + $0x18] sm:$0xff]
        %v1517 = vld [vmem:[#allocation2 + $0x20] sm:$0xff]
        %v1518 = vld [vmem:[#allocation2 + $0x28] sm:$0xff]
        %v1519 = vld [vmem:[#allocation2 + $0x30] sm:$0xff]
        %v1520 = vld [vmem:[#allocation2 + $0x38] sm:$0xff]
        %v1521 = vld [vmem:[#allocation2 + $0x40] sm:$0xff]
        %v1522 = vld [vmem:[#allocation2 + $0x48] sm:$0xff]
        %v1523 = vld [vmem:[#allocation2 + $0x50] sm:$0xff]
        %v1524 = vld [vmem:[#allocation2 + $0x58] sm:$0xff]
        %v1525 = vld [vmem:[#allocation2 + $0x60] sm:$0xff]
        %v1526 = vld [vmem:[#allocation2 + $0x68] sm:$0xff]
        %v1527 = vld [vmem:[#allocation2 + $0x70] sm:$0xff]
        %v1528 = vld [vmem:[#allocation2 + $0x78] sm:$0xff]
        %v1529 = vld [vmem:[#allocation2 + $0x80] sm:$0xff]
        %v1530 = vld [vmem:[#allocation2 + $0x88] sm:$0xff]
        %v1531 = vld [vmem:[#allocation2 + $0x90] sm:$0xff]
        %v1532 = vld [vmem:[#allocation2 + $0x98] sm:$0xff]
        %v1533 = vld [vmem:[#allocation2 + $0xa0] sm:$0xff]
        %v1534 = vld [vmem:[#allocation2 + $0xa8] sm:$0xff]
        %v1535 = vld [vmem:[#allocation2 + $0xb0] sm:$0xff]
        %v1536 = vld [vmem:[#allocation2 + $0xb8] sm:$0xff]
        %v1537 = vld [vmem:[#allocation2 + $0xc0] sm:$0xff]
        %v1538 = vld [vmem:[#allocation2 + $0xc8] sm:$0xff]
        %v1539 = vld [vmem:[#allocation2 + $0xd0] sm:$0xff]
        %v1540 = vld [vmem:[#allocation2 + $0xd8] sm:$0xff]
        %v1541 = vld [vmem:[#allocation2 + $0xe0] sm:$0xff]
        %v1542 = vld [vmem:[#allocation2 + $0xe8] sm:$0xff]
        %v1543 = vld [vmem:[#allocation2 + $0xf0] sm:$0xff]
        %v1544 = vld [vmem:[#allocation2 + $0xf8] sm:$0xff]
        %v1545 = vld [vmem:[#allocation2 + $0x100] sm:$0xff]
        %v1546 = vld [vmem:[#allocation2 + $0x108] sm:$0xff]
        %v1547 = vld [vmem:[#allocation2 + $0x110] sm:$0xff]
        %v1548 = vld [vmem:[#allocation2 + $0x118] sm:$0xff]
        %v1549 = vld [vmem:[#allocation2 + $0x120] sm:$0xff]
        %v1550 = vld [vmem:[#allocation2 + $0x128] sm:$0xff]
        %v1551 = vld [vmem:[#allocation2 + $0x130] sm:$0xff]
        %v1552 = vld [vmem:[#allocation2 + $0x138] sm:$0xff]
        %v1553 = vld [vmem:[#allocation2 + $0x140] sm:$0xff]
        %v1554 = vld [vmem:[#allocation2 + $0x148] sm:$0xff]
        %v1555 = vld [vmem:[#allocation2 + $0x150] sm:$0xff]
        %v1556 = vld [vmem:[#allocation2 + $0x158] sm:$0xff]
        %v1557 = vadd.f32 %v1337, %v1338
        %v1558 = vadd.f32 %v1557, %v1339
        %v1559 = vadd.f32 %v1558, %v1340
        %1560 = vadd.xlane.f32.xlu0 %v1559
        %v1561 = vpop.xlane.xlu0 %1560
        %v1562 = vadd.f32 %v1341, %v1342
        %v1563 = vadd.f32 %v1562, %v1343
        %v1564 = vadd.f32 %v1563, %v1344
        %1565 = vadd.xlane.f32.xlu0 %v1564
        %v1566 = vpop.xlane.xlu0 %1565
        %v1567 = vadd.f32 %v1345, %v1346
        %v1568 = vadd.f32 %v1567, %v1347
        %v1569 = vadd.f32 %v1568, %v1348
        %1570 = vadd.xlane.f32.xlu0 %v1569
        %v1571 = vpop.xlane.xlu0 %1570
        %v1572 = vadd.f32 %v1349, %v1350
        %v1573 = vadd.f32 %v1572, %v1351
        %v1574 = vadd.f32 %v1573, %v1352
        %1575 = vadd.xlane.f32.xlu0 %v1574
        %v1576 = vpop.xlane.xlu0 %1575
        %v1577 = vadd.f32 %v1353, %v1354
        %v1578 = vadd.f32 %v1577, %v1355
        %v1579 = vadd.f32 %v1578, %v1356
        %1580 = vadd.xlane.f32.xlu0 %v1579
        %v1581 = vpop.xlane.xlu0 %1580
        %v1582 = vadd.f32 %v1357, %v1358
        %v1583 = vadd.f32 %v1582, %v1359
        %v1584 = vadd.f32 %v1583, %v1360
        %1585 = vadd.xlane.f32.xlu0 %v1584
        %v1586 = vpop.xlane.xlu0 %1585
        %v1587 = vadd.f32 %v1361, %v1362
        %v1588 = vadd.f32 %v1587, %v1363
        %v1589 = vadd.f32 %v1588, %v1364
        %1590 = vadd.xlane.f32.xlu0 %v1589
        %v1591 = vpop.xlane.xlu0 %1590
        %v1592 = vadd.f32 %v1365, %v1366
        %v1593 = vadd.f32 %v1592, %v1367
        %v1594 = vadd.f32 %v1593, %v1368
        %1595 = vadd.xlane.f32.xlu0 %v1594
        %v1596 = vpop.xlane.xlu0 %1595
        %v1597 = vadd.f32 %v1369, %v1370
        %v1598 = vadd.f32 %v1597, %v1371
        %v1599 = vadd.f32 %v1598, %v1372
        %1600 = vadd.xlane.f32.xlu0 %v1599
        %v1601 = vpop.xlane.xlu0 %1600
        %v1602 = vadd.f32 %v1373, %v1374
        %v1603 = vadd.f32 %v1602, %v1375
        %v1604 = vadd.f32 %v1603, %v1376
        %1605 = vadd.xlane.f32.xlu0 %v1604
        %v1606 = vpop.xlane.xlu0 %1605
        %v1607 = vadd.f32 %v1377, %v1378
        %v1608 = vadd.f32 %v1607, %v1379
        %v1609 = vadd.f32 %v1608, %v1380
        %1610 = vadd.xlane.f32.xlu0 %v1609
        %v1611 = vpop.xlane.xlu0 %1610
        %v1612 = vadd.f32 %v1381, %v1382
        %v1613 = vadd.f32 %v1612, %v1383
        %v1614 = vadd.f32 %v1613, %v1384
        %1615 = vadd.xlane.f32.xlu0 %v1614
        %v1616 = vpop.xlane.xlu0 %1615
        %v1617 = vadd.f32 %v1385, %v1386
        %v1618 = vadd.f32 %v1617, %v1387
        %v1619 = vadd.f32 %v1618, %v1388
        %1620 = vadd.xlane.f32.xlu0 %v1619
        %v1621 = vpop.xlane.xlu0 %1620
        %v1622 = vadd.f32 %v1389, %v1390
        %v1623 = vadd.f32 %v1622, %v1391
        %v1624 = vadd.f32 %v1623, %v1392
        %1625 = vadd.xlane.f32.xlu0 %v1624
        %v1626 = vpop.xlane.xlu0 %1625
        %v1627 = vadd.f32 %v1393, %v1394
        %v1628 = vadd.f32 %v1627, %v1395
        %v1629 = vadd.f32 %v1628, %v1396
        %1630 = vadd.xlane.f32.xlu0 %v1629
        %v1631 = vpop.xlane.xlu0 %1630
        %v1632 = vadd.f32 %v1397, %v1398
        %v1633 = vadd.f32 %v1632, %v1399
        %v1634 = vadd.f32 %v1633, %v1400
        %1635 = vadd.xlane.f32.xlu0 %v1634
        %v1636 = vpop.xlane.xlu0 %1635
        %v1637 = vadd.f32 %v1401, %v1402
        %v1638 = vadd.f32 %v1637, %v1403
        %v1639 = vadd.f32 %v1638, %v1404
        %1640 = vadd.xlane.f32.xlu0 %v1639
        %v1641 = vpop.xlane.xlu0 %1640
        %v1642 = vadd.f32 %v1405, %v1406
        %v1643 = vadd.f32 %v1642, %v1407
        %v1644 = vadd.f32 %v1643, %v1408
        %1645 = vadd.xlane.f32.xlu0 %v1644
        %v1646 = vpop.xlane.xlu0 %1645
        %v1647 = vadd.f32 %v1409, %v1410
        %v1648 = vadd.f32 %v1647, %v1411
        %v1649 = vadd.f32 %v1648, %v1412
        %1650 = vadd.xlane.f32.xlu0 %v1649
        %v1651 = vpop.xlane.xlu0 %1650
        %v1652 = vadd.f32 %v1413, %v1414
        %v1653 = vadd.f32 %v1652, %v1415
        %v1654 = vadd.f32 %v1653, %v1416
        %1655 = vadd.xlane.f32.xlu0 %v1654
        %v1656 = vpop.xlane.xlu0 %1655
        %v1657 = vadd.f32 %v1417, %v1418
        %v1658 = vadd.f32 %v1657, %v1419
        %v1659 = vadd.f32 %v1658, %v1420
        %1660 = vadd.xlane.f32.xlu0 %v1659
        %v1661 = vpop.xlane.xlu0 %1660
        %v1662 = vadd.f32 %v1421, %v1422
        %v1663 = vadd.f32 %v1662, %v1423
        %v1664 = vadd.f32 %v1663, %v1424
        %1665 = vadd.xlane.f32.xlu0 %v1664
        %v1666 = vpop.xlane.xlu0 %1665
        %v1667 = vadd.f32 %v1425, %v1426
        %v1668 = vadd.f32 %v1667, %v1427
        %v1669 = vadd.f32 %v1668, %v1428
        %1670 = vadd.xlane.f32.xlu0 %v1669
        %v1671 = vpop.xlane.xlu0 %1670
        %v1672 = vadd.f32 %v1429, %v1430
        %v1673 = vadd.f32 %v1672, %v1431
        %v1674 = vadd.f32 %v1673, %v1432
        %1675 = vadd.xlane.f32.xlu0 %v1674
        %v1676 = vpop.xlane.xlu0 %1675
        %v1677 = vadd.f32 %v1433, %v1434
        %v1678 = vadd.f32 %v1677, %v1435
        %v1679 = vadd.f32 %v1678, %v1436
        %1680 = vadd.xlane.f32.xlu0 %v1679
        %v1681 = vpop.xlane.xlu0 %1680
        %v1682 = vadd.f32 %v1437, %v1438
        %v1683 = vadd.f32 %v1682, %v1439
        %v1684 = vadd.f32 %v1683, %v1440
        %1685 = vadd.xlane.f32.xlu0 %v1684
        %v1686 = vpop.xlane.xlu0 %1685
        %v1687 = vadd.f32 %v1441, %v1442
        %v1688 = vadd.f32 %v1687, %v1443
        %v1689 = vadd.f32 %v1688, %v1444
        %1690 = vadd.xlane.f32.xlu0 %v1689
        %v1691 = vpop.xlane.xlu0 %1690
        %v1692 = vadd.f32 %v1445, %v1446
        %v1693 = vadd.f32 %v1692, %v1447
        %v1694 = vadd.f32 %v1693, %v1448
        %1695 = vadd.xlane.f32.xlu0 %v1694
        %v1696 = vpop.xlane.xlu0 %1695
        %v1697 = vadd.f32 %v1449, %v1450
        %v1698 = vadd.f32 %v1697, %v1451
        %v1699 = vadd.f32 %v1698, %v1452
        %1700 = vadd.xlane.f32.xlu0 %v1699
        %v1701 = vpop.xlane.xlu0 %1700
        %v1702 = vadd.f32 %v1453, %v1454
        %v1703 = vadd.f32 %v1702, %v1455
        %v1704 = vadd.f32 %v1703, %v1456
        %1705 = vadd.xlane.f32.xlu0 %v1704
        %v1706 = vpop.xlane.xlu0 %1705
        %v1707 = vadd.f32 %v1457, %v1458
        %v1708 = vadd.f32 %v1707, %v1459
        %v1709 = vadd.f32 %v1708, %v1460
        %1710 = vadd.xlane.f32.xlu0 %v1709
        %v1711 = vpop.xlane.xlu0 %1710
        %v1712 = vadd.f32 %v1461, %v1462
        %v1713 = vadd.f32 %v1712, %v1463
        %v1714 = vadd.f32 %v1713, %v1464
        %1715 = vadd.xlane.f32.xlu0 %v1714
        %v1716 = vpop.xlane.xlu0 %1715
        %v1717 = vadd.f32 %v1465, %v1466
        %v1718 = vadd.f32 %v1717, %v1467
        %v1719 = vadd.f32 %v1718, %v1468
        %1720 = vadd.xlane.f32.xlu0 %v1719
        %v1721 = vpop.xlane.xlu0 %1720
        %v1722 = vadd.f32 %v1469, %v1470
        %v1723 = vadd.f32 %v1722, %v1471
        %v1724 = vadd.f32 %v1723, %v1472
        %1725 = vadd.xlane.f32.xlu0 %v1724
        %v1726 = vpop.xlane.xlu0 %1725
        %v1727 = vadd.f32 %v1473, %v1474
        %v1728 = vadd.f32 %v1727, %v1475
        %v1729 = vadd.f32 %v1728, %v1476
        %1730 = vadd.xlane.f32.xlu0 %v1729
        %v1731 = vpop.xlane.xlu0 %1730
        %v1732 = vadd.f32 %v1477, %v1478
        %v1733 = vadd.f32 %v1732, %v1479
        %v1734 = vadd.f32 %v1733, %v1480
        %1735 = vadd.xlane.f32.xlu0 %v1734
        %v1736 = vpop.xlane.xlu0 %1735
        %v1737 = vadd.f32 %v1481, %v1482
        %v1738 = vadd.f32 %v1737, %v1483
        %v1739 = vadd.f32 %v1738, %v1484
        %1740 = vadd.xlane.f32.xlu0 %v1739
        %v1741 = vpop.xlane.xlu0 %1740
        %v1742 = vadd.f32 %v1485, %v1486
        %v1743 = vadd.f32 %v1742, %v1487
        %v1744 = vadd.f32 %v1743, %v1488
        %1745 = vadd.xlane.f32.xlu0 %v1744
        %v1746 = vpop.xlane.xlu0 %1745
        %v1747 = vadd.f32 %v1489, %v1490
        %v1748 = vadd.f32 %v1747, %v1491
        %v1749 = vadd.f32 %v1748, %v1492
        %1750 = vadd.xlane.f32.xlu0 %v1749
        %v1751 = vpop.xlane.xlu0 %1750
        %v1752 = vadd.f32 %v1493, %v1494
        %v1753 = vadd.f32 %v1752, %v1495
        %v1754 = vadd.f32 %v1753, %v1496
        %1755 = vadd.xlane.f32.xlu0 %v1754
        %v1756 = vpop.xlane.xlu0 %1755
        %v1757 = vadd.f32 %v1497, %v1498
        %v1758 = vadd.f32 %v1757, %v1499
        %v1759 = vadd.f32 %v1758, %v1500
        %1760 = vadd.xlane.f32.xlu0 %v1759
        %v1761 = vpop.xlane.xlu0 %1760
        %v1762 = vadd.f32 %v1501, %v1502
        %v1763 = vadd.f32 %v1762, %v1503
        %v1764 = vadd.f32 %v1763, %v1504
        %1765 = vadd.xlane.f32.xlu0 %v1764
        %v1766 = vpop.xlane.xlu0 %1765
        %v1767 = vadd.f32 %v1505, %v1506
        %v1768 = vadd.f32 %v1767, %v1507
        %v1769 = vadd.f32 %v1768, %v1508
        %1770 = vadd.xlane.f32.xlu0 %v1769
        %v1771 = vpop.xlane.xlu0 %1770
        %v1772 = vadd.f32 %v1509, %v1510
        %v1773 = vadd.f32 %v1772, %v1511
        %v1774 = vadd.f32 %v1773, %v1512
        %1775 = vadd.xlane.f32.xlu0 %v1774
        %v1776 = vpop.xlane.xlu0 %1775
        %v1777 = vadd.f32 %v1513, %v1561
        %v1778 = vadd.f32 %v1514, %v1566
        %v1779 = vadd.f32 %v1515, %v1571
        %v1780 = vadd.f32 %v1516, %v1576
        %v1781 = vadd.f32 %v1517, %v1581
        %v1782 = vadd.f32 %v1518, %v1586
        %v1783 = vadd.f32 %v1519, %v1591
        %v1784 = vadd.f32 %v1520, %v1596
        %v1785 = vadd.f32 %v1521, %v1601
        %v1786 = vadd.f32 %v1522, %v1606
        %v1787 = vadd.f32 %v1523, %v1611
        %v1788 = vadd.f32 %v1524, %v1616
        %v1789 = vadd.f32 %v1525, %v1621
        %v1790 = vadd.f32 %v1526, %v1626
        %v1791 = vadd.f32 %v1527, %v1631
        %v1792 = vadd.f32 %v1528, %v1636
        %v1793 = vadd.f32 %v1529, %v1641
        %v1794 = vadd.f32 %v1530, %v1646
        %v1795 = vadd.f32 %v1531, %v1651
        %v1796 = vadd.f32 %v1532, %v1656
        %v1797 = vadd.f32 %v1533, %v1661
        %v1798 = vadd.f32 %v1534, %v1666
        %v1799 = vadd.f32 %v1535, %v1671
        %v1800 = vadd.f32 %v1536, %v1676
        %v1801 = vadd.f32 %v1537, %v1681
        %v1802 = vadd.f32 %v1538, %v1686
        %v1803 = vadd.f32 %v1539, %v1691
        %v1804 = vadd.f32 %v1540, %v1696
        %v1805 = vadd.f32 %v1541, %v1701
        %v1806 = vadd.f32 %v1542, %v1706
        %v1807 = vadd.f32 %v1543, %v1711
        %v1808 = vadd.f32 %v1544, %v1716
        %v1809 = vadd.f32 %v1545, %v1721
        %v1810 = vadd.f32 %v1546, %v1726
        %v1811 = vadd.f32 %v1547, %v1731
        %v1812 = vadd.f32 %v1548, %v1736
        %v1813 = vadd.f32 %v1549, %v1741
        %v1814 = vadd.f32 %v1550, %v1746
        %v1815 = vadd.f32 %v1551, %v1751
        %v1816 = vadd.f32 %v1552, %v1756
        %v1817 = vadd.f32 %v1553, %v1761
        %v1818 = vadd.f32 %v1554, %v1766
        %v1819 = vadd.f32 %v1555, %v1771
        %v1820 = vadd.f32 %v1556, %v1776
        %vm1821 = vcmask 7168
        %1822 = vst.msk [vmem:[#allocation2] sm:$0xff] %vm1821, %v1777
        %1823 = vst.msk [vmem:[#allocation2 + $0x8] sm:$0xff] %vm1821, %v1778
        %1824 = vst.msk [vmem:[#allocation2 + $0x10] sm:$0xff] %vm1821, %v1779
        %1825 = vst.msk [vmem:[#allocation2 + $0x18] sm:$0xff] %vm1821, %v1780
        %1826 = vst.msk [vmem:[#allocation2 + $0x20] sm:$0xff] %vm1821, %v1781
        %1827 = vst.msk [vmem:[#allocation2 + $0x28] sm:$0xff] %vm1821, %v1782
        %1828 = vst.msk [vmem:[#allocation2 + $0x30] sm:$0xff] %vm1821, %v1783
        %1829 = vst.msk [vmem:[#allocation2 + $0x38] sm:$0xff] %vm1821, %v1784
        %1830 = vst.msk [vmem:[#allocation2 + $0x40] sm:$0xff] %vm1821, %v1785
        %1831 = vst.msk [vmem:[#allocation2 + $0x48] sm:$0xff] %vm1821, %v1786
        %1832 = vst.msk [vmem:[#allocation2 + $0x50] sm:$0xff] %vm1821, %v1787
        %1833 = vst.msk [vmem:[#allocation2 + $0x58] sm:$0xff] %vm1821, %v1788
        %1834 = vst.msk [vmem:[#allocation2 + $0x60] sm:$0xff] %vm1821, %v1789
        %1835 = vst.msk [vmem:[#allocation2 + $0x68] sm:$0xff] %vm1821, %v1790
        %1836 = vst.msk [vmem:[#allocation2 + $0x70] sm:$0xff] %vm1821, %v1791
        %1837 = vst.msk [vmem:[#allocation2 + $0x78] sm:$0xff] %vm1821, %v1792
        %1838 = vst.msk [vmem:[#allocation2 + $0x80] sm:$0xff] %vm1821, %v1793
        %1839 = vst.msk [vmem:[#allocation2 + $0x88] sm:$0xff] %vm1821, %v1794
        %1840 = vst.msk [vmem:[#allocation2 + $0x90] sm:$0xff] %vm1821, %v1795
        %1841 = vst.msk [vmem:[#allocation2 + $0x98] sm:$0xff] %vm1821, %v1796
        %1842 = vst.msk [vmem:[#allocation2 + $0xa0] sm:$0xff] %vm1821, %v1797
        %1843 = vst.msk [vmem:[#allocation2 + $0xa8] sm:$0xff] %vm1821, %v1798
        %1844 = vst.msk [vmem:[#allocation2 + $0xb0] sm:$0xff] %vm1821, %v1799
        %1845 = vst.msk [vmem:[#allocation2 + $0xb8] sm:$0xff] %vm1821, %v1800
        %1846 = vst.msk [vmem:[#allocation2 + $0xc0] sm:$0xff] %vm1821, %v1801
        %1847 = vst.msk [vmem:[#allocation2 + $0xc8] sm:$0xff] %vm1821, %v1802
        %1848 = vst.msk [vmem:[#allocation2 + $0xd0] sm:$0xff] %vm1821, %v1803
        %1849 = vst.msk [vmem:[#allocation2 + $0xd8] sm:$0xff] %vm1821, %v1804
        %1850 = vst.msk [vmem:[#allocation2 + $0xe0] sm:$0xff] %vm1821, %v1805
        %1851 = vst.msk [vmem:[#allocation2 + $0xe8] sm:$0xff] %vm1821, %v1806
        %1852 = vst.msk [vmem:[#allocation2 + $0xf0] sm:$0xff] %vm1821, %v1807
        %1853 = vst.msk [vmem:[#allocation2 + $0xf8] sm:$0xff] %vm1821, %v1808
        %1854 = vst.msk [vmem:[#allocation2 + $0x100] sm:$0xff] %vm1821, %v1809
        %1855 = vst.msk [vmem:[#allocation2 + $0x108] sm:$0xff] %vm1821, %v1810
        %1856 = vst.msk [vmem:[#allocation2 + $0x110] sm:$0xff] %vm1821, %v1811
        %1857 = vst.msk [vmem:[#allocation2 + $0x118] sm:$0xff] %vm1821, %v1812
        %1858 = vst.msk [vmem:[#allocation2 + $0x120] sm:$0xff] %vm1821, %v1813
        %1859 = vst.msk [vmem:[#allocation2 + $0x128] sm:$0xff] %vm1821, %v1814
        %1860 = vst.msk [vmem:[#allocation2 + $0x130] sm:$0xff] %vm1821, %v1815
        %1861 = vst.msk [vmem:[#allocation2 + $0x138] sm:$0xff] %vm1821, %v1816
        %1862 = vst.msk [vmem:[#allocation2 + $0x140] sm:$0xff] %vm1821, %v1817
        %1863 = vst.msk [vmem:[#allocation2 + $0x148] sm:$0xff] %vm1821, %v1818
        %1864 = vst.msk [vmem:[#allocation2 + $0x150] sm:$0xff] %vm1821, %v1819
        %1865 = vst.msk [vmem:[#allocation2 + $0x158] sm:$0xff] %vm1821, %v1820
        %v1866 = vld [vmem:[#allocation3] sm:$0xff]
        %v1867 = vld [vmem:[#allocation3 + $0x8] sm:$0xff]
        %v1868 = vld [vmem:[#allocation3 + $0x10] sm:$0xff]
        %v1869 = vld [vmem:[#allocation3 + $0x18] sm:$0xff]
        %v1870 = vld [vmem:[#allocation3 + $0x20] sm:$0xff]
        %v1871 = vld [vmem:[#allocation3 + $0x28] sm:$0xff]
        %v1872 = vld [vmem:[#allocation3 + $0x30] sm:$0xff]
        %v1873 = vld [vmem:[#allocation3 + $0x38] sm:$0xff]
        %v1874 = vld [vmem:[#allocation3 + $0x40] sm:$0xff]
        %v1875 = vld [vmem:[#allocation3 + $0x48] sm:$0xff]
        %v1876 = vld [vmem:[#allocation3 + $0x50] sm:$0xff]
        %v1877 = vld [vmem:[#allocation3 + $0x58] sm:$0xff]
        %v1878 = vld [vmem:[#allocation3 + $0x60] sm:$0xff]
        %v1879 = vld [vmem:[#allocation3 + $0x68] sm:$0xff]
        %v1880 = vld [vmem:[#allocation3 + $0x70] sm:$0xff]
        %v1881 = vld [vmem:[#allocation3 + $0x78] sm:$0xff]
        %v1882 = vld [vmem:[#allocation3 + $0x80] sm:$0xff]
        %v1883 = vld [vmem:[#allocation3 + $0x88] sm:$0xff]
        %v1884 = vld [vmem:[#allocation3 + $0x90] sm:$0xff]
        %v1885 = vld [vmem:[#allocation3 + $0x98] sm:$0xff]
        %v1886 = vld [vmem:[#allocation3 + $0xa0] sm:$0xff]
        %v1887 = vld [vmem:[#allocation3 + $0xa8] sm:$0xff]
        %v1888 = vld [vmem:[#allocation3 + $0xb0] sm:$0xff]
        %v1889 = vld [vmem:[#allocation3 + $0xb8] sm:$0xff]
        %v1890 = vld [vmem:[#allocation3 + $0xc0] sm:$0xff]
        %v1891 = vld [vmem:[#allocation3 + $0xc8] sm:$0xff]
        %v1892 = vld [vmem:[#allocation3 + $0xd0] sm:$0xff]
        %v1893 = vld [vmem:[#allocation3 + $0xd8] sm:$0xff]
        %v1894 = vld [vmem:[#allocation3 + $0xe0] sm:$0xff]
        %v1895 = vld [vmem:[#allocation3 + $0xe8] sm:$0xff]
        %v1896 = vld [vmem:[#allocation3 + $0xf0] sm:$0xff]
        %v1897 = vld [vmem:[#allocation3 + $0xf8] sm:$0xff]
        %v1898 = vld [vmem:[#allocation3 + $0x100] sm:$0xff]
        %v1899 = vld [vmem:[#allocation3 + $0x108] sm:$0xff]
        %v1900 = vld [vmem:[#allocation3 + $0x110] sm:$0xff]
        %v1901 = vld [vmem:[#allocation3 + $0x118] sm:$0xff]
        %v1902 = vld [vmem:[#allocation3 + $0x120] sm:$0xff]
        %v1903 = vld [vmem:[#allocation3 + $0x128] sm:$0xff]
        %v1904 = vld [vmem:[#allocation3 + $0x130] sm:$0xff]
        %v1905 = vld [vmem:[#allocation3 + $0x138] sm:$0xff]
        %v1906 = vld [vmem:[#allocation3 + $0x140] sm:$0xff]
        %v1907 = vld [vmem:[#allocation3 + $0x148] sm:$0xff]
        %v1908 = vld [vmem:[#allocation3 + $0x150] sm:$0xff]
        %v1909 = vld [vmem:[#allocation3 + $0x158] sm:$0xff]
        %v1910 = vmul.f32 %v1337, %v1337
        %v1911 = vmul.f32 %v1338, %v1338
        %v1912 = vmul.f32 %v1339, %v1339
        %v1913 = vmul.f32 %v1340, %v1340
        %v1914 = vmul.f32 %v1341, %v1341
        %v1915 = vmul.f32 %v1342, %v1342
        %v1916 = vmul.f32 %v1343, %v1343
        %v1917 = vmul.f32 %v1344, %v1344
        %v1918 = vmul.f32 %v1345, %v1345
        %v1919 = vmul.f32 %v1346, %v1346
        %v1920 = vmul.f32 %v1347, %v1347
        %v1921 = vmul.f32 %v1348, %v1348
        %v1922 = vmul.f32 %v1349, %v1349
        %v1923 = vmul.f32 %v1350, %v1350
        %v1924 = vmul.f32 %v1351, %v1351
        %v1925 = vmul.f32 %v1352, %v1352
        %v1926 = vmul.f32 %v1353, %v1353
        %v1927 = vmul.f32 %v1354, %v1354
        %v1928 = vmul.f32 %v1355, %v1355
        %v1929 = vmul.f32 %v1356, %v1356
        %v1930 = vmul.f32 %v1357, %v1357
        %v1931 = vmul.f32 %v1358, %v1358
        %v1932 = vmul.f32 %v1359, %v1359
        %v1933 = vmul.f32 %v1360, %v1360
        %v1934 = vmul.f32 %v1361, %v1361
        %v1935 = vmul.f32 %v1362, %v1362
        %v1936 = vmul.f32 %v1363, %v1363
        %v1937 = vmul.f32 %v1364, %v1364
        %v1938 = vmul.f32 %v1365, %v1365
        %v1939 = vmul.f32 %v1366, %v1366
        %v1940 = vmul.f32 %v1367, %v1367
        %v1941 = vmul.f32 %v1368, %v1368
        %v1942 = vmul.f32 %v1369, %v1369
        %v1943 = vmul.f32 %v1370, %v1370
        %v1944 = vmul.f32 %v1371, %v1371
        %v1945 = vmul.f32 %v1372, %v1372
        %v1946 = vmul.f32 %v1373, %v1373
        %v1947 = vmul.f32 %v1374, %v1374
        %v1948 = vmul.f32 %v1375, %v1375
        %v1949 = vmul.f32 %v1376, %v1376
        %v1950 = vmul.f32 %v1377, %v1377
        %v1951 = vmul.f32 %v1378, %v1378
        %v1952 = vmul.f32 %v1379, %v1379
        %v1953 = vmul.f32 %v1380, %v1380
        %v1954 = vmul.f32 %v1381, %v1381
        %v1955 = vmul.f32 %v1382, %v1382
        %v1956 = vmul.f32 %v1383, %v1383
        %v1957 = vmul.f32 %v1384, %v1384
        %v1958 = vmul.f32 %v1385, %v1385
        %v1959 = vmul.f32 %v1386, %v1386
        %v1960 = vmul.f32 %v1387, %v1387
        %v1961 = vmul.f32 %v1388, %v1388
        %v1962 = vmul.f32 %v1389, %v1389
        %v1963 = vmul.f32 %v1390, %v1390
        %v1964 = vmul.f32 %v1391, %v1391
        %v1965 = vmul.f32 %v1392, %v1392
        %v1966 = vmul.f32 %v1393, %v1393
        %v1967 = vmul.f32 %v1394, %v1394
        %v1968 = vmul.f32 %v1395, %v1395
        %v1969 = vmul.f32 %v1396, %v1396
        %v1970 = vmul.f32 %v1397, %v1397
        %v1971 = vmul.f32 %v1398, %v1398
        %v1972 = vmul.f32 %v1399, %v1399
        %v1973 = vmul.f32 %v1400, %v1400
        %v1974 = vmul.f32 %v1401, %v1401
        %v1975 = vmul.f32 %v1402, %v1402
        %v1976 = vmul.f32 %v1403, %v1403
        %v1977 = vmul.f32 %v1404, %v1404
        %v1978 = vmul.f32 %v1405, %v1405
        %v1979 = vmul.f32 %v1406, %v1406
        %v1980 = vmul.f32 %v1407, %v1407
        %v1981 = vmul.f32 %v1408, %v1408
        %v1982 = vmul.f32 %v1409, %v1409
        %v1983 = vmul.f32 %v1410, %v1410
        %v1984 = vmul.f32 %v1411, %v1411
        %v1985 = vmul.f32 %v1412, %v1412
        %v1986 = vmul.f32 %v1413, %v1413
        %v1987 = vmul.f32 %v1414, %v1414
        %v1988 = vmul.f32 %v1415, %v1415
        %v1989 = vmul.f32 %v1416, %v1416
        %v1990 = vmul.f32 %v1417, %v1417
        %v1991 = vmul.f32 %v1418, %v1418
        %v1992 = vmul.f32 %v1419, %v1419
        %v1993 = vmul.f32 %v1420, %v1420
        %v1994 = vmul.f32 %v1421, %v1421
        %v1995 = vmul.f32 %v1422, %v1422
        %v1996 = vmul.f32 %v1423, %v1423
        %v1997 = vmul.f32 %v1424, %v1424
        %v1998 = vmul.f32 %v1425, %v1425
        %v1999 = vmul.f32 %v1426, %v1426
        %v2000 = vmul.f32 %v1427, %v1427
        %v2001 = vmul.f32 %v1428, %v1428
        %v2002 = vmul.f32 %v1429, %v1429
        %v2003 = vmul.f32 %v1430, %v1430
        %v2004 = vmul.f32 %v1431, %v1431
        %v2005 = vmul.f32 %v1432, %v1432
        %v2006 = vmul.f32 %v1433, %v1433
        %v2007 = vmul.f32 %v1434, %v1434
        %v2008 = vmul.f32 %v1435, %v1435
        %v2009 = vmul.f32 %v1436, %v1436
        %v2010 = vmul.f32 %v1437, %v1437
        %v2011 = vmul.f32 %v1438, %v1438
        %v2012 = vmul.f32 %v1439, %v1439
        %v2013 = vmul.f32 %v1440, %v1440
        %v2014 = vmul.f32 %v1441, %v1441
        %v2015 = vmul.f32 %v1442, %v1442
        %v2016 = vmul.f32 %v1443, %v1443
        %v2017 = vmul.f32 %v1444, %v1444
        %v2018 = vmul.f32 %v1445, %v1445
        %v2019 = vmul.f32 %v1446, %v1446
        %v2020 = vmul.f32 %v1447, %v1447
        %v2021 = vmul.f32 %v1448, %v1448
        %v2022 = vmul.f32 %v1449, %v1449
        %v2023 = vmul.f32 %v1450, %v1450
        %v2024 = vmul.f32 %v1451, %v1451
        %v2025 = vmul.f32 %v1452, %v1452
        %v2026 = vmul.f32 %v1453, %v1453
        %v2027 = vmul.f32 %v1454, %v1454
        %v2028 = vmul.f32 %v1455, %v1455
        %v2029 = vmul.f32 %v1456, %v1456
        %v2030 = vmul.f32 %v1457, %v1457
        %v2031 = vmul.f32 %v1458, %v1458
        %v2032 = vmul.f32 %v1459, %v1459
        %v2033 = vmul.f32 %v1460, %v1460
        %v2034 = vmul.f32 %v1461, %v1461
        %v2035 = vmul.f32 %v1462, %v1462
        %v2036 = vmul.f32 %v1463, %v1463
        %v2037 = vmul.f32 %v1464, %v1464
        %v2038 = vmul.f32 %v1465, %v1465
        %v2039 = vmul.f32 %v1466, %v1466
        %v2040 = vmul.f32 %v1467, %v1467
        %v2041 = vmul.f32 %v1468, %v1468
        %v2042 = vmul.f32 %v1469, %v1469
        %v2043 = vmul.f32 %v1470, %v1470
        %v2044 = vmul.f32 %v1471, %v1471
        %v2045 = vmul.f32 %v1472, %v1472
        %v2046 = vmul.f32 %v1473, %v1473
        %v2047 = vmul.f32 %v1474, %v1474
        %v2048 = vmul.f32 %v1475, %v1475
        %v2049 = vmul.f32 %v1476, %v1476
        %v2050 = vmul.f32 %v1477, %v1477
        %v2051 = vmul.f32 %v1478, %v1478
        %v2052 = vmul.f32 %v1479, %v1479
        %v2053 = vmul.f32 %v1480, %v1480
        %v2054 = vmul.f32 %v1481, %v1481
        %v2055 = vmul.f32 %v1482, %v1482
        %v2056 = vmul.f32 %v1483, %v1483
        %v2057 = vmul.f32 %v1484, %v1484
        %v2058 = vmul.f32 %v1485, %v1485
        %v2059 = vmul.f32 %v1486, %v1486
        %v2060 = vmul.f32 %v1487, %v1487
        %v2061 = vmul.f32 %v1488, %v1488
        %v2062 = vmul.f32 %v1489, %v1489
        %v2063 = vmul.f32 %v1490, %v1490
        %v2064 = vmul.f32 %v1491, %v1491
        %v2065 = vmul.f32 %v1492, %v1492
        %v2066 = vmul.f32 %v1493, %v1493
        %v2067 = vmul.f32 %v1494, %v1494
        %v2068 = vmul.f32 %v1495, %v1495
        %v2069 = vmul.f32 %v1496, %v1496
        %v2070 = vmul.f32 %v1497, %v1497
        %v2071 = vmul.f32 %v1498, %v1498
        %v2072 = vmul.f32 %v1499, %v1499
        %v2073 = vmul.f32 %v1500, %v1500
        %v2074 = vmul.f32 %v1501, %v1501
        %v2075 = vmul.f32 %v1502, %v1502
        %v2076 = vmul.f32 %v1503, %v1503
        %v2077 = vmul.f32 %v1504, %v1504
        %v2078 = vmul.f32 %v1505, %v1505
        %v2079 = vmul.f32 %v1506, %v1506
        %v2080 = vmul.f32 %v1507, %v1507
        %v2081 = vmul.f32 %v1508, %v1508
        %v2082 = vmul.f32 %v1509, %v1509
        %v2083 = vmul.f32 %v1510, %v1510
        %v2084 = vmul.f32 %v1511, %v1511
        %v2085 = vmul.f32 %v1512, %v1512
        %v2086 = vadd.f32 %v1910, %v1911
        %v2087 = vadd.f32 %v2086, %v1912
        %v2088 = vadd.f32 %v2087, %v1913
        %2089 = vadd.xlane.f32.xlu0 %v2088
        %v2090 = vpop.xlane.xlu0 %2089
        %v2091 = vadd.f32 %v1914, %v1915
        %v2092 = vadd.f32 %v2091, %v1916
        %v2093 = vadd.f32 %v2092, %v1917
        %2094 = vadd.xlane.f32.xlu0 %v2093
        %v2095 = vpop.xlane.xlu0 %2094
        %v2096 = vadd.f32 %v1918, %v1919
        %v2097 = vadd.f32 %v2096, %v1920
        %v2098 = vadd.f32 %v2097, %v1921
        %2099 = vadd.xlane.f32.xlu0 %v2098
        %v2100 = vpop.xlane.xlu0 %2099
        %v2101 = vadd.f32 %v1922, %v1923
        %v2102 = vadd.f32 %v2101, %v1924
        %v2103 = vadd.f32 %v2102, %v1925
        %2104 = vadd.xlane.f32.xlu0 %v2103
        %v2105 = vpop.xlane.xlu0 %2104
        %v2106 = vadd.f32 %v1926, %v1927
        %v2107 = vadd.f32 %v2106, %v1928
        %v2108 = vadd.f32 %v2107, %v1929
        %2109 = vadd.xlane.f32.xlu0 %v2108
        %v2110 = vpop.xlane.xlu0 %2109
        %v2111 = vadd.f32 %v1930, %v1931
        %v2112 = vadd.f32 %v2111, %v1932
        %v2113 = vadd.f32 %v2112, %v1933
        %2114 = vadd.xlane.f32.xlu0 %v2113
        %v2115 = vpop.xlane.xlu0 %2114
        %v2116 = vadd.f32 %v1934, %v1935
        %v2117 = vadd.f32 %v2116, %v1936
        %v2118 = vadd.f32 %v2117, %v1937
        %2119 = vadd.xlane.f32.xlu0 %v2118
        %v2120 = vpop.xlane.xlu0 %2119
        %v2121 = vadd.f32 %v1938, %v1939
        %v2122 = vadd.f32 %v2121, %v1940
        %v2123 = vadd.f32 %v2122, %v1941
        %2124 = vadd.xlane.f32.xlu0 %v2123
        %v2125 = vpop.xlane.xlu0 %2124
        %v2126 = vadd.f32 %v1942, %v1943
        %v2127 = vadd.f32 %v2126, %v1944
        %v2128 = vadd.f32 %v2127, %v1945
        %2129 = vadd.xlane.f32.xlu0 %v2128
        %v2130 = vpop.xlane.xlu0 %2129
        %v2131 = vadd.f32 %v1946, %v1947
        %v2132 = vadd.f32 %v2131, %v1948
        %v2133 = vadd.f32 %v2132, %v1949
        %2134 = vadd.xlane.f32.xlu0 %v2133
        %v2135 = vpop.xlane.xlu0 %2134
        %v2136 = vadd.f32 %v1950, %v1951
        %v2137 = vadd.f32 %v2136, %v1952
        %v2138 = vadd.f32 %v2137, %v1953
        %2139 = vadd.xlane.f32.xlu0 %v2138
        %v2140 = vpop.xlane.xlu0 %2139
        %v2141 = vadd.f32 %v1954, %v1955
        %v2142 = vadd.f32 %v2141, %v1956
        %v2143 = vadd.f32 %v2142, %v1957
        %2144 = vadd.xlane.f32.xlu0 %v2143
        %v2145 = vpop.xlane.xlu0 %2144
        %v2146 = vadd.f32 %v1958, %v1959
        %v2147 = vadd.f32 %v2146, %v1960
        %v2148 = vadd.f32 %v2147, %v1961
        %2149 = vadd.xlane.f32.xlu0 %v2148
        %v2150 = vpop.xlane.xlu0 %2149
        %v2151 = vadd.f32 %v1962, %v1963
        %v2152 = vadd.f32 %v2151, %v1964
        %v2153 = vadd.f32 %v2152, %v1965
        %2154 = vadd.xlane.f32.xlu0 %v2153
        %v2155 = vpop.xlane.xlu0 %2154
        %v2156 = vadd.f32 %v1966, %v1967
        %v2157 = vadd.f32 %v2156, %v1968
        %v2158 = vadd.f32 %v2157, %v1969
        %2159 = vadd.xlane.f32.xlu0 %v2158
        %v2160 = vpop.xlane.xlu0 %2159
        %v2161 = vadd.f32 %v1970, %v1971
        %v2162 = vadd.f32 %v2161, %v1972
        %v2163 = vadd.f32 %v2162, %v1973
        %2164 = vadd.xlane.f32.xlu0 %v2163
        %v2165 = vpop.xlane.xlu0 %2164
        %v2166 = vadd.f32 %v1974, %v1975
        %v2167 = vadd.f32 %v2166, %v1976
        %v2168 = vadd.f32 %v2167, %v1977
        %2169 = vadd.xlane.f32.xlu0 %v2168
        %v2170 = vpop.xlane.xlu0 %2169
        %v2171 = vadd.f32 %v1978, %v1979
        %v2172 = vadd.f32 %v2171, %v1980
        %v2173 = vadd.f32 %v2172, %v1981
        %2174 = vadd.xlane.f32.xlu0 %v2173
        %v2175 = vpop.xlane.xlu0 %2174
        %v2176 = vadd.f32 %v1982, %v1983
        %v2177 = vadd.f32 %v2176, %v1984
        %v2178 = vadd.f32 %v2177, %v1985
        %2179 = vadd.xlane.f32.xlu0 %v2178
        %v2180 = vpop.xlane.xlu0 %2179
        %v2181 = vadd.f32 %v1986, %v1987
        %v2182 = vadd.f32 %v2181, %v1988
        %v2183 = vadd.f32 %v2182, %v1989
        %2184 = vadd.xlane.f32.xlu0 %v2183
        %v2185 = vpop.xlane.xlu0 %2184
        %v2186 = vadd.f32 %v1990, %v1991
        %v2187 = vadd.f32 %v2186, %v1992
        %v2188 = vadd.f32 %v2187, %v1993
        %2189 = vadd.xlane.f32.xlu0 %v2188
        %v2190 = vpop.xlane.xlu0 %2189
        %v2191 = vadd.f32 %v1994, %v1995
        %v2192 = vadd.f32 %v2191, %v1996
        %v2193 = vadd.f32 %v2192, %v1997
        %2194 = vadd.xlane.f32.xlu0 %v2193
        %v2195 = vpop.xlane.xlu0 %2194
        %v2196 = vadd.f32 %v1998, %v1999
        %v2197 = vadd.f32 %v2196, %v2000
        %v2198 = vadd.f32 %v2197, %v2001
        %2199 = vadd.xlane.f32.xlu0 %v2198
        %v2200 = vpop.xlane.xlu0 %2199
        %v2201 = vadd.f32 %v2002, %v2003
        %v2202 = vadd.f32 %v2201, %v2004
        %v2203 = vadd.f32 %v2202, %v2005
        %2204 = vadd.xlane.f32.xlu0 %v2203
        %v2205 = vpop.xlane.xlu0 %2204
        %v2206 = vadd.f32 %v2006, %v2007
        %v2207 = vadd.f32 %v2206, %v2008
        %v2208 = vadd.f32 %v2207, %v2009
        %2209 = vadd.xlane.f32.xlu0 %v2208
        %v2210 = vpop.xlane.xlu0 %2209
        %v2211 = vadd.f32 %v2010, %v2011
        %v2212 = vadd.f32 %v2211, %v2012
        %v2213 = vadd.f32 %v2212, %v2013
        %2214 = vadd.xlane.f32.xlu0 %v2213
        %v2215 = vpop.xlane.xlu0 %2214
        %v2216 = vadd.f32 %v2014, %v2015
        %v2217 = vadd.f32 %v2216, %v2016
        %v2218 = vadd.f32 %v2217, %v2017
        %2219 = vadd.xlane.f32.xlu0 %v2218
        %v2220 = vpop.xlane.xlu0 %2219
        %v2221 = vadd.f32 %v2018, %v2019
        %v2222 = vadd.f32 %v2221, %v2020
        %v2223 = vadd.f32 %v2222, %v2021
        %2224 = vadd.xlane.f32.xlu0 %v2223
        %v2225 = vpop.xlane.xlu0 %2224
        %v2226 = vadd.f32 %v2022, %v2023
        %v2227 = vadd.f32 %v2226, %v2024
        %v2228 = vadd.f32 %v2227, %v2025
        %2229 = vadd.xlane.f32.xlu0 %v2228
        %v2230 = vpop.xlane.xlu0 %2229
        %v2231 = vadd.f32 %v2026, %v2027
        %v2232 = vadd.f32 %v2231, %v2028
        %v2233 = vadd.f32 %v2232, %v2029
        %2234 = vadd.xlane.f32.xlu0 %v2233
        %v2235 = vpop.xlane.xlu0 %2234
        %v2236 = vadd.f32 %v2030, %v2031
        %v2237 = vadd.f32 %v2236, %v2032
        %v2238 = vadd.f32 %v2237, %v2033
        %2239 = vadd.xlane.f32.xlu0 %v2238
        %v2240 = vpop.xlane.xlu0 %2239
        %v2241 = vadd.f32 %v2034, %v2035
        %v2242 = vadd.f32 %v2241, %v2036
        %v2243 = vadd.f32 %v2242, %v2037
        %2244 = vadd.xlane.f32.xlu0 %v2243
        %v2245 = vpop.xlane.xlu0 %2244
        %v2246 = vadd.f32 %v2038, %v2039
        %v2247 = vadd.f32 %v2246, %v2040
        %v2248 = vadd.f32 %v2247, %v2041
        %2249 = vadd.xlane.f32.xlu0 %v2248
        %v2250 = vpop.xlane.xlu0 %2249
        %v2251 = vadd.f32 %v2042, %v2043
        %v2252 = vadd.f32 %v2251, %v2044
        %v2253 = vadd.f32 %v2252, %v2045
        %2254 = vadd.xlane.f32.xlu0 %v2253
        %v2255 = vpop.xlane.xlu0 %2254
        %v2256 = vadd.f32 %v2046, %v2047
        %v2257 = vadd.f32 %v2256, %v2048
        %v2258 = vadd.f32 %v2257, %v2049
        %2259 = vadd.xlane.f32.xlu0 %v2258
        %v2260 = vpop.xlane.xlu0 %2259
        %v2261 = vadd.f32 %v2050, %v2051
        %v2262 = vadd.f32 %v2261, %v2052
        %v2263 = vadd.f32 %v2262, %v2053
        %2264 = vadd.xlane.f32.xlu0 %v2263
        %v2265 = vpop.xlane.xlu0 %2264
        %v2266 = vadd.f32 %v2054, %v2055
        %v2267 = vadd.f32 %v2266, %v2056
        %v2268 = vadd.f32 %v2267, %v2057
        %2269 = vadd.xlane.f32.xlu0 %v2268
        %v2270 = vpop.xlane.xlu0 %2269
        %v2271 = vadd.f32 %v2058, %v2059
        %v2272 = vadd.f32 %v2271, %v2060
        %v2273 = vadd.f32 %v2272, %v2061
        %2274 = vadd.xlane.f32.xlu0 %v2273
        %v2275 = vpop.xlane.xlu0 %2274
        %v2276 = vadd.f32 %v2062, %v2063
        %v2277 = vadd.f32 %v2276, %v2064
        %v2278 = vadd.f32 %v2277, %v2065
        %2279 = vadd.xlane.f32.xlu0 %v2278
        %v2280 = vpop.xlane.xlu0 %2279
        %v2281 = vadd.f32 %v2066, %v2067
        %v2282 = vadd.f32 %v2281, %v2068
        %v2283 = vadd.f32 %v2282, %v2069
        %2284 = vadd.xlane.f32.xlu0 %v2283
        %v2285 = vpop.xlane.xlu0 %2284
        %v2286 = vadd.f32 %v2070, %v2071
        %v2287 = vadd.f32 %v2286, %v2072
        %v2288 = vadd.f32 %v2287, %v2073
        %2289 = vadd.xlane.f32.xlu0 %v2288
        %v2290 = vpop.xlane.xlu0 %2289
        %v2291 = vadd.f32 %v2074, %v2075
        %v2292 = vadd.f32 %v2291, %v2076
        %v2293 = vadd.f32 %v2292, %v2077
        %2294 = vadd.xlane.f32.xlu0 %v2293
        %v2295 = vpop.xlane.xlu0 %2294
        %v2296 = vadd.f32 %v2078, %v2079
        %v2297 = vadd.f32 %v2296, %v2080
        %v2298 = vadd.f32 %v2297, %v2081
        %2299 = vadd.xlane.f32.xlu0 %v2298
        %v2300 = vpop.xlane.xlu0 %2299
        %v2301 = vadd.f32 %v2082, %v2083
        %v2302 = vadd.f32 %v2301, %v2084
        %v2303 = vadd.f32 %v2302, %v2085
        %2304 = vadd.xlane.f32.xlu0 %v2303
        %v2305 = vpop.xlane.xlu0 %2304
        %v2306 = vadd.f32 %v1866, %v2090
        %v2307 = vadd.f32 %v1867, %v2095
        %v2308 = vadd.f32 %v1868, %v2100
        %v2309 = vadd.f32 %v1869, %v2105
        %v2310 = vadd.f32 %v1870, %v2110
        %v2311 = vadd.f32 %v1871, %v2115
        %v2312 = vadd.f32 %v1872, %v2120
        %v2313 = vadd.f32 %v1873, %v2125
        %v2314 = vadd.f32 %v1874, %v2130
        %v2315 = vadd.f32 %v1875, %v2135
        %v2316 = vadd.f32 %v1876, %v2140
        %v2317 = vadd.f32 %v1877, %v2145
        %v2318 = vadd.f32 %v1878, %v2150
        %v2319 = vadd.f32 %v1879, %v2155
        %v2320 = vadd.f32 %v1880, %v2160
        %v2321 = vadd.f32 %v1881, %v2165
        %v2322 = vadd.f32 %v1882, %v2170
        %v2323 = vadd.f32 %v1883, %v2175
        %v2324 = vadd.f32 %v1884, %v2180
        %v2325 = vadd.f32 %v1885, %v2185
        %v2326 = vadd.f32 %v1886, %v2190
        %v2327 = vadd.f32 %v1887, %v2195
        %v2328 = vadd.f32 %v1888, %v2200
        %v2329 = vadd.f32 %v1889, %v2205
        %v2330 = vadd.f32 %v1890, %v2210
        %v2331 = vadd.f32 %v1891, %v2215
        %v2332 = vadd.f32 %v1892, %v2220
        %v2333 = vadd.f32 %v1893, %v2225
        %v2334 = vadd.f32 %v1894, %v2230
        %v2335 = vadd.f32 %v1895, %v2235
        %v2336 = vadd.f32 %v1896, %v2240
        %v2337 = vadd.f32 %v1897, %v2245
        %v2338 = vadd.f32 %v1898, %v2250
        %v2339 = vadd.f32 %v1899, %v2255
        %v2340 = vadd.f32 %v1900, %v2260
        %v2341 = vadd.f32 %v1901, %v2265
        %v2342 = vadd.f32 %v1902, %v2270
        %v2343 = vadd.f32 %v1903, %v2275
        %v2344 = vadd.f32 %v1904, %v2280
        %v2345 = vadd.f32 %v1905, %v2285
        %v2346 = vadd.f32 %v1906, %v2290
        %v2347 = vadd.f32 %v1907, %v2295
        %v2348 = vadd.f32 %v1908, %v2300
        %v2349 = vadd.f32 %v1909, %v2305
        %2350 = vst.msk [vmem:[#allocation3] sm:$0xff] %vm1821, %v2306
        %2351 = vst.msk [vmem:[#allocation3 + $0x8] sm:$0xff] %vm1821, %v2307
        %2352 = vst.msk [vmem:[#allocation3 + $0x10] sm:$0xff] %vm1821, %v2308
        %2353 = vst.msk [vmem:[#allocation3 + $0x18] sm:$0xff] %vm1821, %v2309
        %2354 = vst.msk [vmem:[#allocation3 + $0x20] sm:$0xff] %vm1821, %v2310
        %2355 = vst.msk [vmem:[#allocation3 + $0x28] sm:$0xff] %vm1821, %v2311
        %2356 = vst.msk [vmem:[#allocation3 + $0x30] sm:$0xff] %vm1821, %v2312
        %2357 = vst.msk [vmem:[#allocation3 + $0x38] sm:$0xff] %vm1821, %v2313
        %2358 = vst.msk [vmem:[#allocation3 + $0x40] sm:$0xff] %vm1821, %v2314
        %2359 = vst.msk [vmem:[#allocation3 + $0x48] sm:$0xff] %vm1821, %v2315
        %2360 = vst.msk [vmem:[#allocation3 + $0x50] sm:$0xff] %vm1821, %v2316
        %2361 = vst.msk [vmem:[#allocation3 + $0x58] sm:$0xff] %vm1821, %v2317
        %2362 = vst.msk [vmem:[#allocation3 + $0x60] sm:$0xff] %vm1821, %v2318
        %2363 = vst.msk [vmem:[#allocation3 + $0x68] sm:$0xff] %vm1821, %v2319
        %2364 = vst.msk [vmem:[#allocation3 + $0x70] sm:$0xff] %vm1821, %v2320
        %2365 = vst.msk [vmem:[#allocation3 + $0x78] sm:$0xff] %vm1821, %v2321
        %2366 = vst.msk [vmem:[#allocation3 + $0x80] sm:$0xff] %vm1821, %v2322
        %2367 = vst.msk [vmem:[#allocation3 + $0x88] sm:$0xff] %vm1821, %v2323
        %2368 = vst.msk [vmem:[#allocation3 + $0x90] sm:$0xff] %vm1821, %v2324
        %2369 = vst.msk [vmem:[#allocation3 + $0x98] sm:$0xff] %vm1821, %v2325
        %2370 = vst.msk [vmem:[#allocation3 + $0xa0] sm:$0xff] %vm1821, %v2326
        %2371 = vst.msk [vmem:[#allocation3 + $0xa8] sm:$0xff] %vm1821, %v2327
        %2372 = vst.msk [vmem:[#allocation3 + $0xb0] sm:$0xff] %vm1821, %v2328
        %2373 = vst.msk [vmem:[#allocation3 + $0xb8] sm:$0xff] %vm1821, %v2329
        %2374 = vst.msk [vmem:[#allocation3 + $0xc0] sm:$0xff] %vm1821, %v2330
        %2375 = vst.msk [vmem:[#allocation3 + $0xc8] sm:$0xff] %vm1821, %v2331
        %2376 = vst.msk [vmem:[#allocation3 + $0xd0] sm:$0xff] %vm1821, %v2332
        %2377 = vst.msk [vmem:[#allocation3 + $0xd8] sm:$0xff] %vm1821, %v2333
        %2378 = vst.msk [vmem:[#allocation3 + $0xe0] sm:$0xff] %vm1821, %v2334
        %2379 = vst.msk [vmem:[#allocation3 + $0xe8] sm:$0xff] %vm1821, %v2335
        %2380 = vst.msk [vmem:[#allocation3 + $0xf0] sm:$0xff] %vm1821, %v2336
        %2381 = vst.msk [vmem:[#allocation3 + $0xf8] sm:$0xff] %vm1821, %v2337
        %2382 = vst.msk [vmem:[#allocation3 + $0x100] sm:$0xff] %vm1821, %v2338
        %2383 = vst.msk [vmem:[#allocation3 + $0x108] sm:$0xff] %vm1821, %v2339
        %2384 = vst.msk [vmem:[#allocation3 + $0x110] sm:$0xff] %vm1821, %v2340
        %2385 = vst.msk [vmem:[#allocation3 + $0x118] sm:$0xff] %vm1821, %v2341
        %2386 = vst.msk [vmem:[#allocation3 + $0x120] sm:$0xff] %vm1821, %v2342
        %2387 = vst.msk [vmem:[#allocation3 + $0x128] sm:$0xff] %vm1821, %v2343
        %2388 = vst.msk [vmem:[#allocation3 + $0x130] sm:$0xff] %vm1821, %v2344
        %2389 = vst.msk [vmem:[#allocation3 + $0x138] sm:$0xff] %vm1821, %v2345
        %2390 = vst.msk [vmem:[#allocation3 + $0x140] sm:$0xff] %vm1821, %v2346
        %2391 = vst.msk [vmem:[#allocation3 + $0x148] sm:$0xff] %vm1821, %v2347
        %2392 = vst.msk [vmem:[#allocation3 + $0x150] sm:$0xff] %vm1821, %v2348
        %2393 = vst.msk [vmem:[#allocation3 + $0x158] sm:$0xff] %vm1821, %v2349
        %p2394 = scmp.eq.s32.totalorder %s21, 1
        %p2395 = pnand %p1051, %p2394
        %p2396 = pneg %p2395
        // Predicated region
        $region103: #{tpu_custom_call.1} parent=93 // pred_check
          _
        $region104: #{tpu_custom_call.1} parent=93 // pred_check_branch
          %2398 = sbr.rel (%p2395) target = $region106
        $region105: #{tpu_custom_call.1} parent=93 // pred_region
          %v2399 = vld [vmem:[#allocation2] sm:$0xff]
          %v2400 = vld [vmem:[#allocation2 + $0x8] sm:$0xff]
          %v2401 = vld [vmem:[#allocation2 + $0x10] sm:$0xff]
          %v2402 = vld [vmem:[#allocation2 + $0x18] sm:$0xff]
          %v2403 = vld [vmem:[#allocation2 + $0x20] sm:$0xff]
          %v2404 = vld [vmem:[#allocation2 + $0x28] sm:$0xff]
          %v2405 = vld [vmem:[#allocation2 + $0x30] sm:$0xff]
          %v2406 = vld [vmem:[#allocation2 + $0x38] sm:$0xff]
          %v2407 = vld [vmem:[#allocation2 + $0x40] sm:$0xff]
          %v2408 = vld [vmem:[#allocation2 + $0x48] sm:$0xff]
          %v2409 = vld [vmem:[#allocation2 + $0x50] sm:$0xff]
          %v2410 = vld [vmem:[#allocation2 + $0x58] sm:$0xff]
          %v2411 = vld [vmem:[#allocation2 + $0x60] sm:$0xff]
          %v2412 = vld [vmem:[#allocation2 + $0x68] sm:$0xff]
          %v2413 = vld [vmem:[#allocation2 + $0x70] sm:$0xff]
          %v2414 = vld [vmem:[#allocation2 + $0x78] sm:$0xff]
          %v2415 = vld [vmem:[#allocation2 + $0x80] sm:$0xff]
          %v2416 = vld [vmem:[#allocation2 + $0x88] sm:$0xff]
          %v2417 = vld [vmem:[#allocation2 + $0x90] sm:$0xff]
          %v2418 = vld [vmem:[#allocation2 + $0x98] sm:$0xff]
          %v2419 = vld [vmem:[#allocation2 + $0xa0] sm:$0xff]
          %v2420 = vld [vmem:[#allocation2 + $0xa8] sm:$0xff]
          %v2421 = vld [vmem:[#allocation2 + $0xb0] sm:$0xff]
          %v2422 = vld [vmem:[#allocation2 + $0xb8] sm:$0xff]
          %v2423 = vld [vmem:[#allocation2 + $0xc0] sm:$0xff]
          %v2424 = vld [vmem:[#allocation2 + $0xc8] sm:$0xff]
          %v2425 = vld [vmem:[#allocation2 + $0xd0] sm:$0xff]
          %v2426 = vld [vmem:[#allocation2 + $0xd8] sm:$0xff]
          %v2427 = vld [vmem:[#allocation2 + $0xe0] sm:$0xff]
          %v2428 = vld [vmem:[#allocation2 + $0xe8] sm:$0xff]
          %v2429 = vld [vmem:[#allocation2 + $0xf0] sm:$0xff]
          %v2430 = vld [vmem:[#allocation2 + $0xf8] sm:$0xff]
          %v2431 = vld [vmem:[#allocation2 + $0x100] sm:$0xff]
          %v2432 = vld [vmem:[#allocation2 + $0x108] sm:$0xff]
          %v2433 = vld [vmem:[#allocation2 + $0x110] sm:$0xff]
          %v2434 = vld [vmem:[#allocation2 + $0x118] sm:$0xff]
          %v2435 = vld [vmem:[#allocation2 + $0x120] sm:$0xff]
          %v2436 = vld [vmem:[#allocation2 + $0x128] sm:$0xff]
          %v2437 = vld [vmem:[#allocation2 + $0x130] sm:$0xff]
          %v2438 = vld [vmem:[#allocation2 + $0x138] sm:$0xff]
          %v2439 = vld [vmem:[#allocation2 + $0x140] sm:$0xff]
          %v2440 = vld [vmem:[#allocation2 + $0x148] sm:$0xff]
          %v2441 = vld [vmem:[#allocation2 + $0x150] sm:$0xff]
          %v2442 = vld [vmem:[#allocation2 + $0x158] sm:$0xff]
          %v2443 = vmul.f32 %v2399, 0.0012755102
          %v2444 = vmul.f32 %v2400, 0.0012755102
          %v2445 = vmul.f32 %v2401, 0.0012755102
          %v2446 = vmul.f32 %v2402, 0.0012755102
          %v2447 = vmul.f32 %v2403, 0.0012755102
          %v2448 = vmul.f32 %v2404, 0.0012755102
          %v2449 = vmul.f32 %v2405, 0.0012755102
          %v2450 = vmul.f32 %v2406, 0.0012755102
          %v2451 = vmul.f32 %v2407, 0.0012755102
          %v2452 = vmul.f32 %v2408, 0.0012755102
          %v2453 = vmul.f32 %v2409, 0.0012755102
          %v2454 = vmul.f32 %v2410, 0.0012755102
          %v2455 = vmul.f32 %v2411, 0.0012755102
          %v2456 = vmul.f32 %v2412, 0.0012755102
          %v2457 = vmul.f32 %v2413, 0.0012755102
          %v2458 = vmul.f32 %v2414, 0.0012755102
          %v2459 = vmul.f32 %v2415, 0.0012755102
          %v2460 = vmul.f32 %v2416, 0.0012755102
          %v2461 = vmul.f32 %v2417, 0.0012755102
          %v2462 = vmul.f32 %v2418, 0.0012755102
          %v2463 = vmul.f32 %v2419, 0.0012755102
          %v2464 = vmul.f32 %v2420, 0.0012755102
          %v2465 = vmul.f32 %v2421, 0.0012755102
          %v2466 = vmul.f32 %v2422, 0.0012755102
          %v2467 = vmul.f32 %v2423, 0.0012755102
          %v2468 = vmul.f32 %v2424, 0.0012755102
          %v2469 = vmul.f32 %v2425, 0.0012755102
          %v2470 = vmul.f32 %v2426, 0.0012755102
          %v2471 = vmul.f32 %v2427, 0.0012755102
          %v2472 = vmul.f32 %v2428, 0.0012755102
          %v2473 = vmul.f32 %v2429, 0.0012755102
          %v2474 = vmul.f32 %v2430, 0.0012755102
          %v2475 = vmul.f32 %v2431, 0.0012755102
          %v2476 = vmul.f32 %v2432, 0.0012755102
          %v2477 = vmul.f32 %v2433, 0.0012755102
          %v2478 = vmul.f32 %v2434, 0.0012755102
          %v2479 = vmul.f32 %v2435, 0.0012755102
          %v2480 = vmul.f32 %v2436, 0.0012755102
          %v2481 = vmul.f32 %v2437, 0.0012755102
          %v2482 = vmul.f32 %v2438, 0.0012755102
          %v2483 = vmul.f32 %v2439, 0.0012755102
          %v2484 = vmul.f32 %v2440, 0.0012755102
          %v2485 = vmul.f32 %v2441, 0.0012755102
          %v2486 = vmul.f32 %v2442, 0.0012755102
          %v2487 = vld [vmem:[#allocation3] sm:$0xff]
          %v2488 = vld [vmem:[#allocation3 + $0x8] sm:$0xff]
          %v2489 = vld [vmem:[#allocation3 + $0x10] sm:$0xff]
          %v2490 = vld [vmem:[#allocation3 + $0x18] sm:$0xff]
          %v2491 = vld [vmem:[#allocation3 + $0x20] sm:$0xff]
          %v2492 = vld [vmem:[#allocation3 + $0x28] sm:$0xff]
          %v2493 = vld [vmem:[#allocation3 + $0x30] sm:$0xff]
          %v2494 = vld [vmem:[#allocation3 + $0x38] sm:$0xff]
          %v2495 = vld [vmem:[#allocation3 + $0x40] sm:$0xff]
          %v2496 = vld [vmem:[#allocation3 + $0x48] sm:$0xff]
          %v2497 = vld [vmem:[#allocation3 + $0x50] sm:$0xff]
          %v2498 = vld [vmem:[#allocation3 + $0x58] sm:$0xff]
          %v2499 = vld [vmem:[#allocation3 + $0x60] sm:$0xff]
          %v2500 = vld [vmem:[#allocation3 + $0x68] sm:$0xff]
          %v2501 = vld [vmem:[#allocation3 + $0x70] sm:$0xff]
          %v2502 = vld [vmem:[#allocation3 + $0x78] sm:$0xff]
          %v2503 = vld [vmem:[#allocation3 + $0x80] sm:$0xff]
          %v2504 = vld [vmem:[#allocation3 + $0x88] sm:$0xff]
          %v2505 = vld [vmem:[#allocation3 + $0x90] sm:$0xff]
          %v2506 = vld [vmem:[#allocation3 + $0x98] sm:$0xff]
          %v2507 = vld [vmem:[#allocation3 + $0xa0] sm:$0xff]
          %v2508 = vld [vmem:[#allocation3 + $0xa8] sm:$0xff]
          %v2509 = vld [vmem:[#allocation3 + $0xb0] sm:$0xff]
          %v2510 = vld [vmem:[#allocation3 + $0xb8] sm:$0xff]
          %v2511 = vld [vmem:[#allocation3 + $0xc0] sm:$0xff]
          %v2512 = vld [vmem:[#allocation3 + $0xc8] sm:$0xff]
          %v2513 = vld [vmem:[#allocation3 + $0xd0] sm:$0xff]
          %v2514 = vld [vmem:[#allocation3 + $0xd8] sm:$0xff]
          %v2515 = vld [vmem:[#allocation3 + $0xe0] sm:$0xff]
          %v2516 = vld [vmem:[#allocation3 + $0xe8] sm:$0xff]
          %v2517 = vld [vmem:[#allocation3 + $0xf0] sm:$0xff]
          %v2518 = vld [vmem:[#allocation3 + $0xf8] sm:$0xff]
          %v2519 = vld [vmem:[#allocation3 + $0x100] sm:$0xff]
          %v2520 = vld [vmem:[#allocation3 + $0x108] sm:$0xff]
          %v2521 = vld [vmem:[#allocation3 + $0x110] sm:$0xff]
          %v2522 = vld [vmem:[#allocation3 + $0x118] sm:$0xff]
          %v2523 = vld [vmem:[#allocation3 + $0x120] sm:$0xff]
          %v2524 = vld [vmem:[#allocation3 + $0x128] sm:$0xff]
          %v2525 = vld [vmem:[#allocation3 + $0x130] sm:$0xff]
          %v2526 = vld [vmem:[#allocation3 + $0x138] sm:$0xff]
          %v2527 = vld [vmem:[#allocation3 + $0x140] sm:$0xff]
          %v2528 = vld [vmem:[#allocation3 + $0x148] sm:$0xff]
          %v2529 = vld [vmem:[#allocation3 + $0x150] sm:$0xff]
          %v2530 = vld [vmem:[#allocation3 + $0x158] sm:$0xff]
          %v2531 = vmul.f32 %v2487, 0.0012755102
          %v2532 = vmul.f32 %v2488, 0.0012755102
          %v2533 = vmul.f32 %v2489, 0.0012755102
          %v2534 = vmul.f32 %v2490, 0.0012755102
          %v2535 = vmul.f32 %v2491, 0.0012755102
          %v2536 = vmul.f32 %v2492, 0.0012755102
          %v2537 = vmul.f32 %v2493, 0.0012755102
          %v2538 = vmul.f32 %v2494, 0.0012755102
          %v2539 = vmul.f32 %v2495, 0.0012755102
          %v2540 = vmul.f32 %v2496, 0.0012755102
          %v2541 = vmul.f32 %v2497, 0.0012755102
          %v2542 = vmul.f32 %v2498, 0.0012755102
          %v2543 = vmul.f32 %v2499, 0.0012755102
          %v2544 = vmul.f32 %v2500, 0.0012755102
          %v2545 = vmul.f32 %v2501, 0.0012755102
          %v2546 = vmul.f32 %v2502, 0.0012755102
          %v2547 = vmul.f32 %v2503, 0.0012755102
          %v2548 = vmul.f32 %v2504, 0.0012755102
          %v2549 = vmul.f32 %v2505, 0.0012755102
          %v2550 = vmul.f32 %v2506, 0.0012755102
          %v2551 = vmul.f32 %v2507, 0.0012755102
          %v2552 = vmul.f32 %v2508, 0.0012755102
          %v2553 = vmul.f32 %v2509, 0.0012755102
          %v2554 = vmul.f32 %v2510, 0.0012755102
          %v2555 = vmul.f32 %v2511, 0.0012755102
          %v2556 = vmul.f32 %v2512, 0.0012755102
          %v2557 = vmul.f32 %v2513, 0.0012755102
          %v2558 = vmul.f32 %v2514, 0.0012755102
          %v2559 = vmul.f32 %v2515, 0.0012755102
          %v2560 = vmul.f32 %v2516, 0.0012755102
          %v2561 = vmul.f32 %v2517, 0.0012755102
          %v2562 = vmul.f32 %v2518, 0.0012755102
          %v2563 = vmul.f32 %v2519, 0.0012755102
          %v2564 = vmul.f32 %v2520, 0.0012755102
          %v2565 = vmul.f32 %v2521, 0.0012755102
          %v2566 = vmul.f32 %v2522, 0.0012755102
          %v2567 = vmul.f32 %v2523, 0.0012755102
          %v2568 = vmul.f32 %v2524, 0.0012755102
          %v2569 = vmul.f32 %v2525, 0.0012755102
          %v2570 = vmul.f32 %v2526, 0.0012755102
          %v2571 = vmul.f32 %v2527, 0.0012755102
          %v2572 = vmul.f32 %v2528, 0.0012755102
          %v2573 = vmul.f32 %v2529, 0.0012755102
          %v2574 = vmul.f32 %v2530, 0.0012755102
          %v2575 = vmul.f32 %v2443, %v2443
          %v2576 = vmul.f32 %v2444, %v2444
          %v2577 = vmul.f32 %v2445, %v2445
          %v2578 = vmul.f32 %v2446, %v2446
          %v2579 = vmul.f32 %v2447, %v2447
          %v2580 = vmul.f32 %v2448, %v2448
          %v2581 = vmul.f32 %v2449, %v2449
          %v2582 = vmul.f32 %v2450, %v2450
          %v2583 = vmul.f32 %v2451, %v2451
          %v2584 = vmul.f32 %v2452, %v2452
          %v2585 = vmul.f32 %v2453, %v2453
          %v2586 = vmul.f32 %v2454, %v2454
          %v2587 = vmul.f32 %v2455, %v2455
          %v2588 = vmul.f32 %v2456, %v2456
          %v2589 = vmul.f32 %v2457, %v2457
          %v2590 = vmul.f32 %v2458, %v2458
          %v2591 = vmul.f32 %v2459, %v2459
          %v2592 = vmul.f32 %v2460, %v2460
          %v2593 = vmul.f32 %v2461, %v2461
          %v2594 = vmul.f32 %v2462, %v2462
          %v2595 = vmul.f32 %v2463, %v2463
          %v2596 = vmul.f32 %v2464, %v2464
          %v2597 = vmul.f32 %v2465, %v2465
          %v2598 = vmul.f32 %v2466, %v2466
          %v2599 = vmul.f32 %v2467, %v2467
          %v2600 = vmul.f32 %v2468, %v2468
          %v2601 = vmul.f32 %v2469, %v2469
          %v2602 = vmul.f32 %v2470, %v2470
          %v2603 = vmul.f32 %v2471, %v2471
          %v2604 = vmul.f32 %v2472, %v2472
          %v2605 = vmul.f32 %v2473, %v2473
          %v2606 = vmul.f32 %v2474, %v2474
          %v2607 = vmul.f32 %v2475, %v2475
          %v2608 = vmul.f32 %v2476, %v2476
          %v2609 = vmul.f32 %v2477, %v2477
          %v2610 = vmul.f32 %v2478, %v2478
          %v2611 = vmul.f32 %v2479, %v2479
          %v2612 = vmul.f32 %v2480, %v2480
          %v2613 = vmul.f32 %v2481, %v2481
          %v2614 = vmul.f32 %v2482, %v2482
          %v2615 = vmul.f32 %v2483, %v2483
          %v2616 = vmul.f32 %v2484, %v2484
          %v2617 = vmul.f32 %v2485, %v2485
          %v2618 = vmul.f32 %v2486, %v2486
          %v2619 = vsub.f32 %v2531, %v2575
          %v2620 = vsub.f32 %v2532, %v2576
          %v2621 = vsub.f32 %v2533, %v2577
          %v2622 = vsub.f32 %v2534, %v2578
          %v2623 = vsub.f32 %v2535, %v2579
          %v2624 = vsub.f32 %v2536, %v2580
          %v2625 = vsub.f32 %v2537, %v2581
          %v2626 = vsub.f32 %v2538, %v2582
          %v2627 = vsub.f32 %v2539, %v2583
          %v2628 = vsub.f32 %v2540, %v2584
          %v2629 = vsub.f32 %v2541, %v2585
          %v2630 = vsub.f32 %v2542, %v2586
          %v2631 = vsub.f32 %v2543, %v2587
          %v2632 = vsub.f32 %v2544, %v2588
          %v2633 = vsub.f32 %v2545, %v2589
          %v2634 = vsub.f32 %v2546, %v2590
          %v2635 = vsub.f32 %v2547, %v2591
          %v2636 = vsub.f32 %v2548, %v2592
          %v2637 = vsub.f32 %v2549, %v2593
          %v2638 = vsub.f32 %v2550, %v2594
          %v2639 = vsub.f32 %v2551, %v2595
          %v2640 = vsub.f32 %v2552, %v2596
          %v2641 = vsub.f32 %v2553, %v2597
          %v2642 = vsub.f32 %v2554, %v2598
          %v2643 = vsub.f32 %v2555, %v2599
          %v2644 = vsub.f32 %v2556, %v2600
          %v2645 = vsub.f32 %v2557, %v2601
          %v2646 = vsub.f32 %v2558, %v2602
          %v2647 = vsub.f32 %v2559, %v2603
          %v2648 = vsub.f32 %v2560, %v2604
          %v2649 = vsub.f32 %v2561, %v2605
          %v2650 = vsub.f32 %v2562, %v2606
          %v2651 = vsub.f32 %v2563, %v2607
          %v2652 = vsub.f32 %v2564, %v2608
          %v2653 = vsub.f32 %v2565, %v2609
          %v2654 = vsub.f32 %v2566, %v2610
          %v2655 = vsub.f32 %v2567, %v2611
          %v2656 = vsub.f32 %v2568, %v2612
          %v2657 = vsub.f32 %v2569, %v2613
          %v2658 = vsub.f32 %v2570, %v2614
          %v2659 = vsub.f32 %v2571, %v2615
          %v2660 = vsub.f32 %v2572, %v2616
          %v2661 = vsub.f32 %v2573, %v2617
          %v2662 = vsub.f32 %v2574, %v2618
          %v2663 = vmax.f32 %v2619, 0.0
          %v2664 = vmax.f32 %v2620, 0.0
          %v2665 = vmax.f32 %v2621, 0.0
          %v2666 = vmax.f32 %v2622, 0.0
          %v2667 = vmax.f32 %v2623, 0.0
          %v2668 = vmax.f32 %v2624, 0.0
          %v2669 = vmax.f32 %v2625, 0.0
          %v2670 = vmax.f32 %v2626, 0.0
          %v2671 = vmax.f32 %v2627, 0.0
          %v2672 = vmax.f32 %v2628, 0.0
          %v2673 = vmax.f32 %v2629, 0.0
          %v2674 = vmax.f32 %v2630, 0.0
          %v2675 = vmax.f32 %v2631, 0.0
          %v2676 = vmax.f32 %v2632, 0.0
          %v2677 = vmax.f32 %v2633, 0.0
          %v2678 = vmax.f32 %v2634, 0.0
          %v2679 = vmax.f32 %v2635, 0.0
          %v2680 = vmax.f32 %v2636, 0.0
          %v2681 = vmax.f32 %v2637, 0.0
          %v2682 = vmax.f32 %v2638, 0.0
          %v2683 = vmax.f32 %v2639, 0.0
          %v2684 = vmax.f32 %v2640, 0.0
          %v2685 = vmax.f32 %v2641, 0.0
          %v2686 = vmax.f32 %v2642, 0.0
          %v2687 = vmax.f32 %v2643, 0.0
          %v2688 = vmax.f32 %v2644, 0.0
          %v2689 = vmax.f32 %v2645, 0.0
          %v2690 = vmax.f32 %v2646, 0.0
          %v2691 = vmax.f32 %v2647, 0.0
          %v2692 = vmax.f32 %v2648, 0.0
          %v2693 = vmax.f32 %v2649, 0.0
          %v2694 = vmax.f32 %v2650, 0.0
          %v2695 = vmax.f32 %v2651, 0.0
          %v2696 = vmax.f32 %v2652, 0.0
          %v2697 = vmax.f32 %v2653, 0.0
          %v2698 = vmax.f32 %v2654, 0.0
          %v2699 = vmax.f32 %v2655, 0.0
          %v2700 = vmax.f32 %v2656, 0.0
          %v2701 = vmax.f32 %v2657, 0.0
          %v2702 = vmax.f32 %v2658, 0.0
          %v2703 = vmax.f32 %v2659, 0.0
          %v2704 = vmax.f32 %v2660, 0.0
          %v2705 = vmax.f32 %v2661, 0.0
          %v2706 = vmax.f32 %v2662, 0.0
          %v2707 = vadd.f32 %v2663, 1e-05
          %v2708 = vadd.f32 %v2664, 1e-05
          %v2709 = vadd.f32 %v2665, 1e-05
          %v2710 = vadd.f32 %v2666, 1e-05
          %v2711 = vadd.f32 %v2667, 1e-05
          %v2712 = vadd.f32 %v2668, 1e-05
          %v2713 = vadd.f32 %v2669, 1e-05
          %v2714 = vadd.f32 %v2670, 1e-05
          %v2715 = vadd.f32 %v2671, 1e-05
          %v2716 = vadd.f32 %v2672, 1e-05
          %v2717 = vadd.f32 %v2673, 1e-05
          %v2718 = vadd.f32 %v2674, 1e-05
          %v2719 = vadd.f32 %v2675, 1e-05
          %v2720 = vadd.f32 %v2676, 1e-05
          %v2721 = vadd.f32 %v2677, 1e-05
          %v2722 = vadd.f32 %v2678, 1e-05
          %v2723 = vadd.f32 %v2679, 1e-05
          %v2724 = vadd.f32 %v2680, 1e-05
          %v2725 = vadd.f32 %v2681, 1e-05
          %v2726 = vadd.f32 %v2682, 1e-05
          %v2727 = vadd.f32 %v2683, 1e-05
          %v2728 = vadd.f32 %v2684, 1e-05
          %v2729 = vadd.f32 %v2685, 1e-05
          %v2730 = vadd.f32 %v2686, 1e-05
          %v2731 = vadd.f32 %v2687, 1e-05
          %v2732 = vadd.f32 %v2688, 1e-05
          %v2733 = vadd.f32 %v2689, 1e-05
          %v2734 = vadd.f32 %v2690, 1e-05
          %v2735 = vadd.f32 %v2691, 1e-05
          %v2736 = vadd.f32 %v2692, 1e-05
          %v2737 = vadd.f32 %v2693, 1e-05
          %v2738 = vadd.f32 %v2694, 1e-05
          %v2739 = vadd.f32 %v2695, 1e-05
          %v2740 = vadd.f32 %v2696, 1e-05
          %v2741 = vadd.f32 %v2697, 1e-05
          %v2742 = vadd.f32 %v2698, 1e-05
          %v2743 = vadd.f32 %v2699, 1e-05
          %v2744 = vadd.f32 %v2700, 1e-05
          %v2745 = vadd.f32 %v2701, 1e-05
          %v2746 = vadd.f32 %v2702, 1e-05
          %v2747 = vadd.f32 %v2703, 1e-05
          %v2748 = vadd.f32 %v2704, 1e-05
          %v2749 = vadd.f32 %v2705, 1e-05
          %v2750 = vadd.f32 %v2706, 1e-05
          %v2751 = vrsqrt.pop %v2707
          %v2752 = vrsqrt.pop %v2708
          %v2753 = vrsqrt.pop %v2709
          %v2754 = vrsqrt.pop %v2710
          %v2755 = vrsqrt.pop %v2711
          %v2756 = vrsqrt.pop %v2712
          %v2757 = vrsqrt.pop %v2713
          %v2758 = vrsqrt.pop %v2714
          %v2759 = vrsqrt.pop %v2715
          %v2760 = vrsqrt.pop %v2716
          %v2761 = vrsqrt.pop %v2717
          %v2762 = vrsqrt.pop %v2718
          %v2763 = vrsqrt.pop %v2719
          %v2764 = vrsqrt.pop %v2720
          %v2765 = vrsqrt.pop %v2721
          %v2766 = vrsqrt.pop %v2722
          %v2767 = vrsqrt.pop %v2723
          %v2768 = vrsqrt.pop %v2724
          %v2769 = vrsqrt.pop %v2725
          %v2770 = vrsqrt.pop %v2726
          %v2771 = vrsqrt.pop %v2727
          %v2772 = vrsqrt.pop %v2728
          %v2773 = vrsqrt.pop %v2729
          %v2774 = vrsqrt.pop %v2730
          %v2775 = vrsqrt.pop %v2731
          %v2776 = vrsqrt.pop %v2732
          %v2777 = vrsqrt.pop %v2733
          %v2778 = vrsqrt.pop %v2734
          %v2779 = vrsqrt.pop %v2735
          %v2780 = vrsqrt.pop %v2736
          %v2781 = vrsqrt.pop %v2737
          %v2782 = vrsqrt.pop %v2738
          %v2783 = vrsqrt.pop %v2739
          %v2784 = vrsqrt.pop %v2740
          %v2785 = vrsqrt.pop %v2741
          %v2786 = vrsqrt.pop %v2742
          %v2787 = vrsqrt.pop %v2743
          %v2788 = vrsqrt.pop %v2744
          %v2789 = vrsqrt.pop %v2745
          %v2790 = vrsqrt.pop %v2746
          %v2791 = vrsqrt.pop %v2747
          %v2792 = vrsqrt.pop %v2748
          %v2793 = vrsqrt.pop %v2749
          %v2794 = vrsqrt.pop %v2750
          %v2795 = vld [vmem:[%s1] sm:$0xff]
          %v2796 = vld [vmem:[%s1 + $0x8] sm:$0xff]
          %v2797 = vld [vmem:[%s1 + $0x10] sm:$0xff]
          %v2798 = vld [vmem:[%s1 + $0x18] sm:$0xff]
          %v2799 = vld [vmem:[%s1 + $0x20] sm:$0xff]
          %v2800 = vld [vmem:[%s1 + $0x28] sm:$0xff]
          %v2801 = vld [vmem:[%s1 + $0x30] sm:$0xff]
          %v2802 = vld [vmem:[%s1 + $0x38] sm:$0xff]
          %v2803 = vld [vmem:[%s1 + $0x40] sm:$0xff]
          %v2804 = vld [vmem:[%s1 + $0x48] sm:$0xff]
          %v2805 = vld [vmem:[%s1 + $0x50] sm:$0xff]
          %v2806 = vld [vmem:[%s1 + $0x58] sm:$0xff]
          %v2807 = vld [vmem:[%s1 + $0x60] sm:$0xff]
          %v2808 = vld [vmem:[%s1 + $0x68] sm:$0xff]
          %v2809 = vld [vmem:[%s1 + $0x70] sm:$0xff]
          %v2810 = vld [vmem:[%s1 + $0x78] sm:$0xff]
          %v2811 = vld [vmem:[%s1 + $0x80] sm:$0xff]
          %v2812 = vld [vmem:[%s1 + $0x88] sm:$0xff]
          %v2813 = vld [vmem:[%s1 + $0x90] sm:$0xff]
          %v2814 = vld [vmem:[%s1 + $0x98] sm:$0xff]
          %v2815 = vld [vmem:[%s1 + $0xa0] sm:$0xff]
          %v2816 = vld [vmem:[%s1 + $0xa8] sm:$0xff]
          %v2817 = vld [vmem:[%s1 + $0xb0] sm:$0xff]
          %v2818 = vld [vmem:[%s1 + $0xb8] sm:$0xff]
          %v2819 = vld [vmem:[%s1 + $0xc0] sm:$0xff]
          %v2820 = vld [vmem:[%s1 + $0xc8] sm:$0xff]
          %v2821 = vld [vmem:[%s1 + $0xd0] sm:$0xff]
          %v2822 = vld [vmem:[%s1 + $0xd8] sm:$0xff]
          %v2823 = vld [vmem:[%s1 + $0xe0] sm:$0xff]
          %v2824 = vld [vmem:[%s1 + $0xe8] sm:$0xff]
          %v2825 = vld [vmem:[%s1 + $0xf0] sm:$0xff]
          %v2826 = vld [vmem:[%s1 + $0xf8] sm:$0xff]
          %v2827 = vld [vmem:[%s1 + $0x100] sm:$0xff]
          %v2828 = vld [vmem:[%s1 + $0x108] sm:$0xff]
          %v2829 = vld [vmem:[%s1 + $0x110] sm:$0xff]
          %v2830 = vld [vmem:[%s1 + $0x118] sm:$0xff]
          %v2831 = vld [vmem:[%s1 + $0x120] sm:$0xff]
          %v2832 = vld [vmem:[%s1 + $0x128] sm:$0xff]
          %v2833 = vld [vmem:[%s1 + $0x130] sm:$0xff]
          %v2834 = vld [vmem:[%s1 + $0x138] sm:$0xff]
          %v2835 = vld [vmem:[%s1 + $0x140] sm:$0xff]
          %v2836 = vld [vmem:[%s1 + $0x148] sm:$0xff]
          %v2837 = vld [vmem:[%s1 + $0x150] sm:$0xff]
          %v2838 = vld [vmem:[%s1 + $0x158] sm:$0xff]
          %v2839 = vmul.f32 %v2795, %v2751
          %v2840 = vmul.f32 %v2796, %v2752
          %v2841 = vmul.f32 %v2797, %v2753
          %v2842 = vmul.f32 %v2798, %v2754
          %v2843 = vmul.f32 %v2799, %v2755
          %v2844 = vmul.f32 %v2800, %v2756
          %v2845 = vmul.f32 %v2801, %v2757
          %v2846 = vmul.f32 %v2802, %v2758
          %v2847 = vmul.f32 %v2803, %v2759
          %v2848 = vmul.f32 %v2804, %v2760
          %v2849 = vmul.f32 %v2805, %v2761
          %v2850 = vmul.f32 %v2806, %v2762
          %v2851 = vmul.f32 %v2807, %v2763
          %v2852 = vmul.f32 %v2808, %v2764
          %v2853 = vmul.f32 %v2809, %v2765
          %v2854 = vmul.f32 %v2810, %v2766
          %v2855 = vmul.f32 %v2811, %v2767
          %v2856 = vmul.f32 %v2812, %v2768
          %v2857 = vmul.f32 %v2813, %v2769
          %v2858 = vmul.f32 %v2814, %v2770
          %v2859 = vmul.f32 %v2815, %v2771
          %v2860 = vmul.f32 %v2816, %v2772
          %v2861 = vmul.f32 %v2817, %v2773
          %v2862 = vmul.f32 %v2818, %v2774
          %v2863 = vmul.f32 %v2819, %v2775
          %v2864 = vmul.f32 %v2820, %v2776
          %v2865 = vmul.f32 %v2821, %v2777
          %v2866 = vmul.f32 %v2822, %v2778
          %v2867 = vmul.f32 %v2823, %v2779
          %v2868 = vmul.f32 %v2824, %v2780
          %v2869 = vmul.f32 %v2825, %v2781
          %v2870 = vmul.f32 %v2826, %v2782
          %v2871 = vmul.f32 %v2827, %v2783
          %v2872 = vmul.f32 %v2828, %v2784
          %v2873 = vmul.f32 %v2829, %v2785
          %v2874 = vmul.f32 %v2830, %v2786
          %v2875 = vmul.f32 %v2831, %v2787
          %v2876 = vmul.f32 %v2832, %v2788
          %v2877 = vmul.f32 %v2833, %v2789
          %v2878 = vmul.f32 %v2834, %v2790
          %v2879 = vmul.f32 %v2835, %v2791
          %v2880 = vmul.f32 %v2836, %v2792
          %v2881 = vmul.f32 %v2837, %v2793
          %v2882 = vmul.f32 %v2838, %v2794
          %2883 = vst.msk [vmem:[%s3] sm:$0xff] %vm1821, %v2839
          %2884 = vst.msk [vmem:[%s3 + $0x8] sm:$0xff] %vm1821, %v2840
          %2885 = vst.msk [vmem:[%s3 + $0x10] sm:$0xff] %vm1821, %v2841
          %2886 = vst.msk [vmem:[%s3 + $0x18] sm:$0xff] %vm1821, %v2842
          %2887 = vst.msk [vmem:[%s3 + $0x20] sm:$0xff] %vm1821, %v2843
          %2888 = vst.msk [vmem:[%s3 + $0x28] sm:$0xff] %vm1821, %v2844
          %2889 = vst.msk [vmem:[%s3 + $0x30] sm:$0xff] %vm1821, %v2845
          %2890 = vst.msk [vmem:[%s3 + $0x38] sm:$0xff] %vm1821, %v2846
          %2891 = vst.msk [vmem:[%s3 + $0x40] sm:$0xff] %vm1821, %v2847
          %2892 = vst.msk [vmem:[%s3 + $0x48] sm:$0xff] %vm1821, %v2848
          %2893 = vst.msk [vmem:[%s3 + $0x50] sm:$0xff] %vm1821, %v2849
          %2894 = vst.msk [vmem:[%s3 + $0x58] sm:$0xff] %vm1821, %v2850
          %2895 = vst.msk [vmem:[%s3 + $0x60] sm:$0xff] %vm1821, %v2851
          %2896 = vst.msk [vmem:[%s3 + $0x68] sm:$0xff] %vm1821, %v2852
          %2897 = vst.msk [vmem:[%s3 + $0x70] sm:$0xff] %vm1821, %v2853
          %2898 = vst.msk [vmem:[%s3 + $0x78] sm:$0xff] %vm1821, %v2854
          %2899 = vst.msk [vmem:[%s3 + $0x80] sm:$0xff] %vm1821, %v2855
          %2900 = vst.msk [vmem:[%s3 + $0x88] sm:$0xff] %vm1821, %v2856
          %2901 = vst.msk [vmem:[%s3 + $0x90] sm:$0xff] %vm1821, %v2857
          %2902 = vst.msk [vmem:[%s3 + $0x98] sm:$0xff] %vm1821, %v2858
          %2903 = vst.msk [vmem:[%s3 + $0xa0] sm:$0xff] %vm1821, %v2859
          %2904 = vst.msk [vmem:[%s3 + $0xa8] sm:$0xff] %vm1821, %v2860
          %2905 = vst.msk [vmem:[%s3 + $0xb0] sm:$0xff] %vm1821, %v2861
          %2906 = vst.msk [vmem:[%s3 + $0xb8] sm:$0xff] %vm1821, %v2862
          %2907 = vst.msk [vmem:[%s3 + $0xc0] sm:$0xff] %vm1821, %v2863
          %2908 = vst.msk [vmem:[%s3 + $0xc8] sm:$0xff] %vm1821, %v2864
          %2909 = vst.msk [vmem:[%s3 + $0xd0] sm:$0xff] %vm1821, %v2865
          %2910 = vst.msk [vmem:[%s3 + $0xd8] sm:$0xff] %vm1821, %v2866
          %2911 = vst.msk [vmem:[%s3 + $0xe0] sm:$0xff] %vm1821, %v2867
          %2912 = vst.msk [vmem:[%s3 + $0xe8] sm:$0xff] %vm1821, %v2868
          %2913 = vst.msk [vmem:[%s3 + $0xf0] sm:$0xff] %vm1821, %v2869
          %2914 = vst.msk [vmem:[%s3 + $0xf8] sm:$0xff] %vm1821, %v2870
          %2915 = vst.msk [vmem:[%s3 + $0x100] sm:$0xff] %vm1821, %v2871
          %2916 = vst.msk [vmem:[%s3 + $0x108] sm:$0xff] %vm1821, %v2872
          %2917 = vst.msk [vmem:[%s3 + $0x110] sm:$0xff] %vm1821, %v2873
          %2918 = vst.msk [vmem:[%s3 + $0x118] sm:$0xff] %vm1821, %v2874
          %2919 = vst.msk [vmem:[%s3 + $0x120] sm:$0xff] %vm1821, %v2875
          %2920 = vst.msk [vmem:[%s3 + $0x128] sm:$0xff] %vm1821, %v2876
          %2921 = vst.msk [vmem:[%s3 + $0x130] sm:$0xff] %vm1821, %v2877
          %2922 = vst.msk [vmem:[%s3 + $0x138] sm:$0xff] %vm1821, %v2878
          %2923 = vst.msk [vmem:[%s3 + $0x140] sm:$0xff] %vm1821, %v2879
          %2924 = vst.msk [vmem:[%s3 + $0x148] sm:$0xff] %vm1821, %v2880
          %2925 = vst.msk [vmem:[%s3 + $0x150] sm:$0xff] %vm1821, %v2881
          %2926 = vst.msk [vmem:[%s3 + $0x158] sm:$0xff] %vm1821, %v2882
          %v2927 = vld [vmem:[%s2] sm:$0xff]
          %v2928 = vld [vmem:[%s2 + $0x8] sm:$0xff]
          %v2929 = vld [vmem:[%s2 + $0x10] sm:$0xff]
          %v2930 = vld [vmem:[%s2 + $0x18] sm:$0xff]
          %v2931 = vld [vmem:[%s2 + $0x20] sm:$0xff]
          %v2932 = vld [vmem:[%s2 + $0x28] sm:$0xff]
          %v2933 = vld [vmem:[%s2 + $0x30] sm:$0xff]
          %v2934 = vld [vmem:[%s2 + $0x38] sm:$0xff]
          %v2935 = vld [vmem:[%s2 + $0x40] sm:$0xff]
          %v2936 = vld [vmem:[%s2 + $0x48] sm:$0xff]
          %v2937 = vld [vmem:[%s2 + $0x50] sm:$0xff]
          %v2938 = vld [vmem:[%s2 + $0x58] sm:$0xff]
          %v2939 = vld [vmem:[%s2 + $0x60] sm:$0xff]
          %v2940 = vld [vmem:[%s2 + $0x68] sm:$0xff]
          %v2941 = vld [vmem:[%s2 + $0x70] sm:$0xff]
          %v2942 = vld [vmem:[%s2 + $0x78] sm:$0xff]
          %v2943 = vld [vmem:[%s2 + $0x80] sm:$0xff]
          %v2944 = vld [vmem:[%s2 + $0x88] sm:$0xff]
          %v2945 = vld [vmem:[%s2 + $0x90] sm:$0xff]
          %v2946 = vld [vmem:[%s2 + $0x98] sm:$0xff]
          %v2947 = vld [vmem:[%s2 + $0xa0] sm:$0xff]
          %v2948 = vld [vmem:[%s2 + $0xa8] sm:$0xff]
          %v2949 = vld [vmem:[%s2 + $0xb0] sm:$0xff]
          %v2950 = vld [vmem:[%s2 + $0xb8] sm:$0xff]
          %v2951 = vld [vmem:[%s2 + $0xc0] sm:$0xff]
          %v2952 = vld [vmem:[%s2 + $0xc8] sm:$0xff]
          %v2953 = vld [vmem:[%s2 + $0xd0] sm:$0xff]
          %v2954 = vld [vmem:[%s2 + $0xd8] sm:$0xff]
          %v2955 = vld [vmem:[%s2 + $0xe0] sm:$0xff]
          %v2956 = vld [vmem:[%s2 + $0xe8] sm:$0xff]
          %v2957 = vld [vmem:[%s2 + $0xf0] sm:$0xff]
          %v2958 = vld [vmem:[%s2 + $0xf8] sm:$0xff]
          %v2959 = vld [vmem:[%s2 + $0x100] sm:$0xff]
          %v2960 = vld [vmem:[%s2 + $0x108] sm:$0xff]
          %v2961 = vld [vmem:[%s2 + $0x110] sm:$0xff]
          %v2962 = vld [vmem:[%s2 + $0x118] sm:$0xff]
          %v2963 = vld [vmem:[%s2 + $0x120] sm:$0xff]
          %v2964 = vld [vmem:[%s2 + $0x128] sm:$0xff]
          %v2965 = vld [vmem:[%s2 + $0x130] sm:$0xff]
          %v2966 = vld [vmem:[%s2 + $0x138] sm:$0xff]
          %v2967 = vld [vmem:[%s2 + $0x140] sm:$0xff]
          %v2968 = vld [vmem:[%s2 + $0x148] sm:$0xff]
          %v2969 = vld [vmem:[%s2 + $0x150] sm:$0xff]
          %v2970 = vld [vmem:[%s2 + $0x158] sm:$0xff]
          %v2971 = vmul.f32 %v2443, %v2839
          %v2972 = vmul.f32 %v2444, %v2840
          %v2973 = vmul.f32 %v2445, %v2841
          %v2974 = vmul.f32 %v2446, %v2842
          %v2975 = vmul.f32 %v2447, %v2843
          %v2976 = vmul.f32 %v2448, %v2844
          %v2977 = vmul.f32 %v2449, %v2845
          %v2978 = vmul.f32 %v2450, %v2846
          %v2979 = vmul.f32 %v2451, %v2847
          %v2980 = vmul.f32 %v2452, %v2848
          %v2981 = vmul.f32 %v2453, %v2849
          %v2982 = vmul.f32 %v2454, %v2850
          %v2983 = vmul.f32 %v2455, %v2851
          %v2984 = vmul.f32 %v2456, %v2852
          %v2985 = vmul.f32 %v2457, %v2853
          %v2986 = vmul.f32 %v2458, %v2854
          %v2987 = vmul.f32 %v2459, %v2855
          %v2988 = vmul.f32 %v2460, %v2856
          %v2989 = vmul.f32 %v2461, %v2857
          %v2990 = vmul.f32 %v2462, %v2858
          %v2991 = vmul.f32 %v2463, %v2859
          %v2992 = vmul.f32 %v2464, %v2860
          %v2993 = vmul.f32 %v2465, %v2861
          %v2994 = vmul.f32 %v2466, %v2862
          %v2995 = vmul.f32 %v2467, %v2863
          %v2996 = vmul.f32 %v2468, %v2864
          %v2997 = vmul.f32 %v2469, %v2865
          %v2998 = vmul.f32 %v2470, %v2866
          %v2999 = vmul.f32 %v2471, %v2867
          %v3000 = vmul.f32 %v2472, %v2868
          %v3001 = vmul.f32 %v2473, %v2869
          %v3002 = vmul.f32 %v2474, %v2870
          %v3003 = vmul.f32 %v2475, %v2871
          %v3004 = vmul.f32 %v2476, %v2872
          %v3005 = vmul.f32 %v2477, %v2873
          %v3006 = vmul.f32 %v2478, %v2874
          %v3007 = vmul.f32 %v2479, %v2875
          %v3008 = vmul.f32 %v2480, %v2876
          %v3009 = vmul.f32 %v2481, %v2877
          %v3010 = vmul.f32 %v2482, %v2878
          %v3011 = vmul.f32 %v2483, %v2879
          %v3012 = vmul.f32 %v2484, %v2880
          %v3013 = vmul.f32 %v2485, %v2881
          %v3014 = vmul.f32 %v2486, %v2882
          %v3015 = vsub.f32 %v2927, %v2971
          %v3016 = vsub.f32 %v2928, %v2972
          %v3017 = vsub.f32 %v2929, %v2973
          %v3018 = vsub.f32 %v2930, %v2974
          %v3019 = vsub.f32 %v2931, %v2975
          %v3020 = vsub.f32 %v2932, %v2976
          %v3021 = vsub.f32 %v2933, %v2977
          %v3022 = vsub.f32 %v2934, %v2978
          %v3023 = vsub.f32 %v2935, %v2979
          %v3024 = vsub.f32 %v2936, %v2980
          %v3025 = vsub.f32 %v2937, %v2981
          %v3026 = vsub.f32 %v2938, %v2982
          %v3027 = vsub.f32 %v2939, %v2983
          %v3028 = vsub.f32 %v2940, %v2984
          %v3029 = vsub.f32 %v2941, %v2985
          %v3030 = vsub.f32 %v2942, %v2986
          %v3031 = vsub.f32 %v2943, %v2987
          %v3032 = vsub.f32 %v2944, %v2988
          %v3033 = vsub.f32 %v2945, %v2989
          %v3034 = vsub.f32 %v2946, %v2990
          %v3035 = vsub.f32 %v2947, %v2991
          %v3036 = vsub.f32 %v2948, %v2992
          %v3037 = vsub.f32 %v2949, %v2993
          %v3038 = vsub.f32 %v2950, %v2994
          %v3039 = vsub.f32 %v2951, %v2995
          %v3040 = vsub.f32 %v2952, %v2996
          %v3041 = vsub.f32 %v2953, %v2997
          %v3042 = vsub.f32 %v2954, %v2998
          %v3043 = vsub.f32 %v2955, %v2999
          %v3044 = vsub.f32 %v2956, %v3000
          %v3045 = vsub.f32 %v2957, %v3001
          %v3046 = vsub.f32 %v2958, %v3002
          %v3047 = vsub.f32 %v2959, %v3003
          %v3048 = vsub.f32 %v2960, %v3004
          %v3049 = vsub.f32 %v2961, %v3005
          %v3050 = vsub.f32 %v2962, %v3006
          %v3051 = vsub.f32 %v2963, %v3007
          %v3052 = vsub.f32 %v2964, %v3008
          %v3053 = vsub.f32 %v2965, %v3009
          %v3054 = vsub.f32 %v2966, %v3010
          %v3055 = vsub.f32 %v2967, %v3011
          %v3056 = vsub.f32 %v2968, %v3012
          %v3057 = vsub.f32 %v2969, %v3013
          %v3058 = vsub.f32 %v2970, %v3014
          %3059 = vst.msk [vmem:[%s4] sm:$0xff] %vm1821, %v3015
          %3060 = vst.msk [vmem:[%s4 + $0x8] sm:$0xff] %vm1821, %v3016
          %3061 = vst.msk [vmem:[%s4 + $0x10] sm:$0xff] %vm1821, %v3017
          %3062 = vst.msk [vmem:[%s4 + $0x18] sm:$0xff] %vm1821, %v3018
          %3063 = vst.msk [vmem:[%s4 + $0x20] sm:$0xff] %vm1821, %v3019
          %3064 = vst.msk [vmem:[%s4 + $0x28] sm:$0xff] %vm1821, %v3020
          %3065 = vst.msk [vmem:[%s4 + $0x30] sm:$0xff] %vm1821, %v3021
          %3066 = vst.msk [vmem:[%s4 + $0x38] sm:$0xff] %vm1821, %v3022
          %3067 = vst.msk [vmem:[%s4 + $0x40] sm:$0xff] %vm1821, %v3023
          %3068 = vst.msk [vmem:[%s4 + $0x48] sm:$0xff] %vm1821, %v3024
          %3069 = vst.msk [vmem:[%s4 + $0x50] sm:$0xff] %vm1821, %v3025
          %3070 = vst.msk [vmem:[%s4 + $0x58] sm:$0xff] %vm1821, %v3026
          %3071 = vst.msk [vmem:[%s4 + $0x60] sm:$0xff] %vm1821, %v3027
          %3072 = vst.msk [vmem:[%s4 + $0x68] sm:$0xff] %vm1821, %v3028
          %3073 = vst.msk [vmem:[%s4 + $0x70] sm:$0xff] %vm1821, %v3029
          %3074 = vst.msk [vmem:[%s4 + $0x78] sm:$0xff] %vm1821, %v3030
          %3075 = vst.msk [vmem:[%s4 + $0x80] sm:$0xff] %vm1821, %v3031
          %3076 = vst.msk [vmem:[%s4 + $0x88] sm:$0xff] %vm1821, %v3032
          %3077 = vst.msk [vmem:[%s4 + $0x90] sm:$0xff] %vm1821, %v3033
          %3078 = vst.msk [vmem:[%s4 + $0x98] sm:$0xff] %vm1821, %v3034
          %3079 = vst.msk [vmem:[%s4 + $0xa0] sm:$0xff] %vm1821, %v3035
          %3080 = vst.msk [vmem:[%s4 + $0xa8] sm:$0xff] %vm1821, %v3036
          %3081 = vst.msk [vmem:[%s4 + $0xb0] sm:$0xff] %vm1821, %v3037
          %3082 = vst.msk [vmem:[%s4 + $0xb8] sm:$0xff] %vm1821, %v3038
          %3083 = vst.msk [vmem:[%s4 + $0xc0] sm:$0xff] %vm1821, %v3039
          %3084 = vst.msk [vmem:[%s4 + $0xc8] sm:$0xff] %vm1821, %v3040
          %3085 = vst.msk [vmem:[%s4 + $0xd0] sm:$0xff] %vm1821, %v3041
          %3086 = vst.msk [vmem:[%s4 + $0xd8] sm:$0xff] %vm1821, %v3042
          %3087 = vst.msk [vmem:[%s4 + $0xe0] sm:$0xff] %vm1821, %v3043
          %3088 = vst.msk [vmem:[%s4 + $0xe8] sm:$0xff] %vm1821, %v3044
          %3089 = vst.msk [vmem:[%s4 + $0xf0] sm:$0xff] %vm1821, %v3045
          %3090 = vst.msk [vmem:[%s4 + $0xf8] sm:$0xff] %vm1821, %v3046
          %3091 = vst.msk [vmem:[%s4 + $0x100] sm:$0xff] %vm1821, %v3047
          %3092 = vst.msk [vmem:[%s4 + $0x108] sm:$0xff] %vm1821, %v3048
          %3093 = vst.msk [vmem:[%s4 + $0x110] sm:$0xff] %vm1821, %v3049
          %3094 = vst.msk [vmem:[%s4 + $0x118] sm:$0xff] %vm1821, %v3050
          %3095 = vst.msk [vmem:[%s4 + $0x120] sm:$0xff] %vm1821, %v3051
          %3096 = vst.msk [vmem:[%s4 + $0x128] sm:$0xff] %vm1821, %v3052
          %3097 = vst.msk [vmem:[%s4 + $0x130] sm:$0xff] %vm1821, %v3053
          %3098 = vst.msk [vmem:[%s4 + $0x138] sm:$0xff] %vm1821, %v3054
          %3099 = vst.msk [vmem:[%s4 + $0x140] sm:$0xff] %vm1821, %v3055
          %3100 = vst.msk [vmem:[%s4 + $0x148] sm:$0xff] %vm1821, %v3056
          %3101 = vst.msk [vmem:[%s4 + $0x150] sm:$0xff] %vm1821, %v3057
          %3102 = vst.msk [vmem:[%s4 + $0x158] sm:$0xff] %vm1821, %v3058
        $region106: #{tpu_custom_call.1} parent=93 // pred_fallthru
          _
        // Predicated region
        $region107: #{tpu_custom_call.1} parent=93 // pred_check
          %p3103 = pneg %p111
        $region108: #{tpu_custom_call.1} parent=93 // pred_check_branch
          %3105 = sbr.rel (%p3103) target = $region110
        $region109: #{tpu_custom_call.1} parent=93 // pred_region
          _
        $region110: #{tpu_custom_call.1} parent=93 // pred_fallthru
          _
        // Predicated region
        $region111: #{tpu_custom_call.1} parent=93 // pred_check
          %p3106 = pneg %p132
        $region112: #{tpu_custom_call.1} parent=93 // pred_check_branch
          %3108 = sbr.rel (%p3106) target = $region114
        $region113: #{tpu_custom_call.1} parent=93 // pred_region
          _
        $region114: #{tpu_custom_call.1} parent=93 // pred_fallthru
          _
        // Predicated region
        $region115: #{tpu_custom_call.1} parent=93 // pred_check
          %p3109 = pneg %p111
        $region116: #{tpu_custom_call.1} parent=93 // pred_check_branch
          %3111 = sbr.rel (%p3109) target = $region118
        $region117: #{tpu_custom_call.1} parent=93 // pred_region
          _
        $region118: #{tpu_custom_call.1} parent=93 // pred_fallthru
          _
        // Predicated region
        $region119: #{tpu_custom_call.1} parent=93 // pred_check
          %p3112 = pneg %p132
        $region120: #{tpu_custom_call.1} parent=93 // pred_check_branch
          %3114 = sbr.rel (%p3112) target = $region122
        $region121: #{tpu_custom_call.1} parent=93 // pred_region
          _
        $region122: #{tpu_custom_call.1} parent=93 // pred_fallthru
          _
      $region94: #{tpu_custom_call.1} parent=5 // pred_fallthru
        _
      %p3115 = scmp.le.s32.totalorder 2, %s11
      // Predicated region
      $region123: #{tpu_custom_call.1} parent=5 // pred_check
        %p3116 = pneg %p3115
      $region124: #{tpu_custom_call.1} parent=5 // pred_check_branch
        %3118 = sbr.rel (%p3116) target = $region126
      $region125: #{tpu_custom_call.1} parent=5 // pred_region
        %s3119 = ssub.s32 %s11, 2
      $region126: #{tpu_custom_call.1} parent=5 // pred_fallthru
        _
    $region6: #{tpu_custom_call.1} parent=1 // loop_footer
      %s15 = sadd.s32 1, %s11
    $region7: #{tpu_custom_call.1} parent=1 // loop_footer_branch
      %10 = sbr.rel target = $region3
    $region8: #{tpu_custom_call.1} parent=1 // loop_exit
      _

</llo_original>
